<compile_context>
chip_gen: v6e
topology: v6e:2x2x1
jax: 0.10.0
libtpu: 0.0.40
codegen_flags: <defaults>
</compile_context>

<pallas_src>
import jax
import jax.numpy as jnp
from jax.experimental import pallas as pl
from jax.experimental.pallas import tpu as pltpu


# ----------------------------------------------------------------------------
# Fused kernel: all bidirectional LSTM layers (grid axis = layer) + decoder.
# ----------------------------------------------------------------------------
def _birnn_kernel(x_ref, wih_ref, whh_ref, b_ref, wdec_ref, bdec_ref,
                  logits_ref, act_scr, gx_scr):
    layer = pl.program_id(0)
    num_layers = pl.num_programs(0)
    T, B, Dm = act_scr.shape
    H = whh_ref.shape[2]          # whh block is (1, 2, H, 4H)
    H4 = 4 * H

    # Layer 0: pull the (already zero-padded) embedding block into the
    # inter-layer activation scratch.  Later layers read their input from the
    # same scratch, written by the previous grid iteration (scratch persists
    # across grid steps) -> no HBM round trips between layers.
    @pl.when(layer == 0)
    def _():
        act_scr[...] = x_ref[...]

    # Hoisted input-path GEMM: one (T*B, Dm) @ (Dm, 8H) matmul per layer with
    # the (b_ih + b_hh) bias folded in.  Only the h-dependent path is serial.
    x_flat = act_scr[...].reshape(T * B, Dm).astype(jnp.bfloat16)
    gx_scr[...] = (
        jnp.dot(x_flat, wih_ref[0], preferred_element_type=jnp.float32)
        + b_ref[0])

    # Per-direction recurrent weights, loaded once per layer and kept
    # stationary across all timesteps.
    whh_f = whh_ref[0, 0]         # (H, 4H) bf16, forward direction
    whh_b = whh_ref[0, 1]         # (H, 4H) bf16, backward direction

    def cell(gates, c_prev):
        # PyTorch gate order i, f, g, o; each slice is one full 128-lane group.
        i = jax.nn.sigmoid(gates[:, 0 * H:1 * H])
        f = jax.nn.sigmoid(gates[:, 1 * H:2 * H])
        g = jnp.tanh(gates[:, 2 * H:3 * H])
        o = jax.nn.sigmoid(gates[:, 3 * H:4 * H])
        c_new = f * c_prev + i * g
        return o * jnp.tanh(c_new), c_new

    # Recurrent state carried as SSA values (vreg-resident), NOT VMEM scratch.
    h_f = jnp.zeros((B, H), jnp.float32)
    h_b = jnp.zeros((B, H), jnp.float32)
    c_f = jnp.zeros((B, H), jnp.float32)
    c_b = jnp.zeros((B, H), jnp.float32)

    outs_f = []
    outs_b = []

    # T is small & static -> full unroll keeps LLO scheduling visibility.
    # TODO(synk): for large T switch to lax.fori_loop(..., unroll=k) with the
    # boundary hiddens carried explicitly (vreg pressure / compile time).
    for t in range(T):
        # Two independent per-direction recurrent dots (no zero block, fwd and
        # bwd chains can overlap).
        r_f = jnp.dot(h_f.astype(jnp.bfloat16), whh_f,
                      preferred_element_type=jnp.float32)            # (B, 4H)
        r_b = jnp.dot(h_b.astype(jnp.bfloat16), whh_b,
                      preferred_element_type=jnp.float32)            # (B, 4H)
        # Backward direction walks the sequence in reverse via index
        # arithmetic on the hoisted gates -- no jnp.flip / HBM reversal.
        gates_f = gx_scr[t * B:(t + 1) * B, :H4] + r_f
        gates_b = gx_scr[(T - 1 - t) * B:(T - t) * B, H4:] + r_b
        h_f, c_f = cell(gates_f, c_f)
        h_b, c_b = cell(gates_b, c_b)
        outs_f.append(h_f)
        outs_b.append(h_b)

    # Intermediate layers: write the (T, B, 2H) hidden sequence back into the
    # activation scratch as the next layer's input.  Columns [2H:Dm] (if any)
    # keep their layer-0 values; the matching W_ih rows of later layers are
    # zero, so they contribute nothing.
    @pl.when(layer < num_layers - 1)
    def _():
        for t in range(T):
            act_scr[t, :, :H] = outs_f[t]
            act_scr[T - 1 - t, :, H:2 * H] = outs_b[t]

    # Last layer: fused decoder.
    #   encoding = cat(outputs[0], outputs[-1], -1)
    #            = [h_f @ t0 | h_b final | h_f final | h_b @ t0]
    # computed as four (B, H) @ (H, 128) partial dots (no in-kernel concat),
    # stored as one full unmasked 128-lane vst and sliced to 2 outside.
    @pl.when(layer == num_layers - 1)
    def _():
        acc = jnp.dot(outs_f[0].astype(jnp.bfloat16), wdec_ref[0],
                      preferred_element_type=jnp.float32)
        acc = acc + jnp.dot(outs_b[T - 1].astype(jnp.bfloat16), wdec_ref[1],
                            preferred_element_type=jnp.float32)
        acc = acc + jnp.dot(outs_f[T - 1].astype(jnp.bfloat16), wdec_ref[2],
                            preferred_element_type=jnp.float32)
        acc = acc + jnp.dot(outs_b[0].astype(jnp.bfloat16), wdec_ref[3],
                            preferred_element_type=jnp.float32)
        logits_ref[...] = acc + bdec_ref[...]


# ----------------------------------------------------------------------------
# pallas_call wrapper: 1 launch for the whole encoder+decoder.
# ----------------------------------------------------------------------------
def birnn_pallas(x, wih_all, whh_all, b_all, wdec, bdec):
    """x: (T, B, Dm) f32 (zero-padded to Dm) -> (B, 128) f32 padded logits."""
    T, B, Dm = x.shape
    L = wih_all.shape[0]
    H = whh_all.shape[2]
    Op = wdec.shape[2]
    return pl.pallas_call(
        _birnn_kernel,
        out_shape=jax.ShapeDtypeStruct((B, Op), jnp.float32),
        grid_spec=pltpu.PrefetchScalarGridSpec(
            num_scalar_prefetch=0,
            grid=(L,),
            in_specs=[
                pl.BlockSpec((T, B, Dm), lambda l: (0, 0, 0)),       # embeddings
                pl.BlockSpec((1, Dm, 8 * H), lambda l: (l, 0, 0)),   # W_ih (per layer)
                pl.BlockSpec((1, 2, H, 4 * H), lambda l: (l, 0, 0, 0)),  # W_hh
                pl.BlockSpec((1, 1, 8 * H), lambda l: (l, 0, 0)),    # bias
                pl.BlockSpec((4, H, Op), lambda l: (0, 0, 0)),       # W_dec chunks
                pl.BlockSpec((1, Op), lambda l: (0, 0)),             # b_dec
            ],
            out_specs=pl.BlockSpec((B, Op), lambda l: (0, 0)),
            scratch_shapes=[
                pltpu.VMEM((T, B, Dm), jnp.float32),       # inter-layer activations
                pltpu.VMEM((T * B, 8 * H), jnp.float32),   # hoisted input gates
            ],
        ),
        compiler_params=pltpu.CompilerParams(
            dimension_semantics=("arbitrary",),            # layers are serial
            vmem_limit_bytes=64 * 1024 * 1024,
        ),
    )(x, wih_all, whh_all, b_all, wdec, bdec)


# ----------------------------------------------------------------------------
# Parameter construction (mirrors nn.Embedding / nn.LSTM / nn.Linear shapes,
# repacked for the fused-layer kernel; matmul weights stored in bf16).
# ----------------------------------------------------------------------------
def init_params(key, vocab_size, embed_size, num_hiddens, num_layers):
    H = num_hiddens
    Dm = max(embed_size, 2 * H)            # common (padded) layer-input width
    k = 1.0 / jnp.sqrt(jnp.float32(H))
    params = {}

    key, sub = jax.random.split(key)
    params["embedding"] = jax.random.normal(
        sub, (vocab_size, embed_size), dtype=jnp.float32)

    wih_layers, whh_layers, b_layers = [], [], []
    for layer in range(num_layers):
        in_dim = embed_size if layer == 0 else 2 * H
        wih_dirs, whh_dirs, bias_dirs = [], [], []
        for _ in range(2):                  # fwd, bwd
            key, k1, k2, k3, k4 = jax.random.split(key, 5)
            w_ih = jax.random.uniform(k1, (4 * H, in_dim), jnp.float32, -k, k)
            w_hh = jax.random.uniform(k2, (4 * H, H), jnp.float32, -k, k)
            b_ih = jax.random.uniform(k3, (4 * H,), jnp.float32, -k, k)
            b_hh = jax.random.uniform(k4, (4 * H,), jnp.float32, -k, k)
            wih_t = jnp.zeros((Dm, 4 * H), jnp.float32).at[:in_dim].set(w_ih.T)
            wih_dirs.append(wih_t)           # (Dm, 4H), zero-padded rows
            whh_dirs.append(w_hh.T)          # (H, 4H)
            bias_dirs.append(b_ih + b_hh)    # (4H,)
        wih_layers.append(jnp.concatenate(wih_dirs, axis=1))     # (Dm, 8H)
        whh_layers.append(jnp.stack(whh_dirs, axis=0))           # (2, H, 4H)
        b_layers.append(jnp.concatenate(bias_dirs).reshape(1, 8 * H))
    params["wih_all"] = jnp.stack(wih_layers, 0).astype(jnp.bfloat16)  # (L, Dm, 8H)
    params["whh_all"] = jnp.stack(whh_layers, 0).astype(jnp.bfloat16)  # (L, 2, H, 4H)
    params["b_all"] = jnp.stack(b_layers, 0)                           # (L, 1, 8H) f32

    # Decoder nn.Linear(4H, 2).  Row order of W^T matches the kernel's
    # encoding packing [h_f@t0 | h_b final | h_f final | h_b@t0]; columns are
    # zero-padded to 128 lanes (real PyTorch weights must be repacked the same
    # way when porting).
    key, k1, k2 = jax.random.split(key, 3)
    kd = 1.0 / jnp.sqrt(jnp.float32(4 * H))
    O_PAD = 128
    dec_w = jax.random.uniform(k1, (4 * H, 2), jnp.float32, -kd, kd)
    dec_w_pad = jnp.zeros((4 * H, O_PAD), jnp.float32).at[:, :2].set(dec_w)
    params["dec_w"] = dec_w_pad.reshape(4, H, O_PAD).astype(jnp.bfloat16)
    dec_b = jax.random.uniform(k2, (2,), jnp.float32, -kd, kd)
    params["dec_b"] = jnp.zeros((1, O_PAD), jnp.float32).at[0, :2].set(dec_b)
    return params


# ----------------------------------------------------------------------------
# Full BiRNN forward pass.
# ----------------------------------------------------------------------------
def birnn_forward(inputs, params):
    """inputs: (batch, seq) int32 -> (batch, 2) float32."""
    # Embedding gather (plain-JAX glue), time-major (T, B, E).
    # TODO(synk): the token-id table gather has no clean Pallas tiling here;
    # it stays as an XLA gather.
    x = params["embedding"][jnp.transpose(inputs)]
    T, B, E = x.shape
    Dm = params["wih_all"].shape[1]
    if E < Dm:
        x = jnp.pad(x, ((0, 0), (0, 0), (0, Dm - E)))
    logits = birnn_pallas(x, params["wih_all"], params["whh_all"],
                          params["b_all"], params["dec_w"], params["dec_b"])
    return logits[:, :2]


if __name__ == "__main__":
    vocab_size = 50
    embed_size = 128
    num_hiddens = 128   # H = 128: every gate slice is one full 128-lane group
    num_layers = 2
    batch = 8           # fills the 8 vreg sublanes / MXU rows
    seq_len = 8

    key = jax.random.PRNGKey(0)
    key, pkey, ikey = jax.random.split(key, 3)
    params = init_params(pkey, vocab_size, embed_size, num_hiddens, num_layers)
    inputs = jax.random.randint(ikey, (batch, seq_len), 0, vocab_size,
                                dtype=jnp.int32)

    out = jax.jit(birnn_forward)(inputs, params)
    out = jax.block_until_ready(out)
    assert out.shape == (batch, 2), out.shape
    assert out.dtype == jnp.float32
    print("KERNEL_OK")
</pallas_src>

<mosaic_0001>
module attributes {stable_mosaic.version = 11 : i64} {
  func.func @_birnn_kernel(%arg0: i32, %arg1: memref<8x8x256xf32, #tpu.memory_space<vmem>>, %arg2: memref<1x256x1024xbf16, #tpu.memory_space<vmem>>, %arg3: memref<1x2x128x512xbf16, #tpu.memory_space<vmem>>, %arg4: memref<1x1x1024xf32, #tpu.memory_space<vmem>>, %arg5: memref<4x128x128xbf16, #tpu.memory_space<vmem>>, %arg6: memref<1x128xf32, #tpu.memory_space<vmem>>, %arg7: memref<8x128xf32, #tpu.memory_space<vmem>>, %arg8: memref<8x8x256xf32, #tpu.memory_space<vmem>>, %arg9: memref<64x1024xf32, #tpu.memory_space<vmem>>) attributes {dimension_semantics = [#tpu.dimension_semantics<arbitrary>], iteration_bounds = array<i64: 2>, scalar_prefetch = 0 : i64, scratch_operands = 2 : i64, tpu.core_type = #tpu.core_type<tc>, window_params = [{pipeline_mode = #tpu.pipeline_mode<synchronous>, transform_indices = @transform_0, window_bounds = array<i64: 8, 8, 256>}, {transform_indices = @transform_1, window_bounds = array<i64: 1, 256, 1024>}, {transform_indices = @transform_2, window_bounds = array<i64: 1, 2, 128, 512>}, {transform_indices = @transform_3, window_bounds = array<i64: 1, 1, 1024>}, {pipeline_mode = #tpu.pipeline_mode<synchronous>, transform_indices = @transform_4, window_bounds = array<i64: 4, 128, 128>}, {pipeline_mode = #tpu.pipeline_mode<synchronous>, transform_indices = @transform_5, window_bounds = array<i64: 1, 128>}, {pipeline_mode = #tpu.pipeline_mode<synchronous>, transform_indices = @transform_6, window_bounds = array<i64: 8, 128>}]} {
    %c0_i32 = arith.constant 0 : i32
    %0 = arith.cmpi eq, %arg0, %c0_i32 : i32
    %1 = arith.extui %0 : i1 to i32
    %c0_i32_0 = arith.constant 0 : i32
    %2 = arith.cmpi ne, %1, %c0_i32_0 : i32
    scf.if %2 {
      %c0_113 = arith.constant 0 : index
      %c0_114 = arith.constant 0 : index
      %c0_115 = arith.constant 0 : index
      %492 = vector.load %arg1[%c0_113, %c0_114, %c0_115] : memref<8x8x256xf32, #tpu.memory_space<vmem>>, vector<8x8x256xf32>
      %c0_116 = arith.constant 0 : index
      %c0_117 = arith.constant 0 : index
      %c0_118 = arith.constant 0 : index
      %493 = vector.load %arg8[%c0_116, %c0_117, %c0_118] : memref<8x8x256xf32, #tpu.memory_space<vmem>>, vector<8x8x256xf32>
      tpu.vector_store %arg8[%c0_116, %c0_117, %c0_118], %492 {strides = array<i32>} : memref<8x8x256xf32, #tpu.memory_space<vmem>>, vector<8x8x256xf32>,
    } else {
    }
    %c0 = arith.constant 0 : index
    %c0_1 = arith.constant 0 : index
    %c0_2 = arith.constant 0 : index
    %3 = vector.load %arg8[%c0, %c0_1, %c0_2] : memref<8x8x256xf32, #tpu.memory_space<vmem>>, vector<8x8x256xf32>
    %4 = vector.shape_cast %3 : vector<8x8x256xf32> to vector<64x256xf32>
    %5 = arith.truncf %4 : vector<64x256xf32> to vector<64x256xbf16>
    %c0_3 = arith.constant 0 : index
    %c0_4 = arith.constant 0 : index
    %c0_5 = arith.constant 0 : index
    %6 = vector.load %arg2[%c0_3, %c0_4, %c0_5] : memref<1x256x1024xbf16, #tpu.memory_space<vmem>>, vector<1x256x1024xbf16>
    %7 = vector.shape_cast %6 : vector<1x256x1024xbf16> to vector<256x1024xbf16>
    %cst = arith.constant dense<0.000000e+00> : vector<64x1024xf32>
    %8 = tpu.matmul %5, %7, %cst {dimension_numbers = #tpu.dot_dimension_numbers<[1], [0], [0], [1], [0, 0, 1, 1], [], []>} : vector<64x256xbf16>, vector<256x1024xbf16>, vector<64x1024xf32> -> vector<64x1024xf32>
    %c0_6 = arith.constant 0 : index
    %c0_7 = arith.constant 0 : index
    %c0_8 = arith.constant 0 : index
    %9 = vector.load %arg4[%c0_6, %c0_7, %c0_8] : memref<1x1x1024xf32, #tpu.memory_space<vmem>>, vector<1x1x1024xf32>
    %10 = vector.shape_cast %9 : vector<1x1x1024xf32> to vector<1x1024xf32>
    %11 = vector.broadcast %10 : vector<1x1024xf32> to vector<64x1024xf32>
    %12 = arith.addf %8, %11 : vector<64x1024xf32>
    %c0_9 = arith.constant 0 : index
    %c0_10 = arith.constant 0 : index
    %13 = vector.load %arg9[%c0_9, %c0_10] : memref<64x1024xf32, #tpu.memory_space<vmem>>, vector<64x1024xf32>
    tpu.vector_store %arg9[%c0_9, %c0_10], %12 {strides = array<i32>} : memref<64x1024xf32, #tpu.memory_space<vmem>>, vector<64x1024xf32>,
    %c0_11 = arith.constant 0 : index
    %c0_12 = arith.constant 0 : index
    %c0_13 = arith.constant 0 : index
    %c0_14 = arith.constant 0 : index
    %14 = vector.load %arg3[%c0_11, %c0_12, %c0_13, %c0_14] : memref<1x2x128x512xbf16, #tpu.memory_space<vmem>>, vector<1x1x128x512xbf16>
    %15 = vector.shape_cast %14 : vector<1x1x128x512xbf16> to vector<128x512xbf16>
    %c0_15 = arith.constant 0 : index
    %c1 = arith.constant 1 : index
    %c0_16 = arith.constant 0 : index
    %c0_17 = arith.constant 0 : index
    %16 = vector.load %arg3[%c0_15, %c1, %c0_16, %c0_17] : memref<1x2x128x512xbf16, #tpu.memory_space<vmem>>, vector<1x1x128x512xbf16>
    %17 = vector.shape_cast %16 : vector<1x1x128x512xbf16> to vector<128x512xbf16>
    %cst_18 = arith.constant 0.000000e+00 : f32
    %18 = vector.broadcast %cst_18 : f32 to vector<8x128xf32>
    %cst_19 = arith.constant 0.000000e+00 : f32
    %19 = vector.broadcast %cst_19 : f32 to vector<8x128xf32>
    %cst_20 = arith.constant 0.000000e+00 : f32
    %20 = vector.broadcast %cst_20 : f32 to vector<8x128xf32>
    %cst_21 = arith.constant 0.000000e+00 : f32
    %21 = vector.broadcast %cst_21 : f32 to vector<8x128xf32>
    %22 = arith.truncf %18 : vector<8x128xf32> to vector<8x128xbf16>
    %cst_22 = arith.constant dense<0.000000e+00> : vector<8x512xf32>
    %23 = tpu.matmul %22, %15, %cst_22 {dimension_numbers = #tpu.dot_dimension_numbers<[1], [0], [0], [1], [0, 0, 1, 1], [], []>} : vector<8x128xbf16>, vector<128x512xbf16>, vector<8x512xf32> -> vector<8x512xf32>
    %24 = arith.truncf %19 : vector<8x128xf32> to vector<8x128xbf16>
    %cst_23 = arith.constant dense<0.000000e+00> : vector<8x512xf32>
    %25 = tpu.matmul %24, %17, %cst_23 {dimension_numbers = #tpu.dot_dimension_numbers<[1], [0], [0], [1], [0, 0, 1, 1], [], []>} : vector<8x128xbf16>, vector<128x512xbf16>, vector<8x512xf32> -> vector<8x512xf32>
    %c0_24 = arith.constant 0 : index
    %c0_25 = arith.constant 0 : index
    %26 = vector.load %arg9[%c0_24, %c0_25] : memref<64x1024xf32, #tpu.memory_space<vmem>>, vector<8x512xf32>
    %27 = arith.addf %26, %23 : vector<8x512xf32>
    %c56 = arith.constant 56 : index
    %c512 = arith.constant 512 : index
    %28 = vector.load %arg9[%c56, %c512] : memref<64x1024xf32, #tpu.memory_space<vmem>>, vector<8x512xf32>
    %29 = arith.addf %28, %25 : vector<8x512xf32>
    %30 = vector.extract_strided_slice %27 {offsets = [0, 0], sizes = [8, 128], strides = [1, 1]} : vector<8x512xf32> to vector<8x128xf32>
    %31 = arith.negf %30 : vector<8x128xf32>
    %32 = math.exp %31 : vector<8x128xf32>
    %cst_26 = arith.constant 1.000000e+00 : f32
    %33 = vector.broadcast %cst_26 : f32 to vector<8x128xf32>
    %34 = arith.addf %33, %32 : vector<8x128xf32>
    %35 = arith.divf %33, %34 : vector<8x128xf32>
    %36 = vector.extract_strided_slice %27 {offsets = [0, 128], sizes = [8, 128], strides = [1, 1]} : vector<8x512xf32> to vector<8x128xf32>
    %37 = arith.negf %36 : vector<8x128xf32>
    %38 = math.exp %37 : vector<8x128xf32>
    %cst_27 = arith.constant 1.000000e+00 : f32
    %39 = vector.broadcast %cst_27 : f32 to vector<8x128xf32>
    %40 = arith.addf %39, %38 : vector<8x128xf32>
    %41 = arith.divf %39, %40 : vector<8x128xf32>
    %42 = vector.extract_strided_slice %27 {offsets = [0, 256], sizes = [8, 128], strides = [1, 1]} : vector<8x512xf32> to vector<8x128xf32>
    %43 = math.tanh %42 : vector<8x128xf32>
    %44 = vector.extract_strided_slice %27 {offsets = [0, 384], sizes = [8, 128], strides = [1, 1]} : vector<8x512xf32> to vector<8x128xf32>
    %45 = arith.negf %44 : vector<8x128xf32>
    %46 = math.exp %45 : vector<8x128xf32>
    %cst_28 = arith.constant 1.000000e+00 : f32
    %47 = vector.broadcast %cst_28 : f32 to vector<8x128xf32>
    %48 = arith.addf %47, %46 : vector<8x128xf32>
    %49 = arith.divf %47, %48 : vector<8x128xf32>
    %50 = arith.mulf %41, %20 : vector<8x128xf32>
    %51 = arith.mulf %35, %43 : vector<8x128xf32>
    %52 = arith.addf %50, %51 : vector<8x128xf32>
    %53 = math.tanh %52 : vector<8x128xf32>
    %54 = arith.mulf %49, %53 : vector<8x128xf32>
    %55 = vector.extract_strided_slice %29 {offsets = [0, 0], sizes = [8, 128], strides = [1, 1]} : vector<8x512xf32> to vector<8x128xf32>
    %56 = arith.negf %55 : vector<8x128xf32>
    %57 = math.exp %56 : vector<8x128xf32>
    %cst_29 = arith.constant 1.000000e+00 : f32
    %58 = vector.broadcast %cst_29 : f32 to vector<8x128xf32>
    %59 = arith.addf %58, %57 : vector<8x128xf32>
    %60 = arith.divf %58, %59 : vector<8x128xf32>
    %61 = vector.extract_strided_slice %29 {offsets = [0, 128], sizes = [8, 128], strides = [1, 1]} : vector<8x512xf32> to vector<8x128xf32>
    %62 = arith.negf %61 : vector<8x128xf32>
    %63 = math.exp %62 : vector<8x128xf32>
    %cst_30 = arith.constant 1.000000e+00 : f32
    %64 = vector.broadcast %cst_30 : f32 to vector<8x128xf32>
    %65 = arith.addf %64, %63 : vector<8x128xf32>
    %66 = arith.divf %64, %65 : vector<8x128xf32>
    %67 = vector.extract_strided_slice %29 {offsets = [0, 256], sizes = [8, 128], strides = [1, 1]} : vector<8x512xf32> to vector<8x128xf32>
    %68 = math.tanh %67 : vector<8x128xf32>
    %69 = vector.extract_strided_slice %29 {offsets = [0, 384], sizes = [8, 128], strides = [1, 1]} : vector<8x512xf32> to vector<8x128xf32>
    %70 = arith.negf %69 : vector<8x128xf32>
    %71 = math.exp %70 : vector<8x128xf32>
    %cst_31 = arith.constant 1.000000e+00 : f32
    %72 = vector.broadcast %cst_31 : f32 to vector<8x128xf32>
    %73 = arith.addf %72, %71 : vector<8x128xf32>
    %74 = arith.divf %72, %73 : vector<8x128xf32>
    %75 = arith.mulf %66, %21 : vector<8x128xf32>
    %76 = arith.mulf %60, %68 : vector<8x128xf32>
    %77 = arith.addf %75, %76 : vector<8x128xf32>
    %78 = math.tanh %77 : vector<8x128xf32>
    %79 = arith.mulf %74, %78 : vector<8x128xf32>
    %80 = arith.truncf %54 : vector<8x128xf32> to vector<8x128xbf16>
    %cst_32 = arith.constant dense<0.000000e+00> : vector<8x512xf32>
    %81 = tpu.matmul %80, %15, %cst_32 {dimension_numbers = #tpu.dot_dimension_numbers<[1], [0], [0], [1], [0, 0, 1, 1], [], []>} : vector<8x128xbf16>, vector<128x512xbf16>, vector<8x512xf32> -> vector<8x512xf32>
    %82 = arith.truncf %79 : vector<8x128xf32> to vector<8x128xbf16>
    %cst_33 = arith.constant dense<0.000000e+00> : vector<8x512xf32>
    %83 = tpu.matmul %82, %17, %cst_33 {dimension_numbers = #tpu.dot_dimension_numbers<[1], [0], [0], [1], [0, 0, 1, 1], [], []>} : vector<8x128xbf16>, vector<128x512xbf16>, vector<8x512xf32> -> vector<8x512xf32>
    %c8 = arith.constant 8 : index
    %c0_34 = arith.constant 0 : index
    %84 = vector.load %arg9[%c8, %c0_34] : memref<64x1024xf32, #tpu.memory_space<vmem>>, vector<8x512xf32>
    %85 = arith.addf %84, %81 : vector<8x512xf32>
    %c48 = arith.constant 48 : index
    %c512_35 = arith.constant 512 : index
    %86 = vector.load %arg9[%c48, %c512_35] : memref<64x1024xf32, #tpu.memory_space<vmem>>, vector<8x512xf32>
    %87 = arith.addf %86, %83 : vector<8x512xf32>
    %88 = vector.extract_strided_slice %85 {offsets = [0, 0], sizes = [8, 128], strides = [1, 1]} : vector<8x512xf32> to vector<8x128xf32>
    %89 = arith.negf %88 : vector<8x128xf32>
    %90 = math.exp %89 : vector<8x128xf32>
    %cst_36 = arith.constant 1.000000e+00 : f32
    %91 = vector.broadcast %cst_36 : f32 to vector<8x128xf32>
    %92 = arith.addf %91, %90 : vector<8x128xf32>
    %93 = arith.divf %91, %92 : vector<8x128xf32>
    %94 = vector.extract_strided_slice %85 {offsets = [0, 128], sizes = [8, 128], strides = [1, 1]} : vector<8x512xf32> to vector<8x128xf32>
    %95 = arith.negf %94 : vector<8x128xf32>
    %96 = math.exp %95 : vector<8x128xf32>
    %cst_37 = arith.constant 1.000000e+00 : f32
    %97 = vector.broadcast %cst_37 : f32 to vector<8x128xf32>
    %98 = arith.addf %97, %96 : vector<8x128xf32>
    %99 = arith.divf %97, %98 : vector<8x128xf32>
    %100 = vector.extract_strided_slice %85 {offsets = [0, 256], sizes = [8, 128], strides = [1, 1]} : vector<8x512xf32> to vector<8x128xf32>
    %101 = math.tanh %100 : vector<8x128xf32>
    %102 = vector.extract_strided_slice %85 {offsets = [0, 384], sizes = [8, 128], strides = [1, 1]} : vector<8x512xf32> to vector<8x128xf32>
    %103 = arith.negf %102 : vector<8x128xf32>
    %104 = math.exp %103 : vector<8x128xf32>
    %cst_38 = arith.constant 1.000000e+00 : f32
    %105 = vector.broadcast %cst_38 : f32 to vector<8x128xf32>
    %106 = arith.addf %105, %104 : vector<8x128xf32>
    %107 = arith.divf %105, %106 : vector<8x128xf32>
    %108 = arith.mulf %99, %52 : vector<8x128xf32>
    %109 = arith.mulf %93, %101 : vector<8x128xf32>
    %110 = arith.addf %108, %109 : vector<8x128xf32>
    %111 = math.tanh %110 : vector<8x128xf32>
    %112 = arith.mulf %107, %111 : vector<8x128xf32>
    %113 = vector.extract_strided_slice %87 {offsets = [0, 0], sizes = [8, 128], strides = [1, 1]} : vector<8x512xf32> to vector<8x128xf32>
    %114 = arith.negf %113 : vector<8x128xf32>
    %115 = math.exp %114 : vector<8x128xf32>
    %cst_39 = arith.constant 1.000000e+00 : f32
    %116 = vector.broadcast %cst_39 : f32 to vector<8x128xf32>
    %117 = arith.addf %116, %115 : vector<8x128xf32>
    %118 = arith.divf %116, %117 : vector<8x128xf32>
    %119 = vector.extract_strided_slice %87 {offsets = [0, 128], sizes = [8, 128], strides = [1, 1]} : vector<8x512xf32> to vector<8x128xf32>
    %120 = arith.negf %119 : vector<8x128xf32>
    %121 = math.exp %120 : vector<8x128xf32>
    %cst_40 = arith.constant 1.000000e+00 : f32
    %122 = vector.broadcast %cst_40 : f32 to vector<8x128xf32>
    %123 = arith.addf %122, %121 : vector<8x128xf32>
    %124 = arith.divf %122, %123 : vector<8x128xf32>
    %125 = vector.extract_strided_slice %87 {offsets = [0, 256], sizes = [8, 128], strides = [1, 1]} : vector<8x512xf32> to vector<8x128xf32>
    %126 = math.tanh %125 : vector<8x128xf32>
    %127 = vector.extract_strided_slice %87 {offsets = [0, 384], sizes = [8, 128], strides = [1, 1]} : vector<8x512xf32> to vector<8x128xf32>
    %128 = arith.negf %127 : vector<8x128xf32>
    %129 = math.exp %128 : vector<8x128xf32>
    %cst_41 = arith.constant 1.000000e+00 : f32
    %130 = vector.broadcast %cst_41 : f32 to vector<8x128xf32>
    %131 = arith.addf %130, %129 : vector<8x128xf32>
    %132 = arith.divf %130, %131 : vector<8x128xf32>
    %133 = arith.mulf %124, %77 : vector<8x128xf32>
    %134 = arith.mulf %118, %126 : vector<8x128xf32>
    %135 = arith.addf %133, %134 : vector<8x128xf32>
    %136 = math.tanh %135 : vector<8x128xf32>
    %137 = arith.mulf %132, %136 : vector<8x128xf32>
    %138 = arith.truncf %112 : vector<8x128xf32> to vector<8x128xbf16>
    %cst_42 = arith.constant dense<0.000000e+00> : vector<8x512xf32>
    %139 = tpu.matmul %138, %15, %cst_42 {dimension_numbers = #tpu.dot_dimension_numbers<[1], [0], [0], [1], [0, 0, 1, 1], [], []>} : vector<8x128xbf16>, vector<128x512xbf16>, vector<8x512xf32> -> vector<8x512xf32>
    %140 = arith.truncf %137 : vector<8x128xf32> to vector<8x128xbf16>
    %cst_43 = arith.constant dense<0.000000e+00> : vector<8x512xf32>
    %141 = tpu.matmul %140, %17, %cst_43 {dimension_numbers = #tpu.dot_dimension_numbers<[1], [0], [0], [1], [0, 0, 1, 1], [], []>} : vector<8x128xbf16>, vector<128x512xbf16>, vector<8x512xf32> -> vector<8x512xf32>
    %c16 = arith.constant 16 : index
    %c0_44 = arith.constant 0 : index
    %142 = vector.load %arg9[%c16, %c0_44] : memref<64x1024xf32, #tpu.memory_space<vmem>>, vector<8x512xf32>
    %143 = arith.addf %142, %139 : vector<8x512xf32>
    %c40 = arith.constant 40 : index
    %c512_45 = arith.constant 512 : index
    %144 = vector.load %arg9[%c40, %c512_45] : memref<64x1024xf32, #tpu.memory_space<vmem>>, vector<8x512xf32>
    %145 = arith.addf %144, %141 : vector<8x512xf32>
    %146 = vector.extract_strided_slice %143 {offsets = [0, 0], sizes = [8, 128], strides = [1, 1]} : vector<8x512xf32> to vector<8x128xf32>
    %147 = arith.negf %146 : vector<8x128xf32>
    %148 = math.exp %147 : vector<8x128xf32>
    %cst_46 = arith.constant 1.000000e+00 : f32
    %149 = vector.broadcast %cst_46 : f32 to vector<8x128xf32>
    %150 = arith.addf %149, %148 : vector<8x128xf32>
    %151 = arith.divf %149, %150 : vector<8x128xf32>
    %152 = vector.extract_strided_slice %143 {offsets = [0, 128], sizes = [8, 128], strides = [1, 1]} : vector<8x512xf32> to vector<8x128xf32>
    %153 = arith.negf %152 : vector<8x128xf32>
    %154 = math.exp %153 : vector<8x128xf32>
    %cst_47 = arith.constant 1.000000e+00 : f32
    %155 = vector.broadcast %cst_47 : f32 to vector<8x128xf32>
    %156 = arith.addf %155, %154 : vector<8x128xf32>
    %157 = arith.divf %155, %156 : vector<8x128xf32>
    %158 = vector.extract_strided_slice %143 {offsets = [0, 256], sizes = [8, 128], strides = [1, 1]} : vector<8x512xf32> to vector<8x128xf32>
    %159 = math.tanh %158 : vector<8x128xf32>
    %160 = vector.extract_strided_slice %143 {offsets = [0, 384], sizes = [8, 128], strides = [1, 1]} : vector<8x512xf32> to vector<8x128xf32>
    %161 = arith.negf %160 : vector<8x128xf32>
    %162 = math.exp %161 : vector<8x128xf32>
    %cst_48 = arith.constant 1.000000e+00 : f32
    %163 = vector.broadcast %cst_48 : f32 to vector<8x128xf32>
    %164 = arith.addf %163, %162 : vector<8x128xf32>
    %165 = arith.divf %163, %164 : vector<8x128xf32>
    %166 = arith.mulf %157, %110 : vector<8x128xf32>
    %167 = arith.mulf %151, %159 : vector<8x128xf32>
    %168 = arith.addf %166, %167 : vector<8x128xf32>
    %169 = math.tanh %168 : vector<8x128xf32>
    %170 = arith.mulf %165, %169 : vector<8x128xf32>
    %171 = vector.extract_strided_slice %145 {offsets = [0, 0], sizes = [8, 128], strides = [1, 1]} : vector<8x512xf32> to vector<8x128xf32>
    %172 = arith.negf %171 : vector<8x128xf32>
    %173 = math.exp %172 : vector<8x128xf32>
    %cst_49 = arith.constant 1.000000e+00 : f32
    %174 = vector.broadcast %cst_49 : f32 to vector<8x128xf32>
    %175 = arith.addf %174, %173 : vector<8x128xf32>
    %176 = arith.divf %174, %175 : vector<8x128xf32>
    %177 = vector.extract_strided_slice %145 {offsets = [0, 128], sizes = [8, 128], strides = [1, 1]} : vector<8x512xf32> to vector<8x128xf32>
    %178 = arith.negf %177 : vector<8x128xf32>
    %179 = math.exp %178 : vector<8x128xf32>
    %cst_50 = arith.constant 1.000000e+00 : f32
    %180 = vector.broadcast %cst_50 : f32 to vector<8x128xf32>
    %181 = arith.addf %180, %179 : vector<8x128xf32>
    %182 = arith.divf %180, %181 : vector<8x128xf32>
    %183 = vector.extract_strided_slice %145 {offsets = [0, 256], sizes = [8, 128], strides = [1, 1]} : vector<8x512xf32> to vector<8x128xf32>
    %184 = math.tanh %183 : vector<8x128xf32>
    %185 = vector.extract_strided_slice %145 {offsets = [0, 384], sizes = [8, 128], strides = [1, 1]} : vector<8x512xf32> to vector<8x128xf32>
    %186 = arith.negf %185 : vector<8x128xf32>
    %187 = math.exp %186 : vector<8x128xf32>
    %cst_51 = arith.constant 1.000000e+00 : f32
    %188 = vector.broadcast %cst_51 : f32 to vector<8x128xf32>
    %189 = arith.addf %188, %187 : vector<8x128xf32>
    %190 = arith.divf %188, %189 : vector<8x128xf32>
    %191 = arith.mulf %182, %135 : vector<8x128xf32>
    %192 = arith.mulf %176, %184 : vector<8x128xf32>
    %193 = arith.addf %191, %192 : vector<8x128xf32>
    %194 = math.tanh %193 : vector<8x128xf32>
    %195 = arith.mulf %190, %194 : vector<8x128xf32>
    %196 = arith.truncf %170 : vector<8x128xf32> to vector<8x128xbf16>
    %cst_52 = arith.constant dense<0.000000e+00> : vector<8x512xf32>
    %197 = tpu.matmul %196, %15, %cst_52 {dimension_numbers = #tpu.dot_dimension_numbers<[1], [0], [0], [1], [0, 0, 1, 1], [], []>} : vector<8x128xbf16>, vector<128x512xbf16>, vector<8x512xf32> -> vector<8x512xf32>
    %198 = arith.truncf %195 : vector<8x128xf32> to vector<8x128xbf16>
    %cst_53 = arith.constant dense<0.000000e+00> : vector<8x512xf32>
    %199 = tpu.matmul %198, %17, %cst_53 {dimension_numbers = #tpu.dot_dimension_numbers<[1], [0], [0], [1], [0, 0, 1, 1], [], []>} : vector<8x128xbf16>, vector<128x512xbf16>, vector<8x512xf32> -> vector<8x512xf32>
    %c24 = arith.constant 24 : index
    %c0_54 = arith.constant 0 : index
    %200 = vector.load %arg9[%c24, %c0_54] : memref<64x1024xf32, #tpu.memory_space<vmem>>, vector<8x512xf32>
    %201 = arith.addf %200, %197 : vector<8x512xf32>
    %c32 = arith.constant 32 : index
    %c512_55 = arith.constant 512 : index
    %202 = vector.load %arg9[%c32, %c512_55] : memref<64x1024xf32, #tpu.memory_space<vmem>>, vector<8x512xf32>
    %203 = arith.addf %202, %199 : vector<8x512xf32>
    %204 = vector.extract_strided_slice %201 {offsets = [0, 0], sizes = [8, 128], strides = [1, 1]} : vector<8x512xf32> to vector<8x128xf32>
    %205 = arith.negf %204 : vector<8x128xf32>
    %206 = math.exp %205 : vector<8x128xf32>
    %cst_56 = arith.constant 1.000000e+00 : f32
    %207 = vector.broadcast %cst_56 : f32 to vector<8x128xf32>
    %208 = arith.addf %207, %206 : vector<8x128xf32>
    %209 = arith.divf %207, %208 : vector<8x128xf32>
    %210 = vector.extract_strided_slice %201 {offsets = [0, 128], sizes = [8, 128], strides = [1, 1]} : vector<8x512xf32> to vector<8x128xf32>
    %211 = arith.negf %210 : vector<8x128xf32>
    %212 = math.exp %211 : vector<8x128xf32>
    %cst_57 = arith.constant 1.000000e+00 : f32
    %213 = vector.broadcast %cst_57 : f32 to vector<8x128xf32>
    %214 = arith.addf %213, %212 : vector<8x128xf32>
    %215 = arith.divf %213, %214 : vector<8x128xf32>
    %216 = vector.extract_strided_slice %201 {offsets = [0, 256], sizes = [8, 128], strides = [1, 1]} : vector<8x512xf32> to vector<8x128xf32>
    %217 = math.tanh %216 : vector<8x128xf32>
    %218 = vector.extract_strided_slice %201 {offsets = [0, 384], sizes = [8, 128], strides = [1, 1]} : vector<8x512xf32> to vector<8x128xf32>
    %219 = arith.negf %218 : vector<8x128xf32>
    %220 = math.exp %219 : vector<8x128xf32>
    %cst_58 = arith.constant 1.000000e+00 : f32
    %221 = vector.broadcast %cst_58 : f32 to vector<8x128xf32>
    %222 = arith.addf %221, %220 : vector<8x128xf32>
    %223 = arith.divf %221, %222 : vector<8x128xf32>
    %224 = arith.mulf %215, %168 : vector<8x128xf32>
    %225 = arith.mulf %209, %217 : vector<8x128xf32>
    %226 = arith.addf %224, %225 : vector<8x128xf32>
    %227 = math.tanh %226 : vector<8x128xf32>
    %228 = arith.mulf %223, %227 : vector<8x128xf32>
    %229 = vector.extract_strided_slice %203 {offsets = [0, 0], sizes = [8, 128], strides = [1, 1]} : vector<8x512xf32> to vector<8x128xf32>
    %230 = arith.negf %229 : vector<8x128xf32>
    %231 = math.exp %230 : vector<8x128xf32>
    %cst_59 = arith.constant 1.000000e+00 : f32
    %232 = vector.broadcast %cst_59 : f32 to vector<8x128xf32>
    %233 = arith.addf %232, %231 : vector<8x128xf32>
    %234 = arith.divf %232, %233 : vector<8x128xf32>
    %235 = vector.extract_strided_slice %203 {offsets = [0, 128], sizes = [8, 128], strides = [1, 1]} : vector<8x512xf32> to vector<8x128xf32>
    %236 = arith.negf %235 : vector<8x128xf32>
    %237 = math.exp %236 : vector<8x128xf32>
    %cst_60 = arith.constant 1.000000e+00 : f32
    %238 = vector.broadcast %cst_60 : f32 to vector<8x128xf32>
    %239 = arith.addf %238, %237 : vector<8x128xf32>
    %240 = arith.divf %238, %239 : vector<8x128xf32>
    %241 = vector.extract_strided_slice %203 {offsets = [0, 256], sizes = [8, 128], strides = [1, 1]} : vector<8x512xf32> to vector<8x128xf32>
    %242 = math.tanh %241 : vector<8x128xf32>
    %243 = vector.extract_strided_slice %203 {offsets = [0, 384], sizes = [8, 128], strides = [1, 1]} : vector<8x512xf32> to vector<8x128xf32>
    %244 = arith.negf %243 : vector<8x128xf32>
    %245 = math.exp %244 : vector<8x128xf32>
    %cst_61 = arith.constant 1.000000e+00 : f32
    %246 = vector.broadcast %cst_61 : f32 to vector<8x128xf32>
    %247 = arith.addf %246, %245 : vector<8x128xf32>
    %248 = arith.divf %246, %247 : vector<8x128xf32>
    %249 = arith.mulf %240, %193 : vector<8x128xf32>
    %250 = arith.mulf %234, %242 : vector<8x128xf32>
    %251 = arith.addf %249, %250 : vector<8x128xf32>
    %252 = math.tanh %251 : vector<8x128xf32>
    %253 = arith.mulf %248, %252 : vector<8x128xf32>
    %254 = arith.truncf %228 : vector<8x128xf32> to vector<8x128xbf16>
    %cst_62 = arith.constant dense<0.000000e+00> : vector<8x512xf32>
    %255 = tpu.matmul %254, %15, %cst_62 {dimension_numbers = #tpu.dot_dimension_numbers<[1], [0], [0], [1], [0, 0, 1, 1], [], []>} : vector<8x128xbf16>, vector<128x512xbf16>, vector<8x512xf32> -> vector<8x512xf32>
    %256 = arith.truncf %253 : vector<8x128xf32> to vector<8x128xbf16>
    %cst_63 = arith.constant dense<0.000000e+00> : vector<8x512xf32>
    %257 = tpu.matmul %256, %17, %cst_63 {dimension_numbers = #tpu.dot_dimension_numbers<[1], [0], [0], [1], [0, 0, 1, 1], [], []>} : vector<8x128xbf16>, vector<128x512xbf16>, vector<8x512xf32> -> vector<8x512xf32>
    %c32_64 = arith.constant 32 : index
    %c0_65 = arith.constant 0 : index
    %258 = vector.load %arg9[%c32_64, %c0_65] : memref<64x1024xf32, #tpu.memory_space<vmem>>, vector<8x512xf32>
    %259 = arith.addf %258, %255 : vector<8x512xf32>
    %c24_66 = arith.constant 24 : index
    %c512_67 = arith.constant 512 : index
    %260 = vector.load %arg9[%c24_66, %c512_67] : memref<64x1024xf32, #tpu.memory_space<vmem>>, vector<8x512xf32>
    %261 = arith.addf %260, %257 : vector<8x512xf32>
    %262 = vector.extract_strided_slice %259 {offsets = [0, 0], sizes = [8, 128], strides = [1, 1]} : vector<8x512xf32> to vector<8x128xf32>
    %263 = arith.negf %262 : vector<8x128xf32>
    %264 = math.exp %263 : vector<8x128xf32>
    %cst_68 = arith.constant 1.000000e+00 : f32
    %265 = vector.broadcast %cst_68 : f32 to vector<8x128xf32>
    %266 = arith.addf %265, %264 : vector<8x128xf32>
    %267 = arith.divf %265, %266 : vector<8x128xf32>
    %268 = vector.extract_strided_slice %259 {offsets = [0, 128], sizes = [8, 128], strides = [1, 1]} : vector<8x512xf32> to vector<8x128xf32>
    %269 = arith.negf %268 : vector<8x128xf32>
    %270 = math.exp %269 : vector<8x128xf32>
    %cst_69 = arith.constant 1.000000e+00 : f32
    %271 = vector.broadcast %cst_69 : f32 to vector<8x128xf32>
    %272 = arith.addf %271, %270 : vector<8x128xf32>
    %273 = arith.divf %271, %272 : vector<8x128xf32>
    %274 = vector.extract_strided_slice %259 {offsets = [0, 256], sizes = [8, 128], strides = [1, 1]} : vector<8x512xf32> to vector<8x128xf32>
    %275 = math.tanh %274 : vector<8x128xf32>
    %276 = vector.extract_strided_slice %259 {offsets = [0, 384], sizes = [8, 128], strides = [1, 1]} : vector<8x512xf32> to vector<8x128xf32>
    %277 = arith.negf %276 : vector<8x128xf32>
    %278 = math.exp %277 : vector<8x128xf32>
    %cst_70 = arith.constant 1.000000e+00 : f32
    %279 = vector.broadcast %cst_70 : f32 to vector<8x128xf32>
    %280 = arith.addf %279, %278 : vector<8x128xf32>
    %281 = arith.divf %279, %280 : vector<8x128xf32>
    %282 = arith.mulf %273, %226 : vector<8x128xf32>
    %283 = arith.mulf %267, %275 : vector<8x128xf32>
    %284 = arith.addf %282, %283 : vector<8x128xf32>
    %285 = math.tanh %284 : vector<8x128xf32>
    %286 = arith.mulf %281, %285 : vector<8x128xf32>
    %287 = vector.extract_strided_slice %261 {offsets = [0, 0], sizes = [8, 128], strides = [1, 1]} : vector<8x512xf32> to vector<8x128xf32>
    %288 = arith.negf %287 : vector<8x128xf32>
    %289 = math.exp %288 : vector<8x128xf32>
    %cst_71 = arith.constant 1.000000e+00 : f32
    %290 = vector.broadcast %cst_71 : f32 to vector<8x128xf32>
    %291 = arith.addf %290, %289 : vector<8x128xf32>
    %292 = arith.divf %290, %291 : vector<8x128xf32>
    %293 = vector.extract_strided_slice %261 {offsets = [0, 128], sizes = [8, 128], strides = [1, 1]} : vector<8x512xf32> to vector<8x128xf32>
    %294 = arith.negf %293 : vector<8x128xf32>
    %295 = math.exp %294 : vector<8x128xf32>
    %cst_72 = arith.constant 1.000000e+00 : f32
    %296 = vector.broadcast %cst_72 : f32 to vector<8x128xf32>
    %297 = arith.addf %296, %295 : vector<8x128xf32>
    %298 = arith.divf %296, %297 : vector<8x128xf32>
    %299 = vector.extract_strided_slice %261 {offsets = [0, 256], sizes = [8, 128], strides = [1, 1]} : vector<8x512xf32> to vector<8x128xf32>
    %300 = math.tanh %299 : vector<8x128xf32>
    %301 = vector.extract_strided_slice %261 {offsets = [0, 384], sizes = [8, 128], strides = [1, 1]} : vector<8x512xf32> to vector<8x128xf32>
    %302 = arith.negf %301 : vector<8x128xf32>
    %303 = math.exp %302 : vector<8x128xf32>
    %cst_73 = arith.constant 1.000000e+00 : f32
    %304 = vector.broadcast %cst_73 : f32 to vector<8x128xf32>
    %305 = arith.addf %304, %303 : vector<8x128xf32>
    %306 = arith.divf %304, %305 : vector<8x128xf32>
    %307 = arith.mulf %298, %251 : vector<8x128xf32>
    %308 = arith.mulf %292, %300 : vector<8x128xf32>
    %309 = arith.addf %307, %308 : vector<8x128xf32>
    %310 = math.tanh %309 : vector<8x128xf32>
    %311 = arith.mulf %306, %310 : vector<8x128xf32>
    %312 = arith.truncf %286 : vector<8x128xf32> to vector<8x128xbf16>
    %cst_74 = arith.constant dense<0.000000e+00> : vector<8x512xf32>
    %313 = tpu.matmul %312, %15, %cst_74 {dimension_numbers = #tpu.dot_dimension_numbers<[1], [0], [0], [1], [0, 0, 1, 1], [], []>} : vector<8x128xbf16>, vector<128x512xbf16>, vector<8x512xf32> -> vector<8x512xf32>
    %314 = arith.truncf %311 : vector<8x128xf32> to vector<8x128xbf16>
    %cst_75 = arith.constant dense<0.000000e+00> : vector<8x512xf32>
    %315 = tpu.matmul %314, %17, %cst_75 {dimension_numbers = #tpu.dot_dimension_numbers<[1], [0], [0], [1], [0, 0, 1, 1], [], []>} : vector<8x128xbf16>, vector<128x512xbf16>, vector<8x512xf32> -> vector<8x512xf32>
    %c40_76 = arith.constant 40 : index
    %c0_77 = arith.constant 0 : index
    %316 = vector.load %arg9[%c40_76, %c0_77] : memref<64x1024xf32, #tpu.memory_space<vmem>>, vector<8x512xf32>
    %317 = arith.addf %316, %313 : vector<8x512xf32>
    %c16_78 = arith.constant 16 : index
    %c512_79 = arith.constant 512 : index
    %318 = vector.load %arg9[%c16_78, %c512_79] : memref<64x1024xf32, #tpu.memory_space<vmem>>, vector<8x512xf32>
    %319 = arith.addf %318, %315 : vector<8x512xf32>
    %320 = vector.extract_strided_slice %317 {offsets = [0, 0], sizes = [8, 128], strides = [1, 1]} : vector<8x512xf32> to vector<8x128xf32>
    %321 = arith.negf %320 : vector<8x128xf32>
    %322 = math.exp %321 : vector<8x128xf32>
    %cst_80 = arith.constant 1.000000e+00 : f32
    %323 = vector.broadcast %cst_80 : f32 to vector<8x128xf32>
    %324 = arith.addf %323, %322 : vector<8x128xf32>
    %325 = arith.divf %323, %324 : vector<8x128xf32>
    %326 = vector.extract_strided_slice %317 {offsets = [0, 128], sizes = [8, 128], strides = [1, 1]} : vector<8x512xf32> to vector<8x128xf32>
    %327 = arith.negf %326 : vector<8x128xf32>
    %328 = math.exp %327 : vector<8x128xf32>
    %cst_81 = arith.constant 1.000000e+00 : f32
    %329 = vector.broadcast %cst_81 : f32 to vector<8x128xf32>
    %330 = arith.addf %329, %328 : vector<8x128xf32>
    %331 = arith.divf %329, %330 : vector<8x128xf32>
    %332 = vector.extract_strided_slice %317 {offsets = [0, 256], sizes = [8, 128], strides = [1, 1]} : vector<8x512xf32> to vector<8x128xf32>
    %333 = math.tanh %332 : vector<8x128xf32>
    %334 = vector.extract_strided_slice %317 {offsets = [0, 384], sizes = [8, 128], strides = [1, 1]} : vector<8x512xf32> to vector<8x128xf32>
    %335 = arith.negf %334 : vector<8x128xf32>
    %336 = math.exp %335 : vector<8x128xf32>
    %cst_82 = arith.constant 1.000000e+00 : f32
    %337 = vector.broadcast %cst_82 : f32 to vector<8x128xf32>
    %338 = arith.addf %337, %336 : vector<8x128xf32>
    %339 = arith.divf %337, %338 : vector<8x128xf32>
    %340 = arith.mulf %331, %284 : vector<8x128xf32>
    %341 = arith.mulf %325, %333 : vector<8x128xf32>
    %342 = arith.addf %340, %341 : vector<8x128xf32>
    %343 = math.tanh %342 : vector<8x128xf32>
    %344 = arith.mulf %339, %343 : vector<8x128xf32>
    %345 = vector.extract_strided_slice %319 {offsets = [0, 0], sizes = [8, 128], strides = [1, 1]} : vector<8x512xf32> to vector<8x128xf32>
    %346 = arith.negf %345 : vector<8x128xf32>
    %347 = math.exp %346 : vector<8x128xf32>
    %cst_83 = arith.constant 1.000000e+00 : f32
    %348 = vector.broadcast %cst_83 : f32 to vector<8x128xf32>
    %349 = arith.addf %348, %347 : vector<8x128xf32>
    %350 = arith.divf %348, %349 : vector<8x128xf32>
    %351 = vector.extract_strided_slice %319 {offsets = [0, 128], sizes = [8, 128], strides = [1, 1]} : vector<8x512xf32> to vector<8x128xf32>
    %352 = arith.negf %351 : vector<8x128xf32>
    %353 = math.exp %352 : vector<8x128xf32>
    %cst_84 = arith.constant 1.000000e+00 : f32
    %354 = vector.broadcast %cst_84 : f32 to vector<8x128xf32>
    %355 = arith.addf %354, %353 : vector<8x128xf32>
    %356 = arith.divf %354, %355 : vector<8x128xf32>
    %357 = vector.extract_strided_slice %319 {offsets = [0, 256], sizes = [8, 128], strides = [1, 1]} : vector<8x512xf32> to vector<8x128xf32>
    %358 = math.tanh %357 : vector<8x128xf32>
    %359 = vector.extract_strided_slice %319 {offsets = [0, 384], sizes = [8, 128], strides = [1, 1]} : vector<8x512xf32> to vector<8x128xf32>
    %360 = arith.negf %359 : vector<8x128xf32>
    %361 = math.exp %360 : vector<8x128xf32>
    %cst_85 = arith.constant 1.000000e+00 : f32
    %362 = vector.broadcast %cst_85 : f32 to vector<8x128xf32>
    %363 = arith.addf %362, %361 : vector<8x128xf32>
    %364 = arith.divf %362, %363 : vector<8x128xf32>
    %365 = arith.mulf %356, %309 : vector<8x128xf32>
    %366 = arith.mulf %350, %358 : vector<8x128xf32>
    %367 = arith.addf %365, %366 : vector<8x128xf32>
    %368 = math.tanh %367 : vector<8x128xf32>
    %369 = arith.mulf %364, %368 : vector<8x128xf32>
    %370 = arith.truncf %344 : vector<8x128xf32> to vector<8x128xbf16>
    %cst_86 = arith.constant dense<0.000000e+00> : vector<8x512xf32>
    %371 = tpu.matmul %370, %15, %cst_86 {dimension_numbers = #tpu.dot_dimension_numbers<[1], [0], [0], [1], [0, 0, 1, 1], [], []>} : vector<8x128xbf16>, vector<128x512xbf16>, vector<8x512xf32> -> vector<8x512xf32>
    %372 = arith.truncf %369 : vector<8x128xf32> to vector<8x128xbf16>
    %cst_87 = arith.constant dense<0.000000e+00> : vector<8x512xf32>
    %373 = tpu.matmul %372, %17, %cst_87 {dimension_numbers = #tpu.dot_dimension_numbers<[1], [0], [0], [1], [0, 0, 1, 1], [], []>} : vector<8x128xbf16>, vector<128x512xbf16>, vector<8x512xf32> -> vector<8x512xf32>
    %c48_88 = arith.constant 48 : index
    %c0_89 = arith.constant 0 : index
    %374 = vector.load %arg9[%c48_88, %c0_89] : memref<64x1024xf32, #tpu.memory_space<vmem>>, vector<8x512xf32>
    %375 = arith.addf %374, %371 : vector<8x512xf32>
    %c8_90 = arith.constant 8 : index
    %c512_91 = arith.constant 512 : index
    %376 = vector.load %arg9[%c8_90, %c512_91] : memref<64x1024xf32, #tpu.memory_space<vmem>>, vector<8x512xf32>
    %377 = arith.addf %376, %373 : vector<8x512xf32>
    %378 = vector.extract_strided_slice %375 {offsets = [0, 0], sizes = [8, 128], strides = [1, 1]} : vector<8x512xf32> to vector<8x128xf32>
    %379 = arith.negf %378 : vector<8x128xf32>
    %380 = math.exp %379 : vector<8x128xf32>
    %cst_92 = arith.constant 1.000000e+00 : f32
    %381 = vector.broadcast %cst_92 : f32 to vector<8x128xf32>
    %382 = arith.addf %381, %380 : vector<8x128xf32>
    %383 = arith.divf %381, %382 : vector<8x128xf32>
    %384 = vector.extract_strided_slice %375 {offsets = [0, 128], sizes = [8, 128], strides = [1, 1]} : vector<8x512xf32> to vector<8x128xf32>
    %385 = arith.negf %384 : vector<8x128xf32>
    %386 = math.exp %385 : vector<8x128xf32>
    %cst_93 = arith.constant 1.000000e+00 : f32
    %387 = vector.broadcast %cst_93 : f32 to vector<8x128xf32>
    %388 = arith.addf %387, %386 : vector<8x128xf32>
    %389 = arith.divf %387, %388 : vector<8x128xf32>
    %390 = vector.extract_strided_slice %375 {offsets = [0, 256], sizes = [8, 128], strides = [1, 1]} : vector<8x512xf32> to vector<8x128xf32>
    %391 = math.tanh %390 : vector<8x128xf32>
    %392 = vector.extract_strided_slice %375 {offsets = [0, 384], sizes = [8, 128], strides = [1, 1]} : vector<8x512xf32> to vector<8x128xf32>
    %393 = arith.negf %392 : vector<8x128xf32>
    %394 = math.exp %393 : vector<8x128xf32>
    %cst_94 = arith.constant 1.000000e+00 : f32
    %395 = vector.broadcast %cst_94 : f32 to vector<8x128xf32>
    %396 = arith.addf %395, %394 : vector<8x128xf32>
    %397 = arith.divf %395, %396 : vector<8x128xf32>
    %398 = arith.mulf %389, %342 : vector<8x128xf32>
    %399 = arith.mulf %383, %391 : vector<8x128xf32>
    %400 = arith.addf %398, %399 : vector<8x128xf32>
    %401 = math.tanh %400 : vector<8x128xf32>
    %402 = arith.mulf %397, %401 : vector<8x128xf32>
    %403 = vector.extract_strided_slice %377 {offsets = [0, 0], sizes = [8, 128], strides = [1, 1]} : vector<8x512xf32> to vector<8x128xf32>
    %404 = arith.negf %403 : vector<8x128xf32>
    %405 = math.exp %404 : vector<8x128xf32>
    %cst_95 = arith.constant 1.000000e+00 : f32
    %406 = vector.broadcast %cst_95 : f32 to vector<8x128xf32>
    %407 = arith.addf %406, %405 : vector<8x128xf32>
    %408 = arith.divf %406, %407 : vector<8x128xf32>
    %409 = vector.extract_strided_slice %377 {offsets = [0, 128], sizes = [8, 128], strides = [1, 1]} : vector<8x512xf32> to vector<8x128xf32>
    %410 = arith.negf %409 : vector<8x128xf32>
    %411 = math.exp %410 : vector<8x128xf32>
    %cst_96 = arith.constant 1.000000e+00 : f32
    %412 = vector.broadcast %cst_96 : f32 to vector<8x128xf32>
    %413 = arith.addf %412, %411 : vector<8x128xf32>
    %414 = arith.divf %412, %413 : vector<8x128xf32>
    %415 = vector.extract_strided_slice %377 {offsets = [0, 256], sizes = [8, 128], strides = [1, 1]} : vector<8x512xf32> to vector<8x128xf32>
    %416 = math.tanh %415 : vector<8x128xf32>
    %417 = vector.extract_strided_slice %377 {offsets = [0, 384], sizes = [8, 128], strides = [1, 1]} : vector<8x512xf32> to vector<8x128xf32>
    %418 = arith.negf %417 : vector<8x128xf32>
    %419 = math.exp %418 : vector<8x128xf32>
    %cst_97 = arith.constant 1.000000e+00 : f32
    %420 = vector.broadcast %cst_97 : f32 to vector<8x128xf32>
    %421 = arith.addf %420, %419 : vector<8x128xf32>
    %422 = arith.divf %420, %421 : vector<8x128xf32>
    %423 = arith.mulf %414, %367 : vector<8x128xf32>
    %424 = arith.mulf %408, %416 : vector<8x128xf32>
    %425 = arith.addf %423, %424 : vector<8x128xf32>
    %426 = math.tanh %425 : vector<8x128xf32>
    %427 = arith.mulf %422, %426 : vector<8x128xf32>
    %428 = arith.truncf %402 : vector<8x128xf32> to vector<8x128xbf16>
    %cst_98 = arith.constant dense<0.000000e+00> : vector<8x512xf32>
    %429 = tpu.matmul %428, %15, %cst_98 {dimension_numbers = #tpu.dot_dimension_numbers<[1], [0], [0], [1], [0, 0, 1, 1], [], []>} : vector<8x128xbf16>, vector<128x512xbf16>, vector<8x512xf32> -> vector<8x512xf32>
    %430 = arith.truncf %427 : vector<8x128xf32> to vector<8x128xbf16>
    %cst_99 = arith.constant dense<0.000000e+00> : vector<8x512xf32>
    %431 = tpu.matmul %430, %17, %cst_99 {dimension_numbers = #tpu.dot_dimension_numbers<[1], [0], [0], [1], [0, 0, 1, 1], [], []>} : vector<8x128xbf16>, vector<128x512xbf16>, vector<8x512xf32> -> vector<8x512xf32>
    %c56_100 = arith.constant 56 : index
    %c0_101 = arith.constant 0 : index
    %432 = vector.load %arg9[%c56_100, %c0_101] : memref<64x1024xf32, #tpu.memory_space<vmem>>, vector<8x512xf32>
    %433 = arith.addf %432, %429 : vector<8x512xf32>
    %c0_102 = arith.constant 0 : index
    %c512_103 = arith.constant 512 : index
    %434 = vector.load %arg9[%c0_102, %c512_103] : memref<64x1024xf32, #tpu.memory_space<vmem>>, vector<8x512xf32>
    %435 = arith.addf %434, %431 : vector<8x512xf32>
    %436 = vector.extract_strided_slice %433 {offsets = [0, 0], sizes = [8, 128], strides = [1, 1]} : vector<8x512xf32> to vector<8x128xf32>
    %437 = arith.negf %436 : vector<8x128xf32>
    %438 = math.exp %437 : vector<8x128xf32>
    %cst_104 = arith.constant 1.000000e+00 : f32
    %439 = vector.broadcast %cst_104 : f32 to vector<8x128xf32>
    %440 = arith.addf %439, %438 : vector<8x128xf32>
    %441 = arith.divf %439, %440 : vector<8x128xf32>
    %442 = vector.extract_strided_slice %433 {offsets = [0, 128], sizes = [8, 128], strides = [1, 1]} : vector<8x512xf32> to vector<8x128xf32>
    %443 = arith.negf %442 : vector<8x128xf32>
    %444 = math.exp %443 : vector<8x128xf32>
    %cst_105 = arith.constant 1.000000e+00 : f32
    %445 = vector.broadcast %cst_105 : f32 to vector<8x128xf32>
    %446 = arith.addf %445, %444 : vector<8x128xf32>
    %447 = arith.divf %445, %446 : vector<8x128xf32>
    %448 = vector.extract_strided_slice %433 {offsets = [0, 256], sizes = [8, 128], strides = [1, 1]} : vector<8x512xf32> to vector<8x128xf32>
    %449 = math.tanh %448 : vector<8x128xf32>
    %450 = vector.extract_strided_slice %433 {offsets = [0, 384], sizes = [8, 128], strides = [1, 1]} : vector<8x512xf32> to vector<8x128xf32>
    %451 = arith.negf %450 : vector<8x128xf32>
    %452 = math.exp %451 : vector<8x128xf32>
    %cst_106 = arith.constant 1.000000e+00 : f32
    %453 = vector.broadcast %cst_106 : f32 to vector<8x128xf32>
    %454 = arith.addf %453, %452 : vector<8x128xf32>
    %455 = arith.divf %453, %454 : vector<8x128xf32>
    %456 = arith.mulf %447, %400 : vector<8x128xf32>
    %457 = arith.mulf %441, %449 : vector<8x128xf32>
    %458 = arith.addf %456, %457 : vector<8x128xf32>
    %459 = math.tanh %458 : vector<8x128xf32>
    %460 = arith.mulf %455, %459 : vector<8x128xf32>
    %461 = vector.extract_strided_slice %435 {offsets = [0, 0], sizes = [8, 128], strides = [1, 1]} : vector<8x512xf32> to vector<8x128xf32>
    %462 = arith.negf %461 : vector<8x128xf32>
    %463 = math.exp %462 : vector<8x128xf32>
    %cst_107 = arith.constant 1.000000e+00 : f32
    %464 = vector.broadcast %cst_107 : f32 to vector<8x128xf32>
    %465 = arith.addf %464, %463 : vector<8x128xf32>
    %466 = arith.divf %464, %465 : vector<8x128xf32>
    %467 = vector.extract_strided_slice %435 {offsets = [0, 128], sizes = [8, 128], strides = [1, 1]} : vector<8x512xf32> to vector<8x128xf32>
    %468 = arith.negf %467 : vector<8x128xf32>
    %469 = math.exp %468 : vector<8x128xf32>
    %cst_108 = arith.constant 1.000000e+00 : f32
    %470 = vector.broadcast %cst_108 : f32 to vector<8x128xf32>
    %471 = arith.addf %470, %469 : vector<8x128xf32>
    %472 = arith.divf %470, %471 : vector<8x128xf32>
    %473 = vector.extract_strided_slice %435 {offsets = [0, 256], sizes = [8, 128], strides = [1, 1]} : vector<8x512xf32> to vector<8x128xf32>
    %474 = math.tanh %473 : vector<8x128xf32>
    %475 = vector.extract_strided_slice %435 {offsets = [0, 384], sizes = [8, 128], strides = [1, 1]} : vector<8x512xf32> to vector<8x128xf32>
    %476 = arith.negf %475 : vector<8x128xf32>
    %477 = math.exp %476 : vector<8x128xf32>
    %cst_109 = arith.constant 1.000000e+00 : f32
    %478 = vector.broadcast %cst_109 : f32 to vector<8x128xf32>
    %479 = arith.addf %478, %477 : vector<8x128xf32>
    %480 = arith.divf %478, %479 : vector<8x128xf32>
    %481 = arith.mulf %472, %425 : vector<8x128xf32>
    %482 = arith.mulf %466, %474 : vector<8x128xf32>
    %483 = arith.addf %481, %482 : vector<8x128xf32>
    %484 = math.tanh %483 : vector<8x128xf32>
    %485 = arith.mulf %480, %484 : vector<8x128xf32>
    %c1_i32 = arith.constant 1 : i32
    %486 = arith.cmpi slt, %arg0, %c1_i32 : i32
    %487 = arith.extui %486 : i1 to i32
    %c0_i32_110 = arith.constant 0 : i32
    %488 = arith.cmpi ne, %487, %c0_i32_110 : i32
    scf.if %488 {
      %c0_113 = arith.constant 0 : index
      %c0_114 = arith.constant 0 : index
      %c0_115 = arith.constant 0 : index
      %492 = vector.load %arg8[%c0_113, %c0_114, %c0_115] : memref<8x8x256xf32, #tpu.memory_space<vmem>>, vector<1x8x128xf32>
      %493 = vector.shape_cast %492 : vector<1x8x128xf32> to vector<8x128xf32>
      %494 = vector.shape_cast %54 : vector<8x128xf32> to vector<1x8x128xf32>
      tpu.vector_store %arg8[%c0_113, %c0_114, %c0_115], %494 {strides = array<i32>} : memref<8x8x256xf32, #tpu.memory_space<vmem>>, vector<1x8x128xf32>,
      %c7 = arith.constant 7 : index
      %c0_116 = arith.constant 0 : index
      %c128 = arith.constant 128 : index
      %495 = vector.load %arg8[%c7, %c0_116, %c128] : memref<8x8x256xf32, #tpu.memory_space<vmem>>, vector<1x8x128xf32>
      %496 = vector.shape_cast %495 : vector<1x8x128xf32> to vector<8x128xf32>
      %497 = vector.shape_cast %79 : vector<8x128xf32> to vector<1x8x128xf32>
      tpu.vector_store %arg8[%c7, %c0_116, %c128], %497 {strides = array<i32>} : memref<8x8x256xf32, #tpu.memory_space<vmem>>, vector<1x8x128xf32>,
      %c1_117 = arith.constant 1 : index
      %c0_118 = arith.constant 0 : index
      %c0_119 = arith.constant 0 : index
      %498 = vector.load %arg8[%c1_117, %c0_118, %c0_119] : memref<8x8x256xf32, #tpu.memory_space<vmem>>, vector<1x8x128xf32>
      %499 = vector.shape_cast %498 : vector<1x8x128xf32> to vector<8x128xf32>
      %500 = vector.shape_cast %112 : vector<8x128xf32> to vector<1x8x128xf32>
      tpu.vector_store %arg8[%c1_117, %c0_118, %c0_119], %500 {strides = array<i32>} : memref<8x8x256xf32, #tpu.memory_space<vmem>>, vector<1x8x128xf32>,
      %c6 = arith.constant 6 : index
      %c0_120 = arith.constant 0 : index
      %c128_121 = arith.constant 128 : index
      %501 = vector.load %arg8[%c6, %c0_120, %c128_121] : memref<8x8x256xf32, #tpu.memory_space<vmem>>, vector<1x8x128xf32>
      %502 = vector.shape_cast %501 : vector<1x8x128xf32> to vector<8x128xf32>
      %503 = vector.shape_cast %137 : vector<8x128xf32> to vector<1x8x128xf32>
      tpu.vector_store %arg8[%c6, %c0_120, %c128_121], %503 {strides = array<i32>} : memref<8x8x256xf32, #tpu.memory_space<vmem>>, vector<1x8x128xf32>,
      %c2 = arith.constant 2 : index
      %c0_122 = arith.constant 0 : index
      %c0_123 = arith.constant 0 : index
      %504 = vector.load %arg8[%c2, %c0_122, %c0_123] : memref<8x8x256xf32, #tpu.memory_space<vmem>>, vector<1x8x128xf32>
      %505 = vector.shape_cast %504 : vector<1x8x128xf32> to vector<8x128xf32>
      %506 = vector.shape_cast %170 : vector<8x128xf32> to vector<1x8x128xf32>
      tpu.vector_store %arg8[%c2, %c0_122, %c0_123], %506 {strides = array<i32>} : memref<8x8x256xf32, #tpu.memory_space<vmem>>, vector<1x8x128xf32>,
      %c5 = arith.constant 5 : index
      %c0_124 = arith.constant 0 : index
      %c128_125 = arith.constant 128 : index
      %507 = vector.load %arg8[%c5, %c0_124, %c128_125] : memref<8x8x256xf32, #tpu.memory_space<vmem>>, vector<1x8x128xf32>
      %508 = vector.shape_cast %507 : vector<1x8x128xf32> to vector<8x128xf32>
      %509 = vector.shape_cast %195 : vector<8x128xf32> to vector<1x8x128xf32>
      tpu.vector_store %arg8[%c5, %c0_124, %c128_125], %509 {strides = array<i32>} : memref<8x8x256xf32, #tpu.memory_space<vmem>>, vector<1x8x128xf32>,
      %c3 = arith.constant 3 : index
      %c0_126 = arith.constant 0 : index
      %c0_127 = arith.constant 0 : index
      %510 = vector.load %arg8[%c3, %c0_126, %c0_127] : memref<8x8x256xf32, #tpu.memory_space<vmem>>, vector<1x8x128xf32>
      %511 = vector.shape_cast %510 : vector<1x8x128xf32> to vector<8x128xf32>
      %512 = vector.shape_cast %228 : vector<8x128xf32> to vector<1x8x128xf32>
      tpu.vector_store %arg8[%c3, %c0_126, %c0_127], %512 {strides = array<i32>} : memref<8x8x256xf32, #tpu.memory_space<vmem>>, vector<1x8x128xf32>,
      %c4 = arith.constant 4 : index
      %c0_128 = arith.constant 0 : index
      %c128_129 = arith.constant 128 : index
      %513 = vector.load %arg8[%c4, %c0_128, %c128_129] : memref<8x8x256xf32, #tpu.memory_space<vmem>>, vector<1x8x128xf32>
      %514 = vector.shape_cast %513 : vector<1x8x128xf32> to vector<8x128xf32>
      %515 = vector.shape_cast %253 : vector<8x128xf32> to vector<1x8x128xf32>
      tpu.vector_store %arg8[%c4, %c0_128, %c128_129], %515 {strides = array<i32>} : memref<8x8x256xf32, #tpu.memory_space<vmem>>, vector<1x8x128xf32>,
      %c4_130 = arith.constant 4 : index
      %c0_131 = arith.constant 0 : index
      %c0_132 = arith.constant 0 : index
      %516 = vector.load %arg8[%c4_130, %c0_131, %c0_132] : memref<8x8x256xf32, #tpu.memory_space<vmem>>, vector<1x8x128xf32>
      %517 = vector.shape_cast %516 : vector<1x8x128xf32> to vector<8x128xf32>
      %518 = vector.shape_cast %286 : vector<8x128xf32> to vector<1x8x128xf32>
      tpu.vector_store %arg8[%c4_130, %c0_131, %c0_132], %518 {strides = array<i32>} : memref<8x8x256xf32, #tpu.memory_space<vmem>>, vector<1x8x128xf32>,
      %c3_133 = arith.constant 3 : index
      %c0_134 = arith.constant 0 : index
      %c128_135 = arith.constant 128 : index
      %519 = vector.load %arg8[%c3_133, %c0_134, %c128_135] : memref<8x8x256xf32, #tpu.memory_space<vmem>>, vector<1x8x128xf32>
      %520 = vector.shape_cast %519 : vector<1x8x128xf32> to vector<8x128xf32>
      %521 = vector.shape_cast %311 : vector<8x128xf32> to vector<1x8x128xf32>
      tpu.vector_store %arg8[%c3_133, %c0_134, %c128_135], %521 {strides = array<i32>} : memref<8x8x256xf32, #tpu.memory_space<vmem>>, vector<1x8x128xf32>,
      %c5_136 = arith.constant 5 : index
      %c0_137 = arith.constant 0 : index
      %c0_138 = arith.constant 0 : index
      %522 = vector.load %arg8[%c5_136, %c0_137, %c0_138] : memref<8x8x256xf32, #tpu.memory_space<vmem>>, vector<1x8x128xf32>
      %523 = vector.shape_cast %522 : vector<1x8x128xf32> to vector<8x128xf32>
      %524 = vector.shape_cast %344 : vector<8x128xf32> to vector<1x8x128xf32>
      tpu.vector_store %arg8[%c5_136, %c0_137, %c0_138], %524 {strides = array<i32>} : memref<8x8x256xf32, #tpu.memory_space<vmem>>, vector<1x8x128xf32>,
      %c2_139 = arith.constant 2 : index
      %c0_140 = arith.constant 0 : index
      %c128_141 = arith.constant 128 : index
      %525 = vector.load %arg8[%c2_139, %c0_140, %c128_141] : memref<8x8x256xf32, #tpu.memory_space<vmem>>, vector<1x8x128xf32>
      %526 = vector.shape_cast %525 : vector<1x8x128xf32> to vector<8x128xf32>
      %527 = vector.shape_cast %369 : vector<8x128xf32> to vector<1x8x128xf32>
      tpu.vector_store %arg8[%c2_139, %c0_140, %c128_141], %527 {strides = array<i32>} : memref<8x8x256xf32, #tpu.memory_space<vmem>>, vector<1x8x128xf32>,
      %c6_142 = arith.constant 6 : index
      %c0_143 = arith.constant 0 : index
      %c0_144 = arith.constant 0 : index
      %528 = vector.load %arg8[%c6_142, %c0_143, %c0_144] : memref<8x8x256xf32, #tpu.memory_space<vmem>>, vector<1x8x128xf32>
      %529 = vector.shape_cast %528 : vector<1x8x128xf32> to vector<8x128xf32>
      %530 = vector.shape_cast %402 : vector<8x128xf32> to vector<1x8x128xf32>
      tpu.vector_store %arg8[%c6_142, %c0_143, %c0_144], %530 {strides = array<i32>} : memref<8x8x256xf32, #tpu.memory_space<vmem>>, vector<1x8x128xf32>,
      %c1_145 = arith.constant 1 : index
      %c0_146 = arith.constant 0 : index
      %c128_147 = arith.constant 128 : index
      %531 = vector.load %arg8[%c1_145, %c0_146, %c128_147] : memref<8x8x256xf32, #tpu.memory_space<vmem>>, vector<1x8x128xf32>
      %532 = vector.shape_cast %531 : vector<1x8x128xf32> to vector<8x128xf32>
      %533 = vector.shape_cast %427 : vector<8x128xf32> to vector<1x8x128xf32>
      tpu.vector_store %arg8[%c1_145, %c0_146, %c128_147], %533 {strides = array<i32>} : memref<8x8x256xf32, #tpu.memory_space<vmem>>, vector<1x8x128xf32>,
      %c7_148 = arith.constant 7 : index
      %c0_149 = arith.constant 0 : index
      %c0_150 = arith.constant 0 : index
      %534 = vector.load %arg8[%c7_148, %c0_149, %c0_150] : memref<8x8x256xf32, #tpu.memory_space<vmem>>, vector<1x8x128xf32>
      %535 = vector.shape_cast %534 : vector<1x8x128xf32> to vector<8x128xf32>
      %536 = vector.shape_cast %460 : vector<8x128xf32> to vector<1x8x128xf32>
      tpu.vector_store %arg8[%c7_148, %c0_149, %c0_150], %536 {strides = array<i32>} : memref<8x8x256xf32, #tpu.memory_space<vmem>>, vector<1x8x128xf32>,
      %c0_151 = arith.constant 0 : index
      %c0_152 = arith.constant 0 : index
      %c128_153 = arith.constant 128 : index
      %537 = vector.load %arg8[%c0_151, %c0_152, %c128_153] : memref<8x8x256xf32, #tpu.memory_space<vmem>>, vector<1x8x128xf32>
      %538 = vector.shape_cast %537 : vector<1x8x128xf32> to vector<8x128xf32>
      %539 = vector.shape_cast %485 : vector<8x128xf32> to vector<1x8x128xf32>
      tpu.vector_store %arg8[%c0_151, %c0_152, %c128_153], %539 {strides = array<i32>} : memref<8x8x256xf32, #tpu.memory_space<vmem>>, vector<1x8x128xf32>,
    } else {
    }
    %c1_i32_111 = arith.constant 1 : i32
    %489 = arith.cmpi eq, %arg0, %c1_i32_111 : i32
    %490 = arith.extui %489 : i1 to i32
    %c0_i32_112 = arith.constant 0 : i32
    %491 = arith.cmpi ne, %490, %c0_i32_112 : i32
    scf.if %491 {
      %492 = arith.truncf %54 : vector<8x128xf32> to vector<8x128xbf16>
      %c0_113 = arith.constant 0 : index
      %c0_114 = arith.constant 0 : index
      %c0_115 = arith.constant 0 : index
      %493 = vector.load %arg5[%c0_113, %c0_114, %c0_115] : memref<4x128x128xbf16, #tpu.memory_space<vmem>>, vector<1x128x128xbf16>
      %494 = vector.shape_cast %493 : vector<1x128x128xbf16> to vector<128x128xbf16>
      %cst_116 = arith.constant dense<0.000000e+00> : vector<8x128xf32>
      %495 = tpu.matmul %492, %494, %cst_116 {dimension_numbers = #tpu.dot_dimension_numbers<[1], [0], [0], [1], [0, 0, 1, 1], [], []>} : vector<8x128xbf16>, vector<128x128xbf16>, vector<8x128xf32> -> vector<8x128xf32>
      %496 = arith.truncf %485 : vector<8x128xf32> to vector<8x128xbf16>
      %c1_117 = arith.constant 1 : index
      %c0_118 = arith.constant 0 : index
      %c0_119 = arith.constant 0 : index
      %497 = vector.load %arg5[%c1_117, %c0_118, %c0_119] : memref<4x128x128xbf16, #tpu.memory_space<vmem>>, vector<1x128x128xbf16>
      %498 = vector.shape_cast %497 : vector<1x128x128xbf16> to vector<128x128xbf16>
      %cst_120 = arith.constant dense<0.000000e+00> : vector<8x128xf32>
      %499 = tpu.matmul %496, %498, %cst_120 {dimension_numbers = #tpu.dot_dimension_numbers<[1], [0], [0], [1], [0, 0, 1, 1], [], []>} : vector<8x128xbf16>, vector<128x128xbf16>, vector<8x128xf32> -> vector<8x128xf32>
      %500 = arith.addf %495, %499 : vector<8x128xf32>
      %501 = arith.truncf %460 : vector<8x128xf32> to vector<8x128xbf16>
      %c2 = arith.constant 2 : index
      %c0_121 = arith.constant 0 : index
      %c0_122 = arith.constant 0 : index
      %502 = vector.load %arg5[%c2, %c0_121, %c0_122] : memref<4x128x128xbf16, #tpu.memory_space<vmem>>, vector<1x128x128xbf16>
      %503 = vector.shape_cast %502 : vector<1x128x128xbf16> to vector<128x128xbf16>
      %cst_123 = arith.constant dense<0.000000e+00> : vector<8x128xf32>
      %504 = tpu.matmul %501, %503, %cst_123 {dimension_numbers = #tpu.dot_dimension_numbers<[1], [0], [0], [1], [0, 0, 1, 1], [], []>} : vector<8x128xbf16>, vector<128x128xbf16>, vector<8x128xf32> -> vector<8x128xf32>
      %505 = arith.addf %500, %504 : vector<8x128xf32>
      %506 = arith.truncf %79 : vector<8x128xf32> to vector<8x128xbf16>
      %c3 = arith.constant 3 : index
      %c0_124 = arith.constant 0 : index
      %c0_125 = arith.constant 0 : index
      %507 = vector.load %arg5[%c3, %c0_124, %c0_125] : memref<4x128x128xbf16, #tpu.memory_space<vmem>>, vector<1x128x128xbf16>
      %508 = vector.shape_cast %507 : vector<1x128x128xbf16> to vector<128x128xbf16>
      %cst_126 = arith.constant dense<0.000000e+00> : vector<8x128xf32>
      %509 = tpu.matmul %506, %508, %cst_126 {dimension_numbers = #tpu.dot_dimension_numbers<[1], [0], [0], [1], [0, 0, 1, 1], [], []>} : vector<8x128xbf16>, vector<128x128xbf16>, vector<8x128xf32> -> vector<8x128xf32>
      %510 = arith.addf %505, %509 : vector<8x128xf32>
      %c0_127 = arith.constant 0 : index
      %c0_128 = arith.constant 0 : index
      %511 = vector.load %arg6[%c0_127, %c0_128] : memref<1x128xf32, #tpu.memory_space<vmem>>, vector<1x128xf32>
      %512 = vector.broadcast %511 : vector<1x128xf32> to vector<8x128xf32>
      %513 = arith.addf %510, %512 : vector<8x128xf32>
      %c0_129 = arith.constant 0 : index
      %c0_130 = arith.constant 0 : index
      %514 = vector.load %arg7[%c0_129, %c0_130] : memref<8x128xf32, #tpu.memory_space<vmem>>, vector<8x128xf32>
      tpu.vector_store %arg7[%c0_129, %c0_130], %513 {strides = array<i32>} : memref<8x128xf32, #tpu.memory_space<vmem>>, vector<8x128xf32>,
    } else {
    }
    return
  }
  func.func @transform_0(%arg0: i32) -> (i32, i32, i32) {
    %c0_i32 = arith.constant 0 : i32
    %c0_i32_0 = arith.constant 0 : i32
    %c0_i32_1 = arith.constant 0 : i32
    %c0_i32_2 = arith.constant 0 : i32
    return %c0_i32, %c0_i32_0, %c0_i32_1 : i32, i32, i32
  }
  func.func @transform_1(%arg0: i32) -> (i32, i32, i32) {
    %c0_i32 = arith.constant 0 : i32
    %c0_i32_0 = arith.constant 0 : i32
    %c0_i32_1 = arith.constant 0 : i32
    return %arg0, %c0_i32, %c0_i32_0 : i32, i32, i32
  }
  func.func @transform_2(%arg0: i32) -> (i32, i32, i32, i32) {
    %c0_i32 = arith.constant 0 : i32
    %c0_i32_0 = arith.constant 0 : i32
    %c0_i32_1 = arith.constant 0 : i32
    %c0_i32_2 = arith.constant 0 : i32
    return %arg0, %c0_i32, %c0_i32_0, %c0_i32_1 : i32, i32, i32, i32
  }
  func.func @transform_3(%arg0: i32) -> (i32, i32, i32) {
    %c0_i32 = arith.constant 0 : i32
    %c0_i32_0 = arith.constant 0 : i32
    %c0_i32_1 = arith.constant 0 : i32
    return %arg0, %c0_i32, %c0_i32_0 : i32, i32, i32
  }
  func.func @transform_4(%arg0: i32) -> (i32, i32, i32) {
    %c0_i32 = arith.constant 0 : i32
    %c0_i32_0 = arith.constant 0 : i32
    %c0_i32_1 = arith.constant 0 : i32
    %c0_i32_2 = arith.constant 0 : i32
    return %c0_i32, %c0_i32_0, %c0_i32_1 : i32, i32, i32
  }
  func.func @transform_5(%arg0: i32) -> (i32, i32) {
    %c0_i32 = arith.constant 0 : i32
    %c0_i32_0 = arith.constant 0 : i32
    %c0_i32_1 = arith.constant 0 : i32
    return %c0_i32, %c0_i32_0 : i32, i32
  }
  func.func @transform_6(%arg0: i32) -> (i32, i32) {
    %c0_i32 = arith.constant 0 : i32
    %c0_i32_0 = arith.constant 0 : i32
    %c0_i32_1 = arith.constant 0 : i32
    return %c0_i32, %c0_i32_0 : i32, i32
  }
}

</mosaic_0001>

<llo_original>
// kernel: birnn_forward.1
$region0: #{birnn_forward.1}
  #allocation0 [shape = 'u32[]', space=smem, size = 0x4, offset = 0x4, fixed_abs, tag = 'smem constant byte address 0x4 - core index']
  #allocation1 [shape = 'u32[144,128]{1,0:T(1,128)}', space=vmem, size = 0x12000, scoped, tag = 'internal scratch']
  #allocation2 [shape = 'f32[8,8,256]{2,1,0:T(8,128)}', space=vmem, size = 0x10000, scoped, tag = 'scratch operand']
  #allocation3 [shape = 'f32[64,1024]{1,0:T(8,128)}', space=vmem, size = 0x40000, scoped, tag = 'scratch operand']
  %s0 = inlined_call_operand.vmem [shape: f32[8,8,256], index: 0, kind: input, shape index: {}]
  %s1 = inlined_call_operand.hbm [shape: bf16[2,256,1024], index: 1, kind: input, shape index: {}]
  %s2 = inlined_call_operand.hbm [shape: bf16[2,2,128,512], index: 2, kind: input, shape index: {}]
  %s3 = inlined_call_operand.vmem [shape: f32[2,1,1024], index: 3, kind: input, shape index: {}]
  %s4 = inlined_call_operand.vmem [shape: bf16[4,128,128], index: 4, kind: input, shape index: {}]
  %s5 = inlined_call_operand.vmem [shape: f32[1,128], index: 5, kind: input, shape index: {}]
  %s6 = inlined_call_operand.vmem [shape: f32[8,128], index: 6, kind: output, shape index: {}]
  %s7 = sld [smem:[#allocation0]]
  $region77: #{birnn_forward.1} parent=0
    _
  %s9 = ssub.s32 1, %s7
  %s10 = scalar_select 0, %s9, %s7
  $region1: #{birnn_forward.1} parent=0
    #allocation4 [shape = 'u8[1048576]{0}', space=vmem, size = 0x100000, scoped, tag = 'input window, operand 1']
    #allocation5 [shape = 's32[2]{0}', space=sflag, size = 0x8, scoped, tag = 'scoped memory for birnn_forward.1']
    #allocation6 [shape = 'u8[524288]{0}', space=vmem, size = 0x80000, scoped, tag = 'input window, operand 2']
    #allocation7 [shape = 's32[2]{0}', space=sflag, size = 0x8, scoped, tag = 'scoped memory for birnn_forward.1']
    %11 = vsyncpa [#allocation5], 0
    %s12 = scalar_lea.sflag [#allocation5], 1
    %13 = vsyncpa %s12, 0
    %14 = vsyncpa [#allocation7], 0
    %s15 = scalar_lea.sflag [#allocation7], 1
    %16 = vsyncpa %s15, 0
    loop: start=0, step=1, limit=4
    $region2: #{birnn_forward.1} parent=1 // loop_pre_header
      _
    $region3: #{birnn_forward.1} parent=1 // loop_header
      %s18 = sphi 0, %s22
      %p19 = scmp.ge.s32.totalorder %s18, 4
      %s26 = sphi 0, %s26
      %s28 = sphi 0, %s26
      %s29 = sphi 0, %s28
      %s43 = sphi 0, %s29
      %s49 = sphi 0, %s51
      %s52 = sphi 0, %s49
      %s53 = sphi 0, %s52
      %s69 = sphi 0, %s53
      %s75 = sphi 0, %s77
      %s78 = sphi 0, %s75
      %s79 = sphi 0, %s78
      %s95 = sphi 0, %s79
      %s101 = sphi 0, %s103
      %s104 = sphi 0, %s101
      %s105 = sphi 0, %s104
      %s121 = sphi 0, %s105
      %s125 = sphi 0, %s125
      %s127 = sphi 0, %s125
      %s128 = sphi 0, %s127
      %s142 = sphi 0, %s128
      %s146 = sphi 0, %s146
      %s148 = sphi 0, %s146
      %s149 = sphi 0, %s148
      %s163 = sphi 0, %s149
      %s167 = sphi 0, %s167
      %s169 = sphi 0, %s167
      %s170 = sphi 0, %s169
      %s184 = sphi 0, %s170
    $region4: #{birnn_forward.1} parent=1 // loop_header_branch
      %21 = sbr.rel (%p19) target = $region8
    $region5: #{birnn_forward.1} parent=1 // loop_body
      %s23 = ssub.s32 %s18, 1
      %s24 = ssub.s32 %s18, 2
      %s25 = sadd.s32 %s18, 1
      %s27 = sadd.s32 %s26, 1
      %p30 = scmp.eq.s32.totalorder %s18, 1
      %p31 = scmp.ne.s32.totalorder %s26, %s28
      %p32 = scmp.eq.s32.totalorder %s18, 0
      %p33 = por %p31, %p32
      %p34 = scmp.ne.s32.totalorder %s26, %s28
      %p35 = scmp.eq.s32.totalorder %s23, 1
      %p36 = por %p34, %p35
      %p37 = scmp.ne.s32.totalorder %s28, %s29
      %p38 = scmp.eq.s32.totalorder %s23, 0
      %p39 = por %p37, %p38
      %p40 = scmp.ne.s32.totalorder %s28, %s29
      %p41 = scmp.eq.s32.totalorder %s24, 1
      %p42 = por %p40, %p41
      %p44 = scmp.ne.s32.totalorder %s29, %s43
      %p45 = scmp.eq.s32.totalorder %s24, 0
      %p46 = por %p44, %p45
      %s47 = ssub.s32 %s18, %s25
      %p48 = scmp.eq.s32.totalorder %s47, 0
      %s50 = sadd.s32 %s49, 1
      %s51 = scalar_select %p48, %s49, %s50
      %p54 = pneg %p48
      %p55 = scmp.eq.s32.totalorder %s18, 1
      %p56 = por %p54, %p55
      %p57 = scmp.ne.s32.totalorder %s49, %s52
      %p58 = scmp.eq.s32.totalorder %s18, 0
      %p59 = por %p57, %p58
      %p60 = scmp.ne.s32.totalorder %s49, %s52
      %p61 = scmp.eq.s32.totalorder %s23, 1
      %p62 = por %p60, %p61
      %p63 = scmp.ne.s32.totalorder %s52, %s53
      %p64 = scmp.eq.s32.totalorder %s23, 0
      %p65 = por %p63, %p64
      %p66 = scmp.ne.s32.totalorder %s52, %s53
      %p67 = scmp.eq.s32.totalorder %s24, 1
      %p68 = por %p66, %p67
      %p70 = scmp.ne.s32.totalorder %s53, %s69
      %p71 = scmp.eq.s32.totalorder %s24, 0
      %p72 = por %p70, %p71
      %s73 = ssub.s32 %s18, %s25
      %p74 = scmp.eq.s32.totalorder %s73, 0
      %s76 = sadd.s32 %s75, 1
      %s77 = scalar_select %p74, %s75, %s76
      %p80 = pneg %p74
      %p81 = scmp.eq.s32.totalorder %s18, 1
      %p82 = por %p80, %p81
      %p83 = scmp.ne.s32.totalorder %s75, %s78
      %p84 = scmp.eq.s32.totalorder %s18, 0
      %p85 = por %p83, %p84
      %p86 = scmp.ne.s32.totalorder %s75, %s78
      %p87 = scmp.eq.s32.totalorder %s23, 1
      %p88 = por %p86, %p87
      %p89 = scmp.ne.s32.totalorder %s78, %s79
      %p90 = scmp.eq.s32.totalorder %s23, 0
      %p91 = por %p89, %p90
      %p92 = scmp.ne.s32.totalorder %s78, %s79
      %p93 = scmp.eq.s32.totalorder %s24, 1
      %p94 = por %p92, %p93
      %p96 = scmp.ne.s32.totalorder %s79, %s95
      %p97 = scmp.eq.s32.totalorder %s24, 0
      %p98 = por %p96, %p97
      %s99 = ssub.s32 %s18, %s25
      %p100 = scmp.eq.s32.totalorder %s99, 0
      %s102 = sadd.s32 %s101, 1
      %s103 = scalar_select %p100, %s101, %s102
      %p106 = pneg %p100
      %p107 = scmp.eq.s32.totalorder %s18, 1
      %p108 = por %p106, %p107
      %p109 = scmp.ne.s32.totalorder %s101, %s104
      %p110 = scmp.eq.s32.totalorder %s18, 0
      %p111 = por %p109, %p110
      %p112 = scmp.ne.s32.totalorder %s101, %s104
      %p113 = scmp.eq.s32.totalorder %s23, 1
      %p114 = por %p112, %p113
      %p115 = scmp.ne.s32.totalorder %s104, %s105
      %p116 = scmp.eq.s32.totalorder %s23, 0
      %p117 = por %p115, %p116
      %p118 = scmp.ne.s32.totalorder %s104, %s105
      %p119 = scmp.eq.s32.totalorder %s24, 1
      %p120 = por %p118, %p119
      %p122 = scmp.ne.s32.totalorder %s105, %s121
      %p123 = scmp.eq.s32.totalorder %s24, 0
      %p124 = por %p122, %p123
      %s126 = sadd.s32 %s125, 1
      %p129 = scmp.eq.s32.totalorder %s18, 1
      %p130 = scmp.ne.s32.totalorder %s125, %s127
      %p131 = scmp.eq.s32.totalorder %s18, 0
      %p132 = por %p130, %p131
      %p133 = scmp.ne.s32.totalorder %s125, %s127
      %p134 = scmp.eq.s32.totalorder %s23, 1
      %p135 = por %p133, %p134
      %p136 = scmp.ne.s32.totalorder %s127, %s128
      %p137 = scmp.eq.s32.totalorder %s23, 0
      %p138 = por %p136, %p137
      %p139 = scmp.ne.s32.totalorder %s127, %s128
      %p140 = scmp.eq.s32.totalorder %s24, 1
      %p141 = por %p139, %p140
      %p143 = scmp.ne.s32.totalorder %s128, %s142
      %p144 = scmp.eq.s32.totalorder %s24, 0
      %p145 = por %p143, %p144
      %s147 = sadd.s32 %s146, 1
      %p150 = scmp.eq.s32.totalorder %s18, 1
      %p151 = scmp.ne.s32.totalorder %s146, %s148
      %p152 = scmp.eq.s32.totalorder %s18, 0
      %p153 = por %p151, %p152
      %p154 = scmp.ne.s32.totalorder %s146, %s148
      %p155 = scmp.eq.s32.totalorder %s23, 1
      %p156 = por %p154, %p155
      %p157 = scmp.ne.s32.totalorder %s148, %s149
      %p158 = scmp.eq.s32.totalorder %s23, 0
      %p159 = por %p157, %p158
      %p160 = scmp.ne.s32.totalorder %s148, %s149
      %p161 = scmp.eq.s32.totalorder %s24, 1
      %p162 = por %p160, %p161
      %p164 = scmp.ne.s32.totalorder %s149, %s163
      %p165 = scmp.eq.s32.totalorder %s24, 0
      %p166 = por %p164, %p165
      %s168 = sadd.s32 %s167, 1
      %p171 = scmp.eq.s32.totalorder %s18, 1
      %p172 = scmp.ne.s32.totalorder %s167, %s169
      %p173 = scmp.eq.s32.totalorder %s18, 0
      %p174 = por %p172, %p173
      %p175 = scmp.ne.s32.totalorder %s167, %s169
      %p176 = scmp.eq.s32.totalorder %s23, 1
      %p177 = por %p175, %p176
      %p178 = scmp.ne.s32.totalorder %s169, %s170
      %p179 = scmp.eq.s32.totalorder %s23, 0
      %p180 = por %p178, %p179
      %p181 = scmp.ne.s32.totalorder %s169, %s170
      %p182 = scmp.eq.s32.totalorder %s24, 1
      %p183 = por %p181, %p182
      %p185 = scmp.ne.s32.totalorder %s170, %s184
      %p186 = scmp.eq.s32.totalorder %s24, 0
      %p187 = por %p185, %p186
      %p188 = scmp.le.s32.totalorder 1, %s18
      %p189 = scmp.lt.s32.totalorder %s18, 3
      %p190 = pnand %p188, %p189
      %p191 = pneg %p190
      // Predicated region
      $region9: #{birnn_forward.1} parent=5 // pred_check
        _
      $region10: #{birnn_forward.1} parent=5 // pred_check_branch
        %193 = sbr.rel (%p190) target = $region12
      $region11: #{birnn_forward.1} parent=5 // pred_region
        %s194 = ssub.s32 %s18, 1
        // Predicated region
        $region13: #{birnn_forward.1} parent=11 // pred_check
          %p195 = pneg %p39
        $region14: #{birnn_forward.1} parent=11 // pred_check_branch
          %197 = sbr.rel (%p195) target = $region16
        $region15: #{birnn_forward.1} parent=11 // pred_region
          _
        $region16: #{birnn_forward.1} parent=11 // pred_fallthru
          _
        // Predicated region
        $region17: #{birnn_forward.1} parent=11 // pred_check
          %p198 = pneg %p138
        $region18: #{birnn_forward.1} parent=11 // pred_check_branch
          %200 = sbr.rel (%p198) target = $region20
        $region19: #{birnn_forward.1} parent=11 // pred_region
          _
        $region20: #{birnn_forward.1} parent=11 // pred_fallthru
          _
        // Predicated region
        $region21: #{birnn_forward.1} parent=11 // pred_check
          %p201 = pneg %p159
        $region22: #{birnn_forward.1} parent=11 // pred_check_branch
          %203 = sbr.rel (%p201) target = $region24
        $region23: #{birnn_forward.1} parent=11 // pred_region
          _
        $region24: #{birnn_forward.1} parent=11 // pred_fallthru
          _
      $region12: #{birnn_forward.1} parent=5 // pred_fallthru
        _
      %p204 = scmp.lt.s32.totalorder %s18, 2
      // Predicated region
      $region25: #{birnn_forward.1} parent=5 // pred_check
        %p205 = pneg %p204
      $region26: #{birnn_forward.1} parent=5 // pred_check_branch
        %207 = sbr.rel (%p205) target = $region28
      $region27: #{birnn_forward.1} parent=5 // pred_region
        // Predicated region
        $region29: #{birnn_forward.1} parent=27 // pred_check
          %p208 = pneg %p59
        $region30: #{birnn_forward.1} parent=27 // pred_check_branch
          %210 = sbr.rel (%p208) target = $region32
        $region31: #{birnn_forward.1} parent=27 // pred_region
          %s211 = sand.u32 %s49, 1
          %s212 = scalar_lea.sflag [#allocation5], %s211
          %s213 = sand.u32 %s49, 1
          %s214 = smul.addr %s213, 1024
          %s215 = scalar_lea.vmem [#allocation4], %s214
          %s217 = ssub.s32 16384, 16384
          %218 = vsyncadd %s212, %s217
          %s219 = smul.addr %s18, 256
          %s220 = smul.addr %s219, 64
          %s221 = scalar_lea.hbm %s1, %s220
          %s222 = sshll.u32 %s215, 4
          %s223 = int_to_ptr.vmem [resolvable:$true] %s222
          %228 = dma.hbm_to_vmem [thread:$0]  %s221, 16384, %s223, %s212, 512, 512, 32
        $region32: #{birnn_forward.1} parent=27 // pred_fallthru
          _
        // Predicated region
        $region33: #{birnn_forward.1} parent=27 // pred_check
          %p229 = pneg %p85
        $region34: #{birnn_forward.1} parent=27 // pred_check_branch
          %231 = sbr.rel (%p229) target = $region36
        $region35: #{birnn_forward.1} parent=27 // pred_region
          %s232 = sand.u32 %s75, 1
          %s233 = scalar_lea.sflag [#allocation7], %s232
          %s234 = sand.u32 %s75, 1
          %s235 = smul.addr %s234, 512
          %s236 = scalar_lea.vmem [#allocation6], %s235
          %s238 = ssub.s32 8192, 8192
          %239 = vsyncadd %s233, %s238
          %s240 = smul.addr %s18, 128
          %s241 = smul.addr %s240, 64
          %s242 = scalar_lea.hbm %s2, %s241
          %s243 = sshll.u32 %s236, 4
          %s244 = int_to_ptr.vmem [resolvable:$true] %s243
          %249 = dma.hbm_to_vmem [thread:$0]  %s242, 8192, %s244, %s233, 256, 256, 16
        $region36: #{birnn_forward.1} parent=27 // pred_fallthru
          _
        // Predicated region
        $region37: #{birnn_forward.1} parent=27 // pred_check
          %p250 = pneg %p111
        $region38: #{birnn_forward.1} parent=27 // pred_check_branch
          %252 = sbr.rel (%p250) target = $region40
        $region39: #{birnn_forward.1} parent=27 // pred_region
          %p253 = scmp.lt.s32.totalorder %s18, 1
          %s254 = scalar_select %p253, %s18, 1
          %s255 = smul.addr %s254, 8
          %s256 = scalar_lea.vmem %s3, %s255
        $region40: #{birnn_forward.1} parent=27 // pred_fallthru
          _
      $region28: #{birnn_forward.1} parent=5 // pred_fallthru
        _
      %p257 = scmp.le.s32.totalorder 1, %s18
      %p258 = scmp.lt.s32.totalorder %s18, 3
      %p259 = pnand %p257, %p258
      %p260 = pneg %p259
      // Predicated region
      $region41: #{birnn_forward.1} parent=5 // pred_check
        _
      $region42: #{birnn_forward.1} parent=5 // pred_check_branch
        %262 = sbr.rel (%p259) target = $region44
      $region43: #{birnn_forward.1} parent=5 // pred_region
        %s263 = ssub.s32 %s18, 1
        %s264 = sand.u32 %s52, 1
        %s265 = scalar_lea.sflag [#allocation5], %s264
        %s266 = sand.u32 %s52, 1
        %s267 = smul.addr %s266, 1024
        %s268 = scalar_lea.vmem [#allocation4], %s267
        // Predicated region
        $region45: #{birnn_forward.1} parent=43 // pred_check
          %p269 = pneg %p65
        $region46: #{birnn_forward.1} parent=43 // pred_check_branch
          %271 = sbr.rel (%p269) target = $region48
        $region47: #{birnn_forward.1} parent=43 // pred_region
          %272 = dma.done %s265, 16384
        $region48: #{birnn_forward.1} parent=43 // pred_fallthru
          _
        %s273 = sand.u32 %s78, 1
        %s274 = scalar_lea.sflag [#allocation7], %s273
        %s275 = sand.u32 %s78, 1
        %s276 = smul.addr %s275, 512
        %s277 = scalar_lea.vmem [#allocation6], %s276
        // Predicated region
        $region49: #{birnn_forward.1} parent=43 // pred_check
          %p278 = pneg %p91
        $region50: #{birnn_forward.1} parent=43 // pred_check_branch
          %280 = sbr.rel (%p278) target = $region52
        $region51: #{birnn_forward.1} parent=43 // pred_region
          %281 = dma.done %s274, 8192
        $region52: #{birnn_forward.1} parent=43 // pred_fallthru
          _
        %p282 = pneg %p39
        %p283 = pneg %p36
        %s284 = sand.u32 %s52, 1
        %s285 = scalar_lea.sflag [#allocation5], %s284
        %s286 = sand.u32 %s52, 1
        %s287 = smul.addr %s286, 1024
        %s288 = scalar_lea.vmem [#allocation4], %s287
        %p289 = pneg %p65
        %p290 = pneg %p62
        %s291 = sand.u32 %s78, 1
        %s292 = scalar_lea.sflag [#allocation7], %s291
        %s293 = sand.u32 %s78, 1
        %s294 = smul.addr %s293, 512
        %s295 = scalar_lea.vmem [#allocation6], %s294
        %p296 = pneg %p91
        %p297 = pneg %p88
        %p298 = scmp.lt.s32.totalorder %s23, 1
        %s299 = scalar_select %p298, %s23, 1
        %s300 = smul.addr %s299, 8
        %s301 = scalar_lea.vmem %s3, %s300
        %p302 = pneg %p117
        %p303 = pneg %p114
        %p304 = pneg %p138
        %p305 = pneg %p135
        %p306 = pneg %p159
        %p307 = pneg %p156
        %p308 = pneg %p180
        %p309 = pneg %p177
        %p310 = scmp.lt.s32.totalorder %s23, 1
        %s311 = scalar_select %p310, %s23, 1
        %s312 = smul.addr %s311, 8
        %s313 = scalar_lea.vmem %s3, %s312
        %p315 = scmp.eq.s32.totalorder %s23, 0
        // Predicated region
        $region53: #{birnn_forward.1} parent=43 // pred_check
          %p316 = pneg %p315
        $region54: #{birnn_forward.1} parent=43 // pred_check_branch
          %318 = sbr.rel (%p316) target = $region56
        $region55: #{birnn_forward.1} parent=43 // pred_region
          %v319 = vld [vmem:[%s0] sm:$0xff]
          %v320 = vld [vmem:[%s0 + $0x8] sm:$0xff]
          %v321 = vld [vmem:[%s0 + $0x10] sm:$0xff]
          %v322 = vld [vmem:[%s0 + $0x18] sm:$0xff]
          %v323 = vld [vmem:[%s0 + $0x20] sm:$0xff]
          %v324 = vld [vmem:[%s0 + $0x28] sm:$0xff]
          %v325 = vld [vmem:[%s0 + $0x30] sm:$0xff]
          %v326 = vld [vmem:[%s0 + $0x38] sm:$0xff]
          %v327 = vld [vmem:[%s0 + $0x40] sm:$0xff]
          %v328 = vld [vmem:[%s0 + $0x48] sm:$0xff]
          %v329 = vld [vmem:[%s0 + $0x50] sm:$0xff]
          %v330 = vld [vmem:[%s0 + $0x58] sm:$0xff]
          %v331 = vld [vmem:[%s0 + $0x60] sm:$0xff]
          %v332 = vld [vmem:[%s0 + $0x68] sm:$0xff]
          %v333 = vld [vmem:[%s0 + $0x70] sm:$0xff]
          %v334 = vld [vmem:[%s0 + $0x78] sm:$0xff]
          %335 = vst [vmem:[#allocation2] sm:$0xff] %v319
          %336 = vst [vmem:[#allocation2 + $0x8] sm:$0xff] %v320
          %337 = vst [vmem:[#allocation2 + $0x10] sm:$0xff] %v321
          %338 = vst [vmem:[#allocation2 + $0x18] sm:$0xff] %v322
          %339 = vst [vmem:[#allocation2 + $0x20] sm:$0xff] %v323
          %340 = vst [vmem:[#allocation2 + $0x28] sm:$0xff] %v324
          %341 = vst [vmem:[#allocation2 + $0x30] sm:$0xff] %v325
          %342 = vst [vmem:[#allocation2 + $0x38] sm:$0xff] %v326
          %343 = vst [vmem:[#allocation2 + $0x40] sm:$0xff] %v327
          %344 = vst [vmem:[#allocation2 + $0x48] sm:$0xff] %v328
          %345 = vst [vmem:[#allocation2 + $0x50] sm:$0xff] %v329
          %346 = vst [vmem:[#allocation2 + $0x58] sm:$0xff] %v330
          %347 = vst [vmem:[#allocation2 + $0x60] sm:$0xff] %v331
          %348 = vst [vmem:[#allocation2 + $0x68] sm:$0xff] %v332
          %349 = vst [vmem:[#allocation2 + $0x70] sm:$0xff] %v333
          %350 = vst [vmem:[#allocation2 + $0x78] sm:$0xff] %v334
        $region56: #{birnn_forward.1} parent=43 // pred_fallthru
          _
        %v351 = vld [vmem:[#allocation2] sm:$0xff]
        %v352 = vld [vmem:[#allocation2 + $0x8] sm:$0xff]
        %v353 = vld [vmem:[#allocation2 + $0x10] sm:$0xff]
        %v354 = vld [vmem:[#allocation2 + $0x18] sm:$0xff]
        %v355 = vld [vmem:[#allocation2 + $0x20] sm:$0xff]
        %v356 = vld [vmem:[#allocation2 + $0x28] sm:$0xff]
        %v357 = vld [vmem:[#allocation2 + $0x30] sm:$0xff]
        %v358 = vld [vmem:[#allocation2 + $0x38] sm:$0xff]
        %v359 = vld [vmem:[#allocation2 + $0x40] sm:$0xff]
        %v360 = vld [vmem:[#allocation2 + $0x48] sm:$0xff]
        %v361 = vld [vmem:[#allocation2 + $0x50] sm:$0xff]
        %v362 = vld [vmem:[#allocation2 + $0x58] sm:$0xff]
        %v363 = vld [vmem:[#allocation2 + $0x60] sm:$0xff]
        %v364 = vld [vmem:[#allocation2 + $0x68] sm:$0xff]
        %v365 = vld [vmem:[#allocation2 + $0x70] sm:$0xff]
        %v366 = vld [vmem:[#allocation2 + $0x78] sm:$0xff]
        %v367 = vpack.c.bf16 %v353, %v351
        %v368 = vpack.c.bf16 %v354, %v352
        %v369 = vpack.c.bf16 %v357, %v355
        %v370 = vpack.c.bf16 %v358, %v356
        %v371 = vpack.c.bf16 %v361, %v359
        %v372 = vpack.c.bf16 %v362, %v360
        %v373 = vpack.c.bf16 %v365, %v363
        %v374 = vpack.c.bf16 %v366, %v364
        %v375 = vld [vmem:[%s268] sm:$0xff]
        %v376 = vld [vmem:[%s268 + $0x8] sm:$0xff]
        %v377 = vld [vmem:[%s268 + $0x10] sm:$0xff]
        %v378 = vld [vmem:[%s268 + $0x18] sm:$0xff]
        %v379 = vld [vmem:[%s268 + $0x20] sm:$0xff]
        %v380 = vld [vmem:[%s268 + $0x28] sm:$0xff]
        %v381 = vld [vmem:[%s268 + $0x30] sm:$0xff]
        %v382 = vld [vmem:[%s268 + $0x38] sm:$0xff]
        %v383 = vld [vmem:[%s268 + $0x40] sm:$0xff]
        %v384 = vld [vmem:[%s268 + $0x48] sm:$0xff]
        %v385 = vld [vmem:[%s268 + $0x50] sm:$0xff]
        %v386 = vld [vmem:[%s268 + $0x58] sm:$0xff]
        %v387 = vld [vmem:[%s268 + $0x60] sm:$0xff]
        %v388 = vld [vmem:[%s268 + $0x68] sm:$0xff]
        %v389 = vld [vmem:[%s268 + $0x70] sm:$0xff]
        %v390 = vld [vmem:[%s268 + $0x78] sm:$0xff]
        %v391 = vld [vmem:[%s268 + $0x80] sm:$0xff]
        %v392 = vld [vmem:[%s268 + $0x88] sm:$0xff]
        %v393 = vld [vmem:[%s268 + $0x90] sm:$0xff]
        %v394 = vld [vmem:[%s268 + $0x98] sm:$0xff]
        %v395 = vld [vmem:[%s268 + $0xa0] sm:$0xff]
        %v396 = vld [vmem:[%s268 + $0xa8] sm:$0xff]
        %v397 = vld [vmem:[%s268 + $0xb0] sm:$0xff]
        %v398 = vld [vmem:[%s268 + $0xb8] sm:$0xff]
        %v399 = vld [vmem:[%s268 + $0xc0] sm:$0xff]
        %v400 = vld [vmem:[%s268 + $0xc8] sm:$0xff]
        %v401 = vld [vmem:[%s268 + $0xd0] sm:$0xff]
        %v402 = vld [vmem:[%s268 + $0xd8] sm:$0xff]
        %v403 = vld [vmem:[%s268 + $0xe0] sm:$0xff]
        %v404 = vld [vmem:[%s268 + $0xe8] sm:$0xff]
        %v405 = vld [vmem:[%s268 + $0xf0] sm:$0xff]
        %v406 = vld [vmem:[%s268 + $0xf8] sm:$0xff]
        %v407 = vld [vmem:[%s268 + $0x100] sm:$0xff]
        %v408 = vld [vmem:[%s268 + $0x108] sm:$0xff]
        %v409 = vld [vmem:[%s268 + $0x110] sm:$0xff]
        %v410 = vld [vmem:[%s268 + $0x118] sm:$0xff]
        %v411 = vld [vmem:[%s268 + $0x120] sm:$0xff]
        %v412 = vld [vmem:[%s268 + $0x128] sm:$0xff]
        %v413 = vld [vmem:[%s268 + $0x130] sm:$0xff]
        %v414 = vld [vmem:[%s268 + $0x138] sm:$0xff]
        %v415 = vld [vmem:[%s268 + $0x140] sm:$0xff]
        %v416 = vld [vmem:[%s268 + $0x148] sm:$0xff]
        %v417 = vld [vmem:[%s268 + $0x150] sm:$0xff]
        %v418 = vld [vmem:[%s268 + $0x158] sm:$0xff]
        %v419 = vld [vmem:[%s268 + $0x160] sm:$0xff]
        %v420 = vld [vmem:[%s268 + $0x168] sm:$0xff]
        %v421 = vld [vmem:[%s268 + $0x170] sm:$0xff]
        %v422 = vld [vmem:[%s268 + $0x178] sm:$0xff]
        %v423 = vld [vmem:[%s268 + $0x180] sm:$0xff]
        %v424 = vld [vmem:[%s268 + $0x188] sm:$0xff]
        %v425 = vld [vmem:[%s268 + $0x190] sm:$0xff]
        %v426 = vld [vmem:[%s268 + $0x198] sm:$0xff]
        %v427 = vld [vmem:[%s268 + $0x1a0] sm:$0xff]
        %v428 = vld [vmem:[%s268 + $0x1a8] sm:$0xff]
        %v429 = vld [vmem:[%s268 + $0x1b0] sm:$0xff]
        %v430 = vld [vmem:[%s268 + $0x1b8] sm:$0xff]
        %v431 = vld [vmem:[%s268 + $0x1c0] sm:$0xff]
        %v432 = vld [vmem:[%s268 + $0x1c8] sm:$0xff]
        %v433 = vld [vmem:[%s268 + $0x1d0] sm:$0xff]
        %v434 = vld [vmem:[%s268 + $0x1d8] sm:$0xff]
        %v435 = vld [vmem:[%s268 + $0x1e0] sm:$0xff]
        %v436 = vld [vmem:[%s268 + $0x1e8] sm:$0xff]
        %v437 = vld [vmem:[%s268 + $0x1f0] sm:$0xff]
        %v438 = vld [vmem:[%s268 + $0x1f8] sm:$0xff]
        %v439 = vld [vmem:[%s268 + $0x200] sm:$0xff]
        %v440 = vld [vmem:[%s268 + $0x208] sm:$0xff]
        %v441 = vld [vmem:[%s268 + $0x210] sm:$0xff]
        %v442 = vld [vmem:[%s268 + $0x218] sm:$0xff]
        %v443 = vld [vmem:[%s268 + $0x220] sm:$0xff]
        %v444 = vld [vmem:[%s268 + $0x228] sm:$0xff]
        %v445 = vld [vmem:[%s268 + $0x230] sm:$0xff]
        %v446 = vld [vmem:[%s268 + $0x238] sm:$0xff]
        %v447 = vld [vmem:[%s268 + $0x240] sm:$0xff]
        %v448 = vld [vmem:[%s268 + $0x248] sm:$0xff]
        %v449 = vld [vmem:[%s268 + $0x250] sm:$0xff]
        %v450 = vld [vmem:[%s268 + $0x258] sm:$0xff]
        %v451 = vld [vmem:[%s268 + $0x260] sm:$0xff]
        %v452 = vld [vmem:[%s268 + $0x268] sm:$0xff]
        %v453 = vld [vmem:[%s268 + $0x270] sm:$0xff]
        %v454 = vld [vmem:[%s268 + $0x278] sm:$0xff]
        %v455 = vld [vmem:[%s268 + $0x280] sm:$0xff]
        %v456 = vld [vmem:[%s268 + $0x288] sm:$0xff]
        %v457 = vld [vmem:[%s268 + $0x290] sm:$0xff]
        %v458 = vld [vmem:[%s268 + $0x298] sm:$0xff]
        %v459 = vld [vmem:[%s268 + $0x2a0] sm:$0xff]
        %v460 = vld [vmem:[%s268 + $0x2a8] sm:$0xff]
        %v461 = vld [vmem:[%s268 + $0x2b0] sm:$0xff]
        %v462 = vld [vmem:[%s268 + $0x2b8] sm:$0xff]
        %v463 = vld [vmem:[%s268 + $0x2c0] sm:$0xff]
        %v464 = vld [vmem:[%s268 + $0x2c8] sm:$0xff]
        %v465 = vld [vmem:[%s268 + $0x2d0] sm:$0xff]
        %v466 = vld [vmem:[%s268 + $0x2d8] sm:$0xff]
        %v467 = vld [vmem:[%s268 + $0x2e0] sm:$0xff]
        %v468 = vld [vmem:[%s268 + $0x2e8] sm:$0xff]
        %v469 = vld [vmem:[%s268 + $0x2f0] sm:$0xff]
        %v470 = vld [vmem:[%s268 + $0x2f8] sm:$0xff]
        %v471 = vld [vmem:[%s268 + $0x300] sm:$0xff]
        %v472 = vld [vmem:[%s268 + $0x308] sm:$0xff]
        %v473 = vld [vmem:[%s268 + $0x310] sm:$0xff]
        %v474 = vld [vmem:[%s268 + $0x318] sm:$0xff]
        %v475 = vld [vmem:[%s268 + $0x320] sm:$0xff]
        %v476 = vld [vmem:[%s268 + $0x328] sm:$0xff]
        %v477 = vld [vmem:[%s268 + $0x330] sm:$0xff]
        %v478 = vld [vmem:[%s268 + $0x338] sm:$0xff]
        %v479 = vld [vmem:[%s268 + $0x340] sm:$0xff]
        %v480 = vld [vmem:[%s268 + $0x348] sm:$0xff]
        %v481 = vld [vmem:[%s268 + $0x350] sm:$0xff]
        %v482 = vld [vmem:[%s268 + $0x358] sm:$0xff]
        %v483 = vld [vmem:[%s268 + $0x360] sm:$0xff]
        %v484 = vld [vmem:[%s268 + $0x368] sm:$0xff]
        %v485 = vld [vmem:[%s268 + $0x370] sm:$0xff]
        %v486 = vld [vmem:[%s268 + $0x378] sm:$0xff]
        %v487 = vld [vmem:[%s268 + $0x380] sm:$0xff]
        %v488 = vld [vmem:[%s268 + $0x388] sm:$0xff]
        %v489 = vld [vmem:[%s268 + $0x390] sm:$0xff]
        %v490 = vld [vmem:[%s268 + $0x398] sm:$0xff]
        %v491 = vld [vmem:[%s268 + $0x3a0] sm:$0xff]
        %v492 = vld [vmem:[%s268 + $0x3a8] sm:$0xff]
        %v493 = vld [vmem:[%s268 + $0x3b0] sm:$0xff]
        %v494 = vld [vmem:[%s268 + $0x3b8] sm:$0xff]
        %v495 = vld [vmem:[%s268 + $0x3c0] sm:$0xff]
        %v496 = vld [vmem:[%s268 + $0x3c8] sm:$0xff]
        %v497 = vld [vmem:[%s268 + $0x3d0] sm:$0xff]
        %v498 = vld [vmem:[%s268 + $0x3d8] sm:$0xff]
        %v499 = vld [vmem:[%s268 + $0x3e0] sm:$0xff]
        %v500 = vld [vmem:[%s268 + $0x3e8] sm:$0xff]
        %v501 = vld [vmem:[%s268 + $0x3f0] sm:$0xff]
        %v502 = vld [vmem:[%s268 + $0x3f8] sm:$0xff]
        %v503 = vld [vmem:[%s313] sm:$0xff]
        %v505 = vlaneseq
        %v506 = vshrl.u32 %v505, 7
        %v507 = vsub.s32 0, %v506
        %v508 = vrot.slane %v503, %v507
        %v509 = vlaneseq
        %v510 = vshrl.u32 %v509, 7
        %v511 = vsub.s32 1, %v510
        %v512 = vrot.slane %v503, %v511
        %v513 = vlaneseq
        %v514 = vshrl.u32 %v513, 7
        %v515 = vsub.s32 2, %v514
        %v516 = vrot.slane %v503, %v515
        %v517 = vlaneseq
        %v518 = vshrl.u32 %v517, 7
        %v519 = vsub.s32 3, %v518
        %v520 = vrot.slane %v503, %v519
        %v521 = vlaneseq
        %v522 = vshrl.u32 %v521, 7
        %v523 = vsub.s32 4, %v522
        %v524 = vrot.slane %v503, %v523
        %v525 = vlaneseq
        %v526 = vshrl.u32 %v525, 7
        %v527 = vsub.s32 5, %v526
        %v528 = vrot.slane %v503, %v527
        %v529 = vlaneseq
        %v530 = vshrl.u32 %v529, 7
        %v531 = vsub.s32 6, %v530
        %v532 = vrot.slane %v503, %v531
        %v533 = vlaneseq
        %v534 = vshrl.u32 %v533, 7
        %v535 = vsub.s32 7, %v534
        %v536 = vrot.slane %v503, %v535
        %v673 = vunpack.c.l.b16 %v375
        %v674 = vunpack.c.h.b16 %v375
        %v675 = vunpack.c.l.b16 %v376
        %v676 = vunpack.c.h.b16 %v376
        %v677 = vunpack.c.l.b16 %v377
        %v678 = vunpack.c.h.b16 %v377
        %v679 = vunpack.c.l.b16 %v378
        %v680 = vunpack.c.h.b16 %v378
        %v681 = vunpack.c.l.b16 %v379
        %v682 = vunpack.c.h.b16 %v379
        %v683 = vunpack.c.l.b16 %v380
        %v684 = vunpack.c.h.b16 %v380
        %v685 = vunpack.c.l.b16 %v381
        %v686 = vunpack.c.h.b16 %v381
        %v687 = vunpack.c.l.b16 %v382
        %v688 = vunpack.c.h.b16 %v382
        %v689 = vunpack.c.l.b16 %v383
        %v690 = vunpack.c.h.b16 %v383
        %v691 = vunpack.c.l.b16 %v384
        %v692 = vunpack.c.h.b16 %v384
        %v693 = vunpack.c.l.b16 %v385
        %v694 = vunpack.c.h.b16 %v385
        %v695 = vunpack.c.l.b16 %v386
        %v696 = vunpack.c.h.b16 %v386
        %v697 = vunpack.c.l.b16 %v387
        %v698 = vunpack.c.h.b16 %v387
        %v699 = vunpack.c.l.b16 %v388
        %v700 = vunpack.c.h.b16 %v388
        %v701 = vunpack.c.l.b16 %v389
        %v702 = vunpack.c.h.b16 %v389
        %v703 = vunpack.c.l.b16 %v390
        %v704 = vunpack.c.h.b16 %v390
        %v705 = vunpack.c.l.b16 %v391
        %v706 = vunpack.c.h.b16 %v391
        %v707 = vunpack.c.l.b16 %v392
        %v708 = vunpack.c.h.b16 %v392
        %v709 = vunpack.c.l.b16 %v393
        %v710 = vunpack.c.h.b16 %v393
        %v711 = vunpack.c.l.b16 %v394
        %v712 = vunpack.c.h.b16 %v394
        %v713 = vunpack.c.l.b16 %v395
        %v714 = vunpack.c.h.b16 %v395
        %v715 = vunpack.c.l.b16 %v396
        %v716 = vunpack.c.h.b16 %v396
        %v717 = vunpack.c.l.b16 %v397
        %v718 = vunpack.c.h.b16 %v397
        %v719 = vunpack.c.l.b16 %v398
        %v720 = vunpack.c.h.b16 %v398
        %v721 = vunpack.c.l.b16 %v399
        %v722 = vunpack.c.h.b16 %v399
        %v723 = vunpack.c.l.b16 %v400
        %v724 = vunpack.c.h.b16 %v400
        %v725 = vunpack.c.l.b16 %v401
        %v726 = vunpack.c.h.b16 %v401
        %v727 = vunpack.c.l.b16 %v402
        %v728 = vunpack.c.h.b16 %v402
        %v729 = vunpack.c.l.b16 %v403
        %v730 = vunpack.c.h.b16 %v403
        %v731 = vunpack.c.l.b16 %v404
        %v732 = vunpack.c.h.b16 %v404
        %v733 = vunpack.c.l.b16 %v405
        %v734 = vunpack.c.h.b16 %v405
        %v735 = vunpack.c.l.b16 %v406
        %v736 = vunpack.c.h.b16 %v406
        %v737 = vunpack.c.l.b16 %v407
        %v738 = vunpack.c.h.b16 %v407
        %v739 = vunpack.c.l.b16 %v408
        %v740 = vunpack.c.h.b16 %v408
        %v741 = vunpack.c.l.b16 %v409
        %v742 = vunpack.c.h.b16 %v409
        %v743 = vunpack.c.l.b16 %v410
        %v744 = vunpack.c.h.b16 %v410
        %v745 = vunpack.c.l.b16 %v411
        %v746 = vunpack.c.h.b16 %v411
        %v747 = vunpack.c.l.b16 %v412
        %v748 = vunpack.c.h.b16 %v412
        %v749 = vunpack.c.l.b16 %v413
        %v750 = vunpack.c.h.b16 %v413
        %v751 = vunpack.c.l.b16 %v414
        %v752 = vunpack.c.h.b16 %v414
        %v753 = vunpack.c.l.b16 %v415
        %v754 = vunpack.c.h.b16 %v415
        %v755 = vunpack.c.l.b16 %v416
        %v756 = vunpack.c.h.b16 %v416
        %v757 = vunpack.c.l.b16 %v417
        %v758 = vunpack.c.h.b16 %v417
        %v759 = vunpack.c.l.b16 %v418
        %v760 = vunpack.c.h.b16 %v418
        %v761 = vunpack.c.l.b16 %v419
        %v762 = vunpack.c.h.b16 %v419
        %v763 = vunpack.c.l.b16 %v420
        %v764 = vunpack.c.h.b16 %v420
        %v765 = vunpack.c.l.b16 %v421
        %v766 = vunpack.c.h.b16 %v421
        %v767 = vunpack.c.l.b16 %v422
        %v768 = vunpack.c.h.b16 %v422
        %v769 = vunpack.c.l.b16 %v423
        %v770 = vunpack.c.h.b16 %v423
        %v771 = vunpack.c.l.b16 %v424
        %v772 = vunpack.c.h.b16 %v424
        %v773 = vunpack.c.l.b16 %v425
        %v774 = vunpack.c.h.b16 %v425
        %v775 = vunpack.c.l.b16 %v426
        %v776 = vunpack.c.h.b16 %v426
        %v777 = vunpack.c.l.b16 %v427
        %v778 = vunpack.c.h.b16 %v427
        %v779 = vunpack.c.l.b16 %v428
        %v780 = vunpack.c.h.b16 %v428
        %v781 = vunpack.c.l.b16 %v429
        %v782 = vunpack.c.h.b16 %v429
        %v783 = vunpack.c.l.b16 %v430
        %v784 = vunpack.c.h.b16 %v430
        %v785 = vunpack.c.l.b16 %v431
        %v786 = vunpack.c.h.b16 %v431
        %v787 = vunpack.c.l.b16 %v432
        %v788 = vunpack.c.h.b16 %v432
        %v789 = vunpack.c.l.b16 %v433
        %v790 = vunpack.c.h.b16 %v433
        %v791 = vunpack.c.l.b16 %v434
        %v792 = vunpack.c.h.b16 %v434
        %v793 = vunpack.c.l.b16 %v435
        %v794 = vunpack.c.h.b16 %v435
        %v795 = vunpack.c.l.b16 %v436
        %v796 = vunpack.c.h.b16 %v436
        %v797 = vunpack.c.l.b16 %v437
        %v798 = vunpack.c.h.b16 %v437
        %v799 = vunpack.c.l.b16 %v438
        %v800 = vunpack.c.h.b16 %v438
        %v801 = vunpack.c.l.b16 %v439
        %v802 = vunpack.c.h.b16 %v439
        %v803 = vunpack.c.l.b16 %v440
        %v804 = vunpack.c.h.b16 %v440
        %v805 = vunpack.c.l.b16 %v441
        %v806 = vunpack.c.h.b16 %v441
        %v807 = vunpack.c.l.b16 %v442
        %v808 = vunpack.c.h.b16 %v442
        %v809 = vunpack.c.l.b16 %v443
        %v810 = vunpack.c.h.b16 %v443
        %v811 = vunpack.c.l.b16 %v444
        %v812 = vunpack.c.h.b16 %v444
        %v813 = vunpack.c.l.b16 %v445
        %v814 = vunpack.c.h.b16 %v445
        %v815 = vunpack.c.l.b16 %v446
        %v816 = vunpack.c.h.b16 %v446
        %v817 = vunpack.c.l.b16 %v447
        %v818 = vunpack.c.h.b16 %v447
        %v819 = vunpack.c.l.b16 %v448
        %v820 = vunpack.c.h.b16 %v448
        %v821 = vunpack.c.l.b16 %v449
        %v822 = vunpack.c.h.b16 %v449
        %v823 = vunpack.c.l.b16 %v450
        %v824 = vunpack.c.h.b16 %v450
        %v825 = vunpack.c.l.b16 %v451
        %v826 = vunpack.c.h.b16 %v451
        %v827 = vunpack.c.l.b16 %v452
        %v828 = vunpack.c.h.b16 %v452
        %v829 = vunpack.c.l.b16 %v453
        %v830 = vunpack.c.h.b16 %v453
        %v831 = vunpack.c.l.b16 %v454
        %v832 = vunpack.c.h.b16 %v454
        %v833 = vunpack.c.l.b16 %v455
        %v834 = vunpack.c.h.b16 %v455
        %v835 = vunpack.c.l.b16 %v456
        %v836 = vunpack.c.h.b16 %v456
        %v837 = vunpack.c.l.b16 %v457
        %v838 = vunpack.c.h.b16 %v457
        %v839 = vunpack.c.l.b16 %v458
        %v840 = vunpack.c.h.b16 %v458
        %v841 = vunpack.c.l.b16 %v459
        %v842 = vunpack.c.h.b16 %v459
        %v843 = vunpack.c.l.b16 %v460
        %v844 = vunpack.c.h.b16 %v460
        %v845 = vunpack.c.l.b16 %v461
        %v846 = vunpack.c.h.b16 %v461
        %v847 = vunpack.c.l.b16 %v462
        %v848 = vunpack.c.h.b16 %v462
        %v849 = vunpack.c.l.b16 %v463
        %v850 = vunpack.c.h.b16 %v463
        %v851 = vunpack.c.l.b16 %v464
        %v852 = vunpack.c.h.b16 %v464
        %v853 = vunpack.c.l.b16 %v465
        %v854 = vunpack.c.h.b16 %v465
        %v855 = vunpack.c.l.b16 %v466
        %v856 = vunpack.c.h.b16 %v466
        %v857 = vunpack.c.l.b16 %v467
        %v858 = vunpack.c.h.b16 %v467
        %v859 = vunpack.c.l.b16 %v468
        %v860 = vunpack.c.h.b16 %v468
        %v861 = vunpack.c.l.b16 %v469
        %v862 = vunpack.c.h.b16 %v469
        %v863 = vunpack.c.l.b16 %v470
        %v864 = vunpack.c.h.b16 %v470
        %v865 = vunpack.c.l.b16 %v471
        %v866 = vunpack.c.h.b16 %v471
        %v867 = vunpack.c.l.b16 %v472
        %v868 = vunpack.c.h.b16 %v472
        %v869 = vunpack.c.l.b16 %v473
        %v870 = vunpack.c.h.b16 %v473
        %v871 = vunpack.c.l.b16 %v474
        %v872 = vunpack.c.h.b16 %v474
        %v873 = vunpack.c.l.b16 %v475
        %v874 = vunpack.c.h.b16 %v475
        %v875 = vunpack.c.l.b16 %v476
        %v876 = vunpack.c.h.b16 %v476
        %v877 = vunpack.c.l.b16 %v477
        %v878 = vunpack.c.h.b16 %v477
        %v879 = vunpack.c.l.b16 %v478
        %v880 = vunpack.c.h.b16 %v478
        %v881 = vunpack.c.l.b16 %v479
        %v882 = vunpack.c.h.b16 %v479
        %v883 = vunpack.c.l.b16 %v480
        %v884 = vunpack.c.h.b16 %v480
        %v885 = vunpack.c.l.b16 %v481
        %v886 = vunpack.c.h.b16 %v481
        %v887 = vunpack.c.l.b16 %v482
        %v888 = vunpack.c.h.b16 %v482
        %v889 = vunpack.c.l.b16 %v483
        %v890 = vunpack.c.h.b16 %v483
        %v891 = vunpack.c.l.b16 %v484
        %v892 = vunpack.c.h.b16 %v484
        %v893 = vunpack.c.l.b16 %v485
        %v894 = vunpack.c.h.b16 %v485
        %v895 = vunpack.c.l.b16 %v486
        %v896 = vunpack.c.h.b16 %v486
        %v897 = vunpack.c.l.b16 %v487
        %v898 = vunpack.c.h.b16 %v487
        %v899 = vunpack.c.l.b16 %v488
        %v900 = vunpack.c.h.b16 %v488
        %v901 = vunpack.c.l.b16 %v489
        %v902 = vunpack.c.h.b16 %v489
        %v903 = vunpack.c.l.b16 %v490
        %v904 = vunpack.c.h.b16 %v490
        %v905 = vunpack.c.l.b16 %v491
        %v906 = vunpack.c.h.b16 %v491
        %v907 = vunpack.c.l.b16 %v492
        %v908 = vunpack.c.h.b16 %v492
        %v909 = vunpack.c.l.b16 %v493
        %v910 = vunpack.c.h.b16 %v493
        %v911 = vunpack.c.l.b16 %v494
        %v912 = vunpack.c.h.b16 %v494
        %v913 = vunpack.c.l.b16 %v495
        %v914 = vunpack.c.h.b16 %v495
        %v915 = vunpack.c.l.b16 %v496
        %v916 = vunpack.c.h.b16 %v496
        %v917 = vunpack.c.l.b16 %v497
        %v918 = vunpack.c.h.b16 %v497
        %v919 = vunpack.c.l.b16 %v498
        %v920 = vunpack.c.h.b16 %v498
        %v921 = vunpack.c.l.b16 %v499
        %v922 = vunpack.c.h.b16 %v499
        %v923 = vunpack.c.l.b16 %v500
        %v924 = vunpack.c.h.b16 %v500
        %v925 = vunpack.c.l.b16 %v501
        %v926 = vunpack.c.h.b16 %v501
        %v927 = vunpack.c.l.b16 %v502
        %v928 = vunpack.c.h.b16 %v502
        %v929 = vpack.c.b16 %v681, %v673
        %v930 = vpack.c.b16 %v682, %v674
        %v931 = vpack.c.b16 %v683, %v675
        %v932 = vpack.c.b16 %v684, %v676
        %v933 = vpack.c.b16 %v685, %v677
        %v934 = vpack.c.b16 %v686, %v678
        %v935 = vpack.c.b16 %v687, %v679
        %v936 = vpack.c.b16 %v688, %v680
        %v937 = vpack.c.b16 %v697, %v689
        %v938 = vpack.c.b16 %v698, %v690
        %v939 = vpack.c.b16 %v699, %v691
        %v940 = vpack.c.b16 %v700, %v692
        %v941 = vpack.c.b16 %v701, %v693
        %v942 = vpack.c.b16 %v702, %v694
        %v943 = vpack.c.b16 %v703, %v695
        %v944 = vpack.c.b16 %v704, %v696
        %v945 = vpack.c.b16 %v713, %v705
        %v946 = vpack.c.b16 %v714, %v706
        %v947 = vpack.c.b16 %v715, %v707
        %v948 = vpack.c.b16 %v716, %v708
        %v949 = vpack.c.b16 %v717, %v709
        %v950 = vpack.c.b16 %v718, %v710
        %v951 = vpack.c.b16 %v719, %v711
        %v952 = vpack.c.b16 %v720, %v712
        %v953 = vpack.c.b16 %v729, %v721
        %v954 = vpack.c.b16 %v730, %v722
        %v955 = vpack.c.b16 %v731, %v723
        %v956 = vpack.c.b16 %v732, %v724
        %v957 = vpack.c.b16 %v733, %v725
        %v958 = vpack.c.b16 %v734, %v726
        %v959 = vpack.c.b16 %v735, %v727
        %v960 = vpack.c.b16 %v736, %v728
        %v961 = vpack.c.b16 %v745, %v737
        %v962 = vpack.c.b16 %v746, %v738
        %v963 = vpack.c.b16 %v747, %v739
        %v964 = vpack.c.b16 %v748, %v740
        %v965 = vpack.c.b16 %v749, %v741
        %v966 = vpack.c.b16 %v750, %v742
        %v967 = vpack.c.b16 %v751, %v743
        %v968 = vpack.c.b16 %v752, %v744
        %v969 = vpack.c.b16 %v761, %v753
        %v970 = vpack.c.b16 %v762, %v754
        %v971 = vpack.c.b16 %v763, %v755
        %v972 = vpack.c.b16 %v764, %v756
        %v973 = vpack.c.b16 %v765, %v757
        %v974 = vpack.c.b16 %v766, %v758
        %v975 = vpack.c.b16 %v767, %v759
        %v976 = vpack.c.b16 %v768, %v760
        %v977 = vpack.c.b16 %v777, %v769
        %v978 = vpack.c.b16 %v778, %v770
        %v979 = vpack.c.b16 %v779, %v771
        %v980 = vpack.c.b16 %v780, %v772
        %v981 = vpack.c.b16 %v781, %v773
        %v982 = vpack.c.b16 %v782, %v774
        %v983 = vpack.c.b16 %v783, %v775
        %v984 = vpack.c.b16 %v784, %v776
        %v985 = vpack.c.b16 %v793, %v785
        %v986 = vpack.c.b16 %v794, %v786
        %v987 = vpack.c.b16 %v795, %v787
        %v988 = vpack.c.b16 %v796, %v788
        %v989 = vpack.c.b16 %v797, %v789
        %v990 = vpack.c.b16 %v798, %v790
        %v991 = vpack.c.b16 %v799, %v791
        %v992 = vpack.c.b16 %v800, %v792
        %v993 = vpack.c.b16 %v809, %v801
        %v994 = vpack.c.b16 %v810, %v802
        %v995 = vpack.c.b16 %v811, %v803
        %v996 = vpack.c.b16 %v812, %v804
        %v997 = vpack.c.b16 %v813, %v805
        %v998 = vpack.c.b16 %v814, %v806
        %v999 = vpack.c.b16 %v815, %v807
        %v1000 = vpack.c.b16 %v816, %v808
        %v1001 = vpack.c.b16 %v825, %v817
        %v1002 = vpack.c.b16 %v826, %v818
        %v1003 = vpack.c.b16 %v827, %v819
        %v1004 = vpack.c.b16 %v828, %v820
        %v1005 = vpack.c.b16 %v829, %v821
        %v1006 = vpack.c.b16 %v830, %v822
        %v1007 = vpack.c.b16 %v831, %v823
        %v1008 = vpack.c.b16 %v832, %v824
        %v1009 = vpack.c.b16 %v841, %v833
        %v1010 = vpack.c.b16 %v842, %v834
        %v1011 = vpack.c.b16 %v843, %v835
        %v1012 = vpack.c.b16 %v844, %v836
        %v1013 = vpack.c.b16 %v845, %v837
        %v1014 = vpack.c.b16 %v846, %v838
        %v1015 = vpack.c.b16 %v847, %v839
        %v1016 = vpack.c.b16 %v848, %v840
        %v1017 = vpack.c.b16 %v857, %v849
        %v1018 = vpack.c.b16 %v858, %v850
        %v1019 = vpack.c.b16 %v859, %v851
        %v1020 = vpack.c.b16 %v860, %v852
        %v1021 = vpack.c.b16 %v861, %v853
        %v1022 = vpack.c.b16 %v862, %v854
        %v1023 = vpack.c.b16 %v863, %v855
        %v1024 = vpack.c.b16 %v864, %v856
        %v1025 = vpack.c.b16 %v873, %v865
        %v1026 = vpack.c.b16 %v874, %v866
        %v1027 = vpack.c.b16 %v875, %v867
        %v1028 = vpack.c.b16 %v876, %v868
        %v1029 = vpack.c.b16 %v877, %v869
        %v1030 = vpack.c.b16 %v878, %v870
        %v1031 = vpack.c.b16 %v879, %v871
        %v1032 = vpack.c.b16 %v880, %v872
        %v1033 = vpack.c.b16 %v889, %v881
        %v1034 = vpack.c.b16 %v890, %v882
        %v1035 = vpack.c.b16 %v891, %v883
        %v1036 = vpack.c.b16 %v892, %v884
        %v1037 = vpack.c.b16 %v893, %v885
        %v1038 = vpack.c.b16 %v894, %v886
        %v1039 = vpack.c.b16 %v895, %v887
        %v1040 = vpack.c.b16 %v896, %v888
        %v1041 = vpack.c.b16 %v905, %v897
        %v1042 = vpack.c.b16 %v906, %v898
        %v1043 = vpack.c.b16 %v907, %v899
        %v1044 = vpack.c.b16 %v908, %v900
        %v1045 = vpack.c.b16 %v909, %v901
        %v1046 = vpack.c.b16 %v910, %v902
        %v1047 = vpack.c.b16 %v911, %v903
        %v1048 = vpack.c.b16 %v912, %v904
        %v1049 = vpack.c.b16 %v921, %v913
        %v1050 = vpack.c.b16 %v922, %v914
        %v1051 = vpack.c.b16 %v923, %v915
        %v1052 = vpack.c.b16 %v924, %v916
        %v1053 = vpack.c.b16 %v925, %v917
        %v1054 = vpack.c.b16 %v926, %v918
        %v1055 = vpack.c.b16 %v927, %v919
        %v1056 = vpack.c.b16 %v928, %v920
        %1185 = vmatprep.subr.bf16.mxu0 %v986
        %1186 = vmatpush1.bf16.msra.mxu0 %v985
        %1187 = vmatprep.subr.bf16.mxu0 %v978
        %1188 = vmatpush1.bf16.msra.mxu0 %v977
        %1189 = vmatprep.subr.bf16.mxu0 %v970
        %1190 = vmatpush1.bf16.msra.mxu0 %v969
        %1191 = vmatprep.subr.bf16.mxu0 %v962
        %1192 = vmatpush1.bf16.msra.mxu0 %v961
        %1193 = vmatprep.subr.bf16.mxu0 %v954
        %1194 = vmatpush1.bf16.msra.mxu0 %v953
        %1195 = vmatprep.subr.bf16.mxu0 %v946
        %1196 = vmatpush1.bf16.msra.mxu0 %v945
        %1197 = vmatprep.subr.bf16.mxu0 %v938
        %1198 = vmatpush1.bf16.msra.mxu0 %v937
        %1199 = vmatprep.subr.bf16.mxu0 %v930
        %1200 = vmatpush1.bf16.msra.mxu0 %v929
        %1201 = vmatprep.subr.bf16.mxu0 %v1050
        %1202 = vmatpush2.bf16.msra.mxu0 %v1049
        %1203 = vmatprep.subr.bf16.mxu0 %v1042
        %1204 = vmatpush2.bf16.msra.mxu0 %v1041
        %1205 = vmatprep.subr.bf16.mxu0 %v1034
        %1206 = vmatpush2.bf16.msra.mxu0 %v1033
        %1207 = vmatprep.subr.bf16.mxu0 %v1026
        %1208 = vmatpush2.bf16.msra.mxu0 %v1025
        %1209 = vmatprep.subr.bf16.mxu0 %v1018
        %1210 = vmatpush2.bf16.msra.mxu0 %v1017
        %1211 = vmatprep.subr.bf16.mxu0 %v1010
        %1212 = vmatpush2.bf16.msra.mxu0 %v1009
        %1213 = vmatprep.subr.bf16.mxu0 %v1002
        %1214 = vmatpush2.bf16.msra.mxu0 %v1001
        %1215 = vmatprep.subr.bf16.mxu0 %v994
        %1216 = vmatpush2.bf16.msra.mxu0 %v993
        %1217 = vmatprep.mubr.bf16.mxu0 %v368
        %1218 = vmatmul.mubr.bf16.gmra.mxu0 %v367
        %v1219 = vpop.f32.mrf.mxu0
        %v1220 = vadd.f32 %v508, %v1219
        %v1221 = vpop.f32.mrf.mxu0
        %v1222 = vadd.f32 %v512, %v1221
        %v1223 = vpop.f32.mrf.mxu0
        %v1224 = vadd.f32 %v508, %v1223
        %v1225 = vpop.f32.mrf.mxu0
        %v1226 = vadd.f32 %v512, %v1225
        %1227 = vmatprep.mubr.bf16.mxu0 %v370
        %1228 = vmatmul.mubr.bf16.gmra.mxu0 %v369
        %v1229 = vpop.f32.mrf.mxu0
        %v1230 = vadd.f32 %v508, %v1229
        %v1231 = vpop.f32.mrf.mxu0
        %v1232 = vadd.f32 %v512, %v1231
        %v1233 = vpop.f32.mrf.mxu0
        %v1234 = vadd.f32 %v508, %v1233
        %v1235 = vpop.f32.mrf.mxu0
        %v1236 = vadd.f32 %v512, %v1235
        %1237 = vmatprep.mubr.bf16.mxu0 %v372
        %1238 = vmatmul.mubr.bf16.gmra.mxu0 %v371
        %v1239 = vpop.f32.mrf.mxu0
        %v1240 = vadd.f32 %v508, %v1239
        %v1241 = vpop.f32.mrf.mxu0
        %v1242 = vadd.f32 %v512, %v1241
        %v1243 = vpop.f32.mrf.mxu0
        %v1244 = vadd.f32 %v508, %v1243
        %v1245 = vpop.f32.mrf.mxu0
        %v1246 = vadd.f32 %v512, %v1245
        %1247 = vmatprep.mubr.bf16.mxu0 %v374
        %1248 = vmatmul.mubr.bf16.gmra.mxu0 %v373
        %v1249 = vpop.f32.mrf.mxu0
        %v1250 = vadd.f32 %v508, %v1249
        %v1251 = vpop.f32.mrf.mxu0
        %v1252 = vadd.f32 %v512, %v1251
        %v1253 = vpop.f32.mrf.mxu0
        %v1254 = vadd.f32 %v508, %v1253
        %v1255 = vpop.f32.mrf.mxu0
        %v1256 = vadd.f32 %v512, %v1255
        %1257 = vdwg.mxu0
        %1258 = vmatprep.subr.bf16.mxu0 %v988
        %1259 = vmatpush1.bf16.msra.mxu0 %v987
        %1260 = vmatprep.subr.bf16.mxu0 %v980
        %1261 = vmatpush1.bf16.msra.mxu0 %v979
        %1262 = vmatprep.subr.bf16.mxu0 %v972
        %1263 = vmatpush1.bf16.msra.mxu0 %v971
        %1264 = vmatprep.subr.bf16.mxu0 %v964
        %1265 = vmatpush1.bf16.msra.mxu0 %v963
        %1266 = vmatprep.subr.bf16.mxu0 %v956
        %1267 = vmatpush1.bf16.msra.mxu0 %v955
        %1268 = vmatprep.subr.bf16.mxu0 %v948
        %1269 = vmatpush1.bf16.msra.mxu0 %v947
        %1270 = vmatprep.subr.bf16.mxu0 %v940
        %1271 = vmatpush1.bf16.msra.mxu0 %v939
        %1272 = vmatprep.subr.bf16.mxu0 %v932
        %1273 = vmatpush1.bf16.msra.mxu0 %v931
        %1274 = vmatprep.subr.bf16.mxu0 %v1052
        %1275 = vmatpush2.bf16.msra.mxu0 %v1051
        %1276 = vmatprep.subr.bf16.mxu0 %v1044
        %1277 = vmatpush2.bf16.msra.mxu0 %v1043
        %1278 = vmatprep.subr.bf16.mxu0 %v1036
        %1279 = vmatpush2.bf16.msra.mxu0 %v1035
        %1280 = vmatprep.subr.bf16.mxu0 %v1028
        %1281 = vmatpush2.bf16.msra.mxu0 %v1027
        %1282 = vmatprep.subr.bf16.mxu0 %v1020
        %1283 = vmatpush2.bf16.msra.mxu0 %v1019
        %1284 = vmatprep.subr.bf16.mxu0 %v1012
        %1285 = vmatpush2.bf16.msra.mxu0 %v1011
        %1286 = vmatprep.subr.bf16.mxu0 %v1004
        %1287 = vmatpush2.bf16.msra.mxu0 %v1003
        %1288 = vmatprep.subr.bf16.mxu0 %v996
        %1289 = vmatpush2.bf16.msra.mxu0 %v995
        %1290 = vmatprep.mubr.bf16.mxu0 %v368
        %1291 = vmatmul.mubr.bf16.gmra.mxu0 %v367
        %v1292 = vpop.f32.mrf.mxu0
        %v1293 = vadd.f32 %v516, %v1292
        %v1294 = vpop.f32.mrf.mxu0
        %v1295 = vadd.f32 %v520, %v1294
        %v1296 = vpop.f32.mrf.mxu0
        %v1297 = vadd.f32 %v516, %v1296
        %v1298 = vpop.f32.mrf.mxu0
        %v1299 = vadd.f32 %v520, %v1298
        %1300 = vmatprep.mubr.bf16.mxu0 %v370
        %1301 = vmatmul.mubr.bf16.gmra.mxu0 %v369
        %v1302 = vpop.f32.mrf.mxu0
        %v1303 = vadd.f32 %v516, %v1302
        %v1304 = vpop.f32.mrf.mxu0
        %v1305 = vadd.f32 %v520, %v1304
        %v1306 = vpop.f32.mrf.mxu0
        %v1307 = vadd.f32 %v516, %v1306
        %v1308 = vpop.f32.mrf.mxu0
        %v1309 = vadd.f32 %v520, %v1308
        %1310 = vmatprep.mubr.bf16.mxu0 %v372
        %1311 = vmatmul.mubr.bf16.gmra.mxu0 %v371
        %v1312 = vpop.f32.mrf.mxu0
        %v1313 = vadd.f32 %v516, %v1312
        %v1314 = vpop.f32.mrf.mxu0
        %v1315 = vadd.f32 %v520, %v1314
        %v1316 = vpop.f32.mrf.mxu0
        %v1317 = vadd.f32 %v516, %v1316
        %v1318 = vpop.f32.mrf.mxu0
        %v1319 = vadd.f32 %v520, %v1318
        %1320 = vmatprep.mubr.bf16.mxu0 %v374
        %1321 = vmatmul.mubr.bf16.gmra.mxu0 %v373
        %v1322 = vpop.f32.mrf.mxu0
        %v1323 = vadd.f32 %v516, %v1322
        %v1324 = vpop.f32.mrf.mxu0
        %v1325 = vadd.f32 %v520, %v1324
        %v1326 = vpop.f32.mrf.mxu0
        %v1327 = vadd.f32 %v516, %v1326
        %v1328 = vpop.f32.mrf.mxu0
        %v1329 = vadd.f32 %v520, %v1328
        %1330 = vdwg.mxu0
        %1331 = vmatprep.subr.bf16.mxu0 %v990
        %1332 = vmatpush1.bf16.msra.mxu0 %v989
        %1333 = vmatprep.subr.bf16.mxu0 %v982
        %1334 = vmatpush1.bf16.msra.mxu0 %v981
        %1335 = vmatprep.subr.bf16.mxu0 %v974
        %1336 = vmatpush1.bf16.msra.mxu0 %v973
        %1337 = vmatprep.subr.bf16.mxu0 %v966
        %1338 = vmatpush1.bf16.msra.mxu0 %v965
        %1339 = vmatprep.subr.bf16.mxu0 %v958
        %1340 = vmatpush1.bf16.msra.mxu0 %v957
        %1341 = vmatprep.subr.bf16.mxu0 %v950
        %1342 = vmatpush1.bf16.msra.mxu0 %v949
        %1343 = vmatprep.subr.bf16.mxu0 %v942
        %1344 = vmatpush1.bf16.msra.mxu0 %v941
        %1345 = vmatprep.subr.bf16.mxu0 %v934
        %1346 = vmatpush1.bf16.msra.mxu0 %v933
        %1347 = vmatprep.subr.bf16.mxu0 %v1054
        %1348 = vmatpush2.bf16.msra.mxu0 %v1053
        %1349 = vmatprep.subr.bf16.mxu0 %v1046
        %1350 = vmatpush2.bf16.msra.mxu0 %v1045
        %1351 = vmatprep.subr.bf16.mxu0 %v1038
        %1352 = vmatpush2.bf16.msra.mxu0 %v1037
        %1353 = vmatprep.subr.bf16.mxu0 %v1030
        %1354 = vmatpush2.bf16.msra.mxu0 %v1029
        %1355 = vmatprep.subr.bf16.mxu0 %v1022
        %1356 = vmatpush2.bf16.msra.mxu0 %v1021
        %1357 = vmatprep.subr.bf16.mxu0 %v1014
        %1358 = vmatpush2.bf16.msra.mxu0 %v1013
        %1359 = vmatprep.subr.bf16.mxu0 %v1006
        %1360 = vmatpush2.bf16.msra.mxu0 %v1005
        %1361 = vmatprep.subr.bf16.mxu0 %v998
        %1362 = vmatpush2.bf16.msra.mxu0 %v997
        %1363 = vmatprep.mubr.bf16.mxu0 %v368
        %1364 = vmatmul.mubr.bf16.gmra.mxu0 %v367
        %v1365 = vpop.f32.mrf.mxu0
        %v1366 = vadd.f32 %v524, %v1365
        %v1367 = vpop.f32.mrf.mxu0
        %v1368 = vadd.f32 %v528, %v1367
        %v1369 = vpop.f32.mrf.mxu0
        %v1370 = vadd.f32 %v524, %v1369
        %v1371 = vpop.f32.mrf.mxu0
        %v1372 = vadd.f32 %v528, %v1371
        %1373 = vmatprep.mubr.bf16.mxu0 %v370
        %1374 = vmatmul.mubr.bf16.gmra.mxu0 %v369
        %v1375 = vpop.f32.mrf.mxu0
        %v1376 = vadd.f32 %v524, %v1375
        %v1377 = vpop.f32.mrf.mxu0
        %v1378 = vadd.f32 %v528, %v1377
        %v1379 = vpop.f32.mrf.mxu0
        %v1380 = vadd.f32 %v524, %v1379
        %v1381 = vpop.f32.mrf.mxu0
        %v1382 = vadd.f32 %v528, %v1381
        %1383 = vmatprep.mubr.bf16.mxu0 %v372
        %1384 = vmatmul.mubr.bf16.gmra.mxu0 %v371
        %v1385 = vpop.f32.mrf.mxu0
        %v1386 = vadd.f32 %v524, %v1385
        %v1387 = vpop.f32.mrf.mxu0
        %v1388 = vadd.f32 %v528, %v1387
        %v1389 = vpop.f32.mrf.mxu0
        %v1390 = vadd.f32 %v524, %v1389
        %v1391 = vpop.f32.mrf.mxu0
        %v1392 = vadd.f32 %v528, %v1391
        %1393 = vmatprep.mubr.bf16.mxu0 %v374
        %1394 = vmatmul.mubr.bf16.gmra.mxu0 %v373
        %v1395 = vpop.f32.mrf.mxu0
        %v1396 = vadd.f32 %v524, %v1395
        %v1397 = vpop.f32.mrf.mxu0
        %v1398 = vadd.f32 %v528, %v1397
        %v1399 = vpop.f32.mrf.mxu0
        %v1400 = vadd.f32 %v524, %v1399
        %v1401 = vpop.f32.mrf.mxu0
        %v1402 = vadd.f32 %v528, %v1401
        %1403 = vdwg.mxu0
        %1404 = vmatprep.subr.bf16.mxu0 %v992
        %1405 = vmatpush1.bf16.msra.mxu0 %v991
        %1406 = vmatprep.subr.bf16.mxu0 %v984
        %1407 = vmatpush1.bf16.msra.mxu0 %v983
        %1408 = vmatprep.subr.bf16.mxu0 %v976
        %1409 = vmatpush1.bf16.msra.mxu0 %v975
        %1410 = vmatprep.subr.bf16.mxu0 %v968
        %1411 = vmatpush1.bf16.msra.mxu0 %v967
        %1412 = vmatprep.subr.bf16.mxu0 %v960
        %1413 = vmatpush1.bf16.msra.mxu0 %v959
        %1414 = vmatprep.subr.bf16.mxu0 %v952
        %1415 = vmatpush1.bf16.msra.mxu0 %v951
        %1416 = vmatprep.subr.bf16.mxu0 %v944
        %1417 = vmatpush1.bf16.msra.mxu0 %v943
        %1418 = vmatprep.subr.bf16.mxu0 %v936
        %1419 = vmatpush1.bf16.msra.mxu0 %v935
        %1420 = vmatprep.subr.bf16.mxu0 %v1056
        %1421 = vmatpush2.bf16.msra.mxu0 %v1055
        %1422 = vmatprep.subr.bf16.mxu0 %v1048
        %1423 = vmatpush2.bf16.msra.mxu0 %v1047
        %1424 = vmatprep.subr.bf16.mxu0 %v1040
        %1425 = vmatpush2.bf16.msra.mxu0 %v1039
        %1426 = vmatprep.subr.bf16.mxu0 %v1032
        %1427 = vmatpush2.bf16.msra.mxu0 %v1031
        %1428 = vmatprep.subr.bf16.mxu0 %v1024
        %1429 = vmatpush2.bf16.msra.mxu0 %v1023
        %1430 = vmatprep.subr.bf16.mxu0 %v1016
        %1431 = vmatpush2.bf16.msra.mxu0 %v1015
        %1432 = vmatprep.subr.bf16.mxu0 %v1008
        %1433 = vmatpush2.bf16.msra.mxu0 %v1007
        %1434 = vmatprep.subr.bf16.mxu0 %v1000
        %1435 = vmatpush2.bf16.msra.mxu0 %v999
        %1436 = vmatprep.mubr.bf16.mxu0 %v368
        %1437 = vmatmul.mubr.bf16.gmra.mxu0 %v367
        %v1438 = vpop.f32.mrf.mxu0
        %v1439 = vadd.f32 %v532, %v1438
        %v1440 = vpop.f32.mrf.mxu0
        %v1441 = vadd.f32 %v536, %v1440
        %v1442 = vpop.f32.mrf.mxu0
        %v1443 = vadd.f32 %v532, %v1442
        %v1444 = vpop.f32.mrf.mxu0
        %v1445 = vadd.f32 %v536, %v1444
        %1446 = vmatprep.mubr.bf16.mxu0 %v370
        %1447 = vmatmul.mubr.bf16.gmra.mxu0 %v369
        %v1448 = vpop.f32.mrf.mxu0
        %v1449 = vadd.f32 %v532, %v1448
        %v1450 = vpop.f32.mrf.mxu0
        %v1451 = vadd.f32 %v536, %v1450
        %v1452 = vpop.f32.mrf.mxu0
        %v1453 = vadd.f32 %v532, %v1452
        %v1454 = vpop.f32.mrf.mxu0
        %v1455 = vadd.f32 %v536, %v1454
        %1456 = vmatprep.mubr.bf16.mxu0 %v372
        %1457 = vmatmul.mubr.bf16.gmra.mxu0 %v371
        %v1458 = vpop.f32.mrf.mxu0
        %v1459 = vadd.f32 %v532, %v1458
        %v1460 = vpop.f32.mrf.mxu0
        %v1461 = vadd.f32 %v536, %v1460
        %v1462 = vpop.f32.mrf.mxu0
        %v1463 = vadd.f32 %v532, %v1462
        %v1464 = vpop.f32.mrf.mxu0
        %v1465 = vadd.f32 %v536, %v1464
        %1466 = vmatprep.mubr.bf16.mxu0 %v374
        %1467 = vmatmul.mubr.bf16.gmra.mxu0 %v373
        %v1468 = vpop.f32.mrf.mxu0
        %v1469 = vadd.f32 %v532, %v1468
        %v1470 = vpop.f32.mrf.mxu0
        %v1471 = vadd.f32 %v536, %v1470
        %v1472 = vpop.f32.mrf.mxu0
        %v1473 = vadd.f32 %v532, %v1472
        %v1474 = vpop.f32.mrf.mxu0
        %v1475 = vadd.f32 %v536, %v1474
        %1476 = vdwg.mxu0
        %1477 = vst [vmem:[#allocation3] sm:$0xff] %v1220
        %1478 = vst [vmem:[#allocation3 + $0x8] sm:$0xff] %v1222
        %1479 = vst [vmem:[#allocation3 + $0x10] sm:$0xff] %v1293
        %1480 = vst [vmem:[#allocation3 + $0x18] sm:$0xff] %v1295
        %1481 = vst [vmem:[#allocation3 + $0x20] sm:$0xff] %v1366
        %1482 = vst [vmem:[#allocation3 + $0x28] sm:$0xff] %v1368
        %1483 = vst [vmem:[#allocation3 + $0x30] sm:$0xff] %v1439
        %1484 = vst [vmem:[#allocation3 + $0x38] sm:$0xff] %v1441
        %1485 = vst [vmem:[#allocation3 + $0x40] sm:$0xff] %v1224
        %1486 = vst [vmem:[#allocation3 + $0x48] sm:$0xff] %v1226
        %1487 = vst [vmem:[#allocation3 + $0x50] sm:$0xff] %v1297
        %1488 = vst [vmem:[#allocation3 + $0x58] sm:$0xff] %v1299
        %1489 = vst [vmem:[#allocation3 + $0x60] sm:$0xff] %v1370
        %1490 = vst [vmem:[#allocation3 + $0x68] sm:$0xff] %v1372
        %1491 = vst [vmem:[#allocation3 + $0x70] sm:$0xff] %v1443
        %1492 = vst [vmem:[#allocation3 + $0x78] sm:$0xff] %v1445
        %1493 = vst [vmem:[#allocation3 + $0x80] sm:$0xff] %v1230
        %1494 = vst [vmem:[#allocation3 + $0x88] sm:$0xff] %v1232
        %1495 = vst [vmem:[#allocation3 + $0x90] sm:$0xff] %v1303
        %1496 = vst [vmem:[#allocation3 + $0x98] sm:$0xff] %v1305
        %1497 = vst [vmem:[#allocation3 + $0xa0] sm:$0xff] %v1376
        %1498 = vst [vmem:[#allocation3 + $0xa8] sm:$0xff] %v1378
        %1499 = vst [vmem:[#allocation3 + $0xb0] sm:$0xff] %v1449
        %1500 = vst [vmem:[#allocation3 + $0xb8] sm:$0xff] %v1451
        %1501 = vst [vmem:[#allocation3 + $0xc0] sm:$0xff] %v1234
        %1502 = vst [vmem:[#allocation3 + $0xc8] sm:$0xff] %v1236
        %1503 = vst [vmem:[#allocation3 + $0xd0] sm:$0xff] %v1307
        %1504 = vst [vmem:[#allocation3 + $0xd8] sm:$0xff] %v1309
        %1505 = vst [vmem:[#allocation3 + $0xe0] sm:$0xff] %v1380
        %1506 = vst [vmem:[#allocation3 + $0xe8] sm:$0xff] %v1382
        %1507 = vst [vmem:[#allocation3 + $0xf0] sm:$0xff] %v1453
        %1508 = vst [vmem:[#allocation3 + $0xf8] sm:$0xff] %v1455
        %1509 = vst [vmem:[#allocation3 + $0x100] sm:$0xff] %v1240
        %1510 = vst [vmem:[#allocation3 + $0x108] sm:$0xff] %v1242
        %1511 = vst [vmem:[#allocation3 + $0x110] sm:$0xff] %v1313
        %1512 = vst [vmem:[#allocation3 + $0x118] sm:$0xff] %v1315
        %1513 = vst [vmem:[#allocation3 + $0x120] sm:$0xff] %v1386
        %1514 = vst [vmem:[#allocation3 + $0x128] sm:$0xff] %v1388
        %1515 = vst [vmem:[#allocation3 + $0x130] sm:$0xff] %v1459
        %1516 = vst [vmem:[#allocation3 + $0x138] sm:$0xff] %v1461
        %1517 = vst [vmem:[#allocation3 + $0x140] sm:$0xff] %v1244
        %1518 = vst [vmem:[#allocation3 + $0x148] sm:$0xff] %v1246
        %1519 = vst [vmem:[#allocation3 + $0x150] sm:$0xff] %v1317
        %1520 = vst [vmem:[#allocation3 + $0x158] sm:$0xff] %v1319
        %1521 = vst [vmem:[#allocation3 + $0x160] sm:$0xff] %v1390
        %1522 = vst [vmem:[#allocation3 + $0x168] sm:$0xff] %v1392
        %1523 = vst [vmem:[#allocation3 + $0x170] sm:$0xff] %v1463
        %1524 = vst [vmem:[#allocation3 + $0x178] sm:$0xff] %v1465
        %1525 = vst [vmem:[#allocation3 + $0x180] sm:$0xff] %v1250
        %1526 = vst [vmem:[#allocation3 + $0x188] sm:$0xff] %v1252
        %1527 = vst [vmem:[#allocation3 + $0x190] sm:$0xff] %v1323
        %1528 = vst [vmem:[#allocation3 + $0x198] sm:$0xff] %v1325
        %1529 = vst [vmem:[#allocation3 + $0x1a0] sm:$0xff] %v1396
        %1530 = vst [vmem:[#allocation3 + $0x1a8] sm:$0xff] %v1398
        %1531 = vst [vmem:[#allocation3 + $0x1b0] sm:$0xff] %v1469
        %1532 = vst [vmem:[#allocation3 + $0x1b8] sm:$0xff] %v1471
        %1533 = vst [vmem:[#allocation3 + $0x1c0] sm:$0xff] %v1254
        %1534 = vst [vmem:[#allocation3 + $0x1c8] sm:$0xff] %v1256
        %1535 = vst [vmem:[#allocation3 + $0x1d0] sm:$0xff] %v1327
        %1536 = vst [vmem:[#allocation3 + $0x1d8] sm:$0xff] %v1329
        %1537 = vst [vmem:[#allocation3 + $0x1e0] sm:$0xff] %v1400
        %1538 = vst [vmem:[#allocation3 + $0x1e8] sm:$0xff] %v1402
        %1539 = vst [vmem:[#allocation3 + $0x1f0] sm:$0xff] %v1473
        %1540 = vst [vmem:[#allocation3 + $0x1f8] sm:$0xff] %v1475
        %v1541 = vld [vmem:[%s277] sm:$0xff]
        %v1542 = vld [vmem:[%s277 + $0x8] sm:$0xff]
        %v1543 = vld [vmem:[%s277 + $0x10] sm:$0xff]
        %v1544 = vld [vmem:[%s277 + $0x18] sm:$0xff]
        %v1545 = vld [vmem:[%s277 + $0x20] sm:$0xff]
        %v1546 = vld [vmem:[%s277 + $0x28] sm:$0xff]
        %v1547 = vld [vmem:[%s277 + $0x30] sm:$0xff]
        %v1548 = vld [vmem:[%s277 + $0x38] sm:$0xff]
        %v1549 = vld [vmem:[%s277 + $0x40] sm:$0xff]
        %v1550 = vld [vmem:[%s277 + $0x48] sm:$0xff]
        %v1551 = vld [vmem:[%s277 + $0x50] sm:$0xff]
        %v1552 = vld [vmem:[%s277 + $0x58] sm:$0xff]
        %v1553 = vld [vmem:[%s277 + $0x60] sm:$0xff]
        %v1554 = vld [vmem:[%s277 + $0x68] sm:$0xff]
        %v1555 = vld [vmem:[%s277 + $0x70] sm:$0xff]
        %v1556 = vld [vmem:[%s277 + $0x78] sm:$0xff]
        %v1557 = vld [vmem:[%s277 + $0x80] sm:$0xff]
        %v1558 = vld [vmem:[%s277 + $0x88] sm:$0xff]
        %v1559 = vld [vmem:[%s277 + $0x90] sm:$0xff]
        %v1560 = vld [vmem:[%s277 + $0x98] sm:$0xff]
        %v1561 = vld [vmem:[%s277 + $0xa0] sm:$0xff]
        %v1562 = vld [vmem:[%s277 + $0xa8] sm:$0xff]
        %v1563 = vld [vmem:[%s277 + $0xb0] sm:$0xff]
        %v1564 = vld [vmem:[%s277 + $0xb8] sm:$0xff]
        %v1565 = vld [vmem:[%s277 + $0xc0] sm:$0xff]
        %v1566 = vld [vmem:[%s277 + $0xc8] sm:$0xff]
        %v1567 = vld [vmem:[%s277 + $0xd0] sm:$0xff]
        %v1568 = vld [vmem:[%s277 + $0xd8] sm:$0xff]
        %v1569 = vld [vmem:[%s277 + $0xe0] sm:$0xff]
        %v1570 = vld [vmem:[%s277 + $0xe8] sm:$0xff]
        %v1571 = vld [vmem:[%s277 + $0xf0] sm:$0xff]
        %v1572 = vld [vmem:[%s277 + $0xf8] sm:$0xff]
        %s1573 = scalar_lea.vmem %s277, 256 [#allocation6]
        %v1574 = vld [vmem:[%s1573] sm:$0xff]
        %v1575 = vld [vmem:[%s1573 + $0x8] sm:$0xff]
        %v1576 = vld [vmem:[%s1573 + $0x10] sm:$0xff]
        %v1577 = vld [vmem:[%s1573 + $0x18] sm:$0xff]
        %v1578 = vld [vmem:[%s1573 + $0x20] sm:$0xff]
        %v1579 = vld [vmem:[%s1573 + $0x28] sm:$0xff]
        %v1580 = vld [vmem:[%s1573 + $0x30] sm:$0xff]
        %v1581 = vld [vmem:[%s1573 + $0x38] sm:$0xff]
        %v1582 = vld [vmem:[%s1573 + $0x40] sm:$0xff]
        %v1583 = vld [vmem:[%s1573 + $0x48] sm:$0xff]
        %v1584 = vld [vmem:[%s1573 + $0x50] sm:$0xff]
        %v1585 = vld [vmem:[%s1573 + $0x58] sm:$0xff]
        %v1586 = vld [vmem:[%s1573 + $0x60] sm:$0xff]
        %v1587 = vld [vmem:[%s1573 + $0x68] sm:$0xff]
        %v1588 = vld [vmem:[%s1573 + $0x70] sm:$0xff]
        %v1589 = vld [vmem:[%s1573 + $0x78] sm:$0xff]
        %v1590 = vld [vmem:[%s1573 + $0x80] sm:$0xff]
        %v1591 = vld [vmem:[%s1573 + $0x88] sm:$0xff]
        %v1592 = vld [vmem:[%s1573 + $0x90] sm:$0xff]
        %v1593 = vld [vmem:[%s1573 + $0x98] sm:$0xff]
        %v1594 = vld [vmem:[%s1573 + $0xa0] sm:$0xff]
        %v1595 = vld [vmem:[%s1573 + $0xa8] sm:$0xff]
        %v1596 = vld [vmem:[%s1573 + $0xb0] sm:$0xff]
        %v1597 = vld [vmem:[%s1573 + $0xb8] sm:$0xff]
        %v1598 = vld [vmem:[%s1573 + $0xc0] sm:$0xff]
        %v1599 = vld [vmem:[%s1573 + $0xc8] sm:$0xff]
        %v1600 = vld [vmem:[%s1573 + $0xd0] sm:$0xff]
        %v1601 = vld [vmem:[%s1573 + $0xd8] sm:$0xff]
        %v1602 = vld [vmem:[%s1573 + $0xe0] sm:$0xff]
        %v1603 = vld [vmem:[%s1573 + $0xe8] sm:$0xff]
        %v1604 = vld [vmem:[%s1573 + $0xf0] sm:$0xff]
        %v1605 = vld [vmem:[%s1573 + $0xf8] sm:$0xff]
        %v1638 = vunpack.c.l.b16 %v1541
        %v1639 = vunpack.c.h.b16 %v1541
        %v1640 = vunpack.c.l.b16 %v1542
        %v1641 = vunpack.c.h.b16 %v1542
        %v1642 = vunpack.c.l.b16 %v1543
        %v1643 = vunpack.c.h.b16 %v1543
        %v1644 = vunpack.c.l.b16 %v1544
        %v1645 = vunpack.c.h.b16 %v1544
        %v1646 = vunpack.c.l.b16 %v1545
        %v1647 = vunpack.c.h.b16 %v1545
        %v1648 = vunpack.c.l.b16 %v1546
        %v1649 = vunpack.c.h.b16 %v1546
        %v1650 = vunpack.c.l.b16 %v1547
        %v1651 = vunpack.c.h.b16 %v1547
        %v1652 = vunpack.c.l.b16 %v1548
        %v1653 = vunpack.c.h.b16 %v1548
        %v1654 = vunpack.c.l.b16 %v1549
        %v1655 = vunpack.c.h.b16 %v1549
        %v1656 = vunpack.c.l.b16 %v1550
        %v1657 = vunpack.c.h.b16 %v1550
        %v1658 = vunpack.c.l.b16 %v1551
        %v1659 = vunpack.c.h.b16 %v1551
        %v1660 = vunpack.c.l.b16 %v1552
        %v1661 = vunpack.c.h.b16 %v1552
        %v1662 = vunpack.c.l.b16 %v1553
        %v1663 = vunpack.c.h.b16 %v1553
        %v1664 = vunpack.c.l.b16 %v1554
        %v1665 = vunpack.c.h.b16 %v1554
        %v1666 = vunpack.c.l.b16 %v1555
        %v1667 = vunpack.c.h.b16 %v1555
        %v1668 = vunpack.c.l.b16 %v1556
        %v1669 = vunpack.c.h.b16 %v1556
        %v1670 = vunpack.c.l.b16 %v1557
        %v1671 = vunpack.c.h.b16 %v1557
        %v1672 = vunpack.c.l.b16 %v1558
        %v1673 = vunpack.c.h.b16 %v1558
        %v1674 = vunpack.c.l.b16 %v1559
        %v1675 = vunpack.c.h.b16 %v1559
        %v1676 = vunpack.c.l.b16 %v1560
        %v1677 = vunpack.c.h.b16 %v1560
        %v1678 = vunpack.c.l.b16 %v1561
        %v1679 = vunpack.c.h.b16 %v1561
        %v1680 = vunpack.c.l.b16 %v1562
        %v1681 = vunpack.c.h.b16 %v1562
        %v1682 = vunpack.c.l.b16 %v1563
        %v1683 = vunpack.c.h.b16 %v1563
        %v1684 = vunpack.c.l.b16 %v1564
        %v1685 = vunpack.c.h.b16 %v1564
        %v1686 = vunpack.c.l.b16 %v1565
        %v1687 = vunpack.c.h.b16 %v1565
        %v1688 = vunpack.c.l.b16 %v1566
        %v1689 = vunpack.c.h.b16 %v1566
        %v1690 = vunpack.c.l.b16 %v1567
        %v1691 = vunpack.c.h.b16 %v1567
        %v1692 = vunpack.c.l.b16 %v1568
        %v1693 = vunpack.c.h.b16 %v1568
        %v1694 = vunpack.c.l.b16 %v1569
        %v1695 = vunpack.c.h.b16 %v1569
        %v1696 = vunpack.c.l.b16 %v1570
        %v1697 = vunpack.c.h.b16 %v1570
        %v1698 = vunpack.c.l.b16 %v1571
        %v1699 = vunpack.c.h.b16 %v1571
        %v1700 = vunpack.c.l.b16 %v1572
        %v1701 = vunpack.c.h.b16 %v1572
        %v1702 = vpack.c.b16 %v1642, %v1638
        %v1703 = vpack.c.b16 %v1643, %v1639
        %v1704 = vpack.c.b16 %v1644, %v1640
        %v1705 = vpack.c.b16 %v1645, %v1641
        %v1706 = vpack.c.b16 %v1650, %v1646
        %v1707 = vpack.c.b16 %v1651, %v1647
        %v1708 = vpack.c.b16 %v1652, %v1648
        %v1709 = vpack.c.b16 %v1653, %v1649
        %v1710 = vpack.c.b16 %v1658, %v1654
        %v1711 = vpack.c.b16 %v1659, %v1655
        %v1712 = vpack.c.b16 %v1660, %v1656
        %v1713 = vpack.c.b16 %v1661, %v1657
        %v1714 = vpack.c.b16 %v1666, %v1662
        %v1715 = vpack.c.b16 %v1667, %v1663
        %v1716 = vpack.c.b16 %v1668, %v1664
        %v1717 = vpack.c.b16 %v1669, %v1665
        %v1718 = vpack.c.b16 %v1674, %v1670
        %v1719 = vpack.c.b16 %v1675, %v1671
        %v1720 = vpack.c.b16 %v1676, %v1672
        %v1721 = vpack.c.b16 %v1677, %v1673
        %v1722 = vpack.c.b16 %v1682, %v1678
        %v1723 = vpack.c.b16 %v1683, %v1679
        %v1724 = vpack.c.b16 %v1684, %v1680
        %v1725 = vpack.c.b16 %v1685, %v1681
        %v1726 = vpack.c.b16 %v1690, %v1686
        %v1727 = vpack.c.b16 %v1691, %v1687
        %v1728 = vpack.c.b16 %v1692, %v1688
        %v1729 = vpack.c.b16 %v1693, %v1689
        %v1730 = vpack.c.b16 %v1698, %v1694
        %v1731 = vpack.c.b16 %v1699, %v1695
        %v1732 = vpack.c.b16 %v1700, %v1696
        %v1733 = vpack.c.b16 %v1701, %v1697
        %1766 = vmatprep.subr.bf16.mxu0 %v1731
        %1767 = vmatpush1.bf16.msra.mxu0 %v1730
        %1768 = vmatprep.subr.bf16.mxu0 %v1727
        %1769 = vmatpush1.bf16.msra.mxu0 %v1726
        %1770 = vmatprep.subr.bf16.mxu0 %v1723
        %1771 = vmatpush1.bf16.msra.mxu0 %v1722
        %1772 = vmatprep.subr.bf16.mxu0 %v1719
        %1773 = vmatpush1.bf16.msra.mxu0 %v1718
        %1774 = vmatprep.subr.bf16.mxu0 %v1715
        %1775 = vmatpush1.bf16.msra.mxu0 %v1714
        %1776 = vmatprep.subr.bf16.mxu0 %v1711
        %1777 = vmatpush1.bf16.msra.mxu0 %v1710
        %1778 = vmatprep.subr.bf16.mxu0 %v1707
        %1779 = vmatpush1.bf16.msra.mxu0 %v1706
        %1780 = vmatprep.subr.bf16.mxu0 %v1703
        %1781 = vmatpush1.bf16.msra.mxu0 %v1702
        %1782 = vmatprep.subr.bf16.mxu0 0
        %1783 = vmatpush2.bf16.msra.mxu0 0
        %1784 = vmatprep.subr.bf16.mxu0 0
        %1785 = vmatpush2.bf16.msra.mxu0 0
        %1786 = vmatprep.subr.bf16.mxu0 0
        %1787 = vmatpush2.bf16.msra.mxu0 0
        %1788 = vmatprep.subr.bf16.mxu0 0
        %1789 = vmatpush2.bf16.msra.mxu0 0
        %1790 = vmatprep.subr.bf16.mxu0 0
        %1791 = vmatpush2.bf16.msra.mxu0 0
        %1792 = vmatprep.subr.bf16.mxu0 0
        %1793 = vmatpush2.bf16.msra.mxu0 0
        %1794 = vmatprep.subr.bf16.mxu0 0
        %1795 = vmatpush2.bf16.msra.mxu0 0
        %1796 = vmatprep.subr.bf16.mxu0 0
        %1797 = vmatpush2.bf16.msra.mxu0 0
        %1798 = vmatprep.mubr.bf16.mxu0 0
        %1799 = vmatmul.mubr.bf16.gmra.mxu0 0
        %v1800 = vpop.f32.mrf.mxu0
        %v1801 = vadd.f32 0.0, %v1800
        %v1802 = vpop.f32.mrf.mxu0
        %v1803 = vadd.f32 0.0, %v1802
        %v1804 = vpop.f32.mrf.mxu0
        %v1805 = vpop.f32.mrf.mxu0
        %1806 = vdwg.mxu0
        %1807 = vmatprep.subr.bf16.mxu0 %v1733
        %1808 = vmatpush1.bf16.msra.mxu0 %v1732
        %1809 = vmatprep.subr.bf16.mxu0 %v1729
        %1810 = vmatpush1.bf16.msra.mxu0 %v1728
        %1811 = vmatprep.subr.bf16.mxu0 %v1725
        %1812 = vmatpush1.bf16.msra.mxu0 %v1724
        %1813 = vmatprep.subr.bf16.mxu0 %v1721
        %1814 = vmatpush1.bf16.msra.mxu0 %v1720
        %1815 = vmatprep.subr.bf16.mxu0 %v1717
        %1816 = vmatpush1.bf16.msra.mxu0 %v1716
        %1817 = vmatprep.subr.bf16.mxu0 %v1713
        %1818 = vmatpush1.bf16.msra.mxu0 %v1712
        %1819 = vmatprep.subr.bf16.mxu0 %v1709
        %1820 = vmatpush1.bf16.msra.mxu0 %v1708
        %1821 = vmatprep.subr.bf16.mxu0 %v1705
        %1822 = vmatpush1.bf16.msra.mxu0 %v1704
        %1823 = vmatprep.subr.bf16.mxu0 0
        %1824 = vmatpush2.bf16.msra.mxu0 0
        %1825 = vmatprep.subr.bf16.mxu0 0
        %1826 = vmatpush2.bf16.msra.mxu0 0
        %1827 = vmatprep.subr.bf16.mxu0 0
        %1828 = vmatpush2.bf16.msra.mxu0 0
        %1829 = vmatprep.subr.bf16.mxu0 0
        %1830 = vmatpush2.bf16.msra.mxu0 0
        %1831 = vmatprep.subr.bf16.mxu0 0
        %1832 = vmatpush2.bf16.msra.mxu0 0
        %1833 = vmatprep.subr.bf16.mxu0 0
        %1834 = vmatpush2.bf16.msra.mxu0 0
        %1835 = vmatprep.subr.bf16.mxu0 0
        %1836 = vmatpush2.bf16.msra.mxu0 0
        %1837 = vmatprep.subr.bf16.mxu0 0
        %1838 = vmatpush2.bf16.msra.mxu0 0
        %1839 = vmatprep.mubr.bf16.mxu0 0
        %1840 = vmatmul.mubr.bf16.gmra.mxu0 0
        %v1841 = vpop.f32.mrf.mxu0
        %v1842 = vadd.f32 0.0, %v1841
        %v1843 = vpop.f32.mrf.mxu0
        %v1844 = vadd.f32 0.0, %v1843
        %v1845 = vpop.f32.mrf.mxu0
        %v1846 = vpop.f32.mrf.mxu0
        %1847 = vdwg.mxu0
        %v1880 = vunpack.c.l.b16 %v1574
        %v1881 = vunpack.c.h.b16 %v1574
        %v1882 = vunpack.c.l.b16 %v1575
        %v1883 = vunpack.c.h.b16 %v1575
        %v1884 = vunpack.c.l.b16 %v1576
        %v1885 = vunpack.c.h.b16 %v1576
        %v1886 = vunpack.c.l.b16 %v1577
        %v1887 = vunpack.c.h.b16 %v1577
        %v1888 = vunpack.c.l.b16 %v1578
        %v1889 = vunpack.c.h.b16 %v1578
        %v1890 = vunpack.c.l.b16 %v1579
        %v1891 = vunpack.c.h.b16 %v1579
        %v1892 = vunpack.c.l.b16 %v1580
        %v1893 = vunpack.c.h.b16 %v1580
        %v1894 = vunpack.c.l.b16 %v1581
        %v1895 = vunpack.c.h.b16 %v1581
        %v1896 = vunpack.c.l.b16 %v1582
        %v1897 = vunpack.c.h.b16 %v1582
        %v1898 = vunpack.c.l.b16 %v1583
        %v1899 = vunpack.c.h.b16 %v1583
        %v1900 = vunpack.c.l.b16 %v1584
        %v1901 = vunpack.c.h.b16 %v1584
        %v1902 = vunpack.c.l.b16 %v1585
        %v1903 = vunpack.c.h.b16 %v1585
        %v1904 = vunpack.c.l.b16 %v1586
        %v1905 = vunpack.c.h.b16 %v1586
        %v1906 = vunpack.c.l.b16 %v1587
        %v1907 = vunpack.c.h.b16 %v1587
        %v1908 = vunpack.c.l.b16 %v1588
        %v1909 = vunpack.c.h.b16 %v1588
        %v1910 = vunpack.c.l.b16 %v1589
        %v1911 = vunpack.c.h.b16 %v1589
        %v1912 = vunpack.c.l.b16 %v1590
        %v1913 = vunpack.c.h.b16 %v1590
        %v1914 = vunpack.c.l.b16 %v1591
        %v1915 = vunpack.c.h.b16 %v1591
        %v1916 = vunpack.c.l.b16 %v1592
        %v1917 = vunpack.c.h.b16 %v1592
        %v1918 = vunpack.c.l.b16 %v1593
        %v1919 = vunpack.c.h.b16 %v1593
        %v1920 = vunpack.c.l.b16 %v1594
        %v1921 = vunpack.c.h.b16 %v1594
        %v1922 = vunpack.c.l.b16 %v1595
        %v1923 = vunpack.c.h.b16 %v1595
        %v1924 = vunpack.c.l.b16 %v1596
        %v1925 = vunpack.c.h.b16 %v1596
        %v1926 = vunpack.c.l.b16 %v1597
        %v1927 = vunpack.c.h.b16 %v1597
        %v1928 = vunpack.c.l.b16 %v1598
        %v1929 = vunpack.c.h.b16 %v1598
        %v1930 = vunpack.c.l.b16 %v1599
        %v1931 = vunpack.c.h.b16 %v1599
        %v1932 = vunpack.c.l.b16 %v1600
        %v1933 = vunpack.c.h.b16 %v1600
        %v1934 = vunpack.c.l.b16 %v1601
        %v1935 = vunpack.c.h.b16 %v1601
        %v1936 = vunpack.c.l.b16 %v1602
        %v1937 = vunpack.c.h.b16 %v1602
        %v1938 = vunpack.c.l.b16 %v1603
        %v1939 = vunpack.c.h.b16 %v1603
        %v1940 = vunpack.c.l.b16 %v1604
        %v1941 = vunpack.c.h.b16 %v1604
        %v1942 = vunpack.c.l.b16 %v1605
        %v1943 = vunpack.c.h.b16 %v1605
        %v1944 = vpack.c.b16 %v1884, %v1880
        %v1945 = vpack.c.b16 %v1885, %v1881
        %v1946 = vpack.c.b16 %v1886, %v1882
        %v1947 = vpack.c.b16 %v1887, %v1883
        %v1948 = vpack.c.b16 %v1892, %v1888
        %v1949 = vpack.c.b16 %v1893, %v1889
        %v1950 = vpack.c.b16 %v1894, %v1890
        %v1951 = vpack.c.b16 %v1895, %v1891
        %v1952 = vpack.c.b16 %v1900, %v1896
        %v1953 = vpack.c.b16 %v1901, %v1897
        %v1954 = vpack.c.b16 %v1902, %v1898
        %v1955 = vpack.c.b16 %v1903, %v1899
        %v1956 = vpack.c.b16 %v1908, %v1904
        %v1957 = vpack.c.b16 %v1909, %v1905
        %v1958 = vpack.c.b16 %v1910, %v1906
        %v1959 = vpack.c.b16 %v1911, %v1907
        %v1960 = vpack.c.b16 %v1916, %v1912
        %v1961 = vpack.c.b16 %v1917, %v1913
        %v1962 = vpack.c.b16 %v1918, %v1914
        %v1963 = vpack.c.b16 %v1919, %v1915
        %v1964 = vpack.c.b16 %v1924, %v1920
        %v1965 = vpack.c.b16 %v1925, %v1921
        %v1966 = vpack.c.b16 %v1926, %v1922
        %v1967 = vpack.c.b16 %v1927, %v1923
        %v1968 = vpack.c.b16 %v1932, %v1928
        %v1969 = vpack.c.b16 %v1933, %v1929
        %v1970 = vpack.c.b16 %v1934, %v1930
        %v1971 = vpack.c.b16 %v1935, %v1931
        %v1972 = vpack.c.b16 %v1940, %v1936
        %v1973 = vpack.c.b16 %v1941, %v1937
        %v1974 = vpack.c.b16 %v1942, %v1938
        %v1975 = vpack.c.b16 %v1943, %v1939
        %2008 = vmatprep.subr.bf16.mxu0 %v1973
        %2009 = vmatpush1.bf16.msra.mxu0 %v1972
        %2010 = vmatprep.subr.bf16.mxu0 %v1969
        %2011 = vmatpush1.bf16.msra.mxu0 %v1968
        %2012 = vmatprep.subr.bf16.mxu0 %v1965
        %2013 = vmatpush1.bf16.msra.mxu0 %v1964
        %2014 = vmatprep.subr.bf16.mxu0 %v1961
        %2015 = vmatpush1.bf16.msra.mxu0 %v1960
        %2016 = vmatprep.subr.bf16.mxu0 %v1957
        %2017 = vmatpush1.bf16.msra.mxu0 %v1956
        %2018 = vmatprep.subr.bf16.mxu0 %v1953
        %2019 = vmatpush1.bf16.msra.mxu0 %v1952
        %2020 = vmatprep.subr.bf16.mxu0 %v1949
        %2021 = vmatpush1.bf16.msra.mxu0 %v1948
        %2022 = vmatprep.subr.bf16.mxu0 %v1945
        %2023 = vmatpush1.bf16.msra.mxu0 %v1944
        %2024 = vmatprep.subr.bf16.mxu0 0
        %2025 = vmatpush2.bf16.msra.mxu0 0
        %2026 = vmatprep.subr.bf16.mxu0 0
        %2027 = vmatpush2.bf16.msra.mxu0 0
        %2028 = vmatprep.subr.bf16.mxu0 0
        %2029 = vmatpush2.bf16.msra.mxu0 0
        %2030 = vmatprep.subr.bf16.mxu0 0
        %2031 = vmatpush2.bf16.msra.mxu0 0
        %2032 = vmatprep.subr.bf16.mxu0 0
        %2033 = vmatpush2.bf16.msra.mxu0 0
        %2034 = vmatprep.subr.bf16.mxu0 0
        %2035 = vmatpush2.bf16.msra.mxu0 0
        %2036 = vmatprep.subr.bf16.mxu0 0
        %2037 = vmatpush2.bf16.msra.mxu0 0
        %2038 = vmatprep.subr.bf16.mxu0 0
        %2039 = vmatpush2.bf16.msra.mxu0 0
        %2040 = vmatprep.mubr.bf16.mxu0 0
        %2041 = vmatmul.mubr.bf16.gmra.mxu0 0
        %v2042 = vpop.f32.mrf.mxu0
        %v2043 = vadd.f32 0.0, %v2042
        %v2044 = vpop.f32.mrf.mxu0
        %v2045 = vadd.f32 0.0, %v2044
        %v2046 = vpop.f32.mrf.mxu0
        %v2047 = vpop.f32.mrf.mxu0
        %2048 = vdwg.mxu0
        %2049 = vmatprep.subr.bf16.mxu0 %v1975
        %2050 = vmatpush1.bf16.msra.mxu0 %v1974
        %2051 = vmatprep.subr.bf16.mxu0 %v1971
        %2052 = vmatpush1.bf16.msra.mxu0 %v1970
        %2053 = vmatprep.subr.bf16.mxu0 %v1967
        %2054 = vmatpush1.bf16.msra.mxu0 %v1966
        %2055 = vmatprep.subr.bf16.mxu0 %v1963
        %2056 = vmatpush1.bf16.msra.mxu0 %v1962
        %2057 = vmatprep.subr.bf16.mxu0 %v1959
        %2058 = vmatpush1.bf16.msra.mxu0 %v1958
        %2059 = vmatprep.subr.bf16.mxu0 %v1955
        %2060 = vmatpush1.bf16.msra.mxu0 %v1954
        %2061 = vmatprep.subr.bf16.mxu0 %v1951
        %2062 = vmatpush1.bf16.msra.mxu0 %v1950
        %2063 = vmatprep.subr.bf16.mxu0 %v1947
        %2064 = vmatpush1.bf16.msra.mxu0 %v1946
        %2065 = vmatprep.subr.bf16.mxu0 0
        %2066 = vmatpush2.bf16.msra.mxu0 0
        %2067 = vmatprep.subr.bf16.mxu0 0
        %2068 = vmatpush2.bf16.msra.mxu0 0
        %2069 = vmatprep.subr.bf16.mxu0 0
        %2070 = vmatpush2.bf16.msra.mxu0 0
        %2071 = vmatprep.subr.bf16.mxu0 0
        %2072 = vmatpush2.bf16.msra.mxu0 0
        %2073 = vmatprep.subr.bf16.mxu0 0
        %2074 = vmatpush2.bf16.msra.mxu0 0
        %2075 = vmatprep.subr.bf16.mxu0 0
        %2076 = vmatpush2.bf16.msra.mxu0 0
        %2077 = vmatprep.subr.bf16.mxu0 0
        %2078 = vmatpush2.bf16.msra.mxu0 0
        %2079 = vmatprep.subr.bf16.mxu0 0
        %2080 = vmatpush2.bf16.msra.mxu0 0
        %2081 = vmatprep.mubr.bf16.mxu0 0
        %2082 = vmatmul.mubr.bf16.gmra.mxu0 0
        %v2083 = vpop.f32.mrf.mxu0
        %v2084 = vadd.f32 0.0, %v2083
        %v2085 = vpop.f32.mrf.mxu0
        %v2086 = vadd.f32 0.0, %v2085
        %v2087 = vpop.f32.mrf.mxu0
        %v2088 = vpop.f32.mrf.mxu0
        %2089 = vdwg.mxu0
        %v2090 = vld [vmem:[#allocation3] sm:$0xff]
        %v2091 = vld [vmem:[#allocation3 + $0x8] sm:$0xff]
        %v2092 = vld [vmem:[#allocation3 + $0x10] sm:$0xff]
        %v2093 = vld [vmem:[#allocation3 + $0x18] sm:$0xff]
        %v2094 = vadd.f32 %v2090, %v1801
        %v2095 = vadd.f32 %v2091, %v1803
        %v2096 = vadd.f32 %v2092, %v1842
        %v2097 = vadd.f32 %v2093, %v1844
        %v2098 = vld [vmem:[#allocation3 + $0x1e0] sm:$0xff]
        %v2099 = vld [vmem:[#allocation3 + $0x1e8] sm:$0xff]
        %v2100 = vld [vmem:[#allocation3 + $0x1f0] sm:$0xff]
        %v2101 = vld [vmem:[#allocation3 + $0x1f8] sm:$0xff]
        %v2102 = vadd.f32 %v2098, %v2043
        %v2103 = vadd.f32 %v2099, %v2045
        %v2104 = vadd.f32 %v2100, %v2084
        %v2105 = vadd.f32 %v2101, %v2086
        %v2106 = vxor.u32 %v2094, 2147483648
        %v2107 = vmul.f32 %v2106, 1.442695
        %v2108 = vpow.pop %v2107
        %v2109 = vadd.f32 %v2108, 1.0
        %v2110 = vrcp.pop %v2109
        %v2111 = vmul.f32 1.0, %v2110
        %v2112 = vxor.u32 %v2095, 2147483648
        %v2113 = vmul.f32 %v2112, 1.442695
        %v2114 = vpow.pop %v2113
        %v2115 = vadd.f32 %v2114, 1.0
        %v2116 = vrcp.pop %v2115
        %v2117 = vmul.f32 1.0, %v2116
        %v2118 = vtanh.pop %v2096
        %v2119 = vxor.u32 %v2097, 2147483648
        %v2120 = vmul.f32 %v2119, 1.442695
        %v2121 = vpow.pop %v2120
        %v2122 = vadd.f32 %v2121, 1.0
        %v2123 = vrcp.pop %v2122
        %v2124 = vmul.f32 1.0, %v2123
        %v2125 = vmul.f32 %v2117, 0.0
        %v2126 = vmul.f32 %v2111, %v2118
        %v2127 = vadd.f32 %v2125, %v2126
        %v2128 = vtanh.pop %v2127
        %v2129 = vmul.f32 %v2124, %v2128
        %v2130 = vxor.u32 %v2102, 2147483648
        %v2131 = vmul.f32 %v2130, 1.442695
        %v2132 = vpow.pop %v2131
        %v2133 = vadd.f32 %v2132, 1.0
        %v2134 = vrcp.pop %v2133
        %v2135 = vmul.f32 1.0, %v2134
        %v2136 = vxor.u32 %v2103, 2147483648
        %v2137 = vmul.f32 %v2136, 1.442695
        %v2138 = vpow.pop %v2137
        %v2139 = vadd.f32 %v2138, 1.0
        %v2140 = vrcp.pop %v2139
        %v2141 = vmul.f32 1.0, %v2140
        %v2142 = vtanh.pop %v2104
        %v2143 = vxor.u32 %v2105, 2147483648
        %v2144 = vmul.f32 %v2143, 1.442695
        %v2145 = vpow.pop %v2144
        %v2146 = vadd.f32 %v2145, 1.0
        %v2147 = vrcp.pop %v2146
        %v2148 = vmul.f32 1.0, %v2147
        %v2149 = vmul.f32 %v2141, 0.0
        %v2150 = vmul.f32 %v2135, %v2142
        %v2151 = vadd.f32 %v2149, %v2150
        %v2152 = vtanh.pop %v2151
        %v2153 = vmul.f32 %v2148, %v2152
        %v2154 = vpack.c.bf16 %v2129, %v2129
        %2155 = vmatprep.subr.bf16.mxu0 %v1731
        %2156 = vmatpush1.bf16.msra.mxu0 %v1730
        %2157 = vmatprep.subr.bf16.mxu0 %v1727
        %2158 = vmatpush1.bf16.msra.mxu0 %v1726
        %2159 = vmatprep.subr.bf16.mxu0 %v1723
        %2160 = vmatpush1.bf16.msra.mxu0 %v1722
        %2161 = vmatprep.subr.bf16.mxu0 %v1719
        %2162 = vmatpush1.bf16.msra.mxu0 %v1718
        %2163 = vmatprep.subr.bf16.mxu0 %v1715
        %2164 = vmatpush1.bf16.msra.mxu0 %v1714
        %2165 = vmatprep.subr.bf16.mxu0 %v1711
        %2166 = vmatpush1.bf16.msra.mxu0 %v1710
        %2167 = vmatprep.subr.bf16.mxu0 %v1707
        %2168 = vmatpush1.bf16.msra.mxu0 %v1706
        %2169 = vmatprep.subr.bf16.mxu0 %v1703
        %2170 = vmatpush1.bf16.msra.mxu0 %v1702
        %2171 = vmatprep.subr.bf16.mxu0 0
        %2172 = vmatpush2.bf16.msra.mxu0 0
        %2173 = vmatprep.subr.bf16.mxu0 0
        %2174 = vmatpush2.bf16.msra.mxu0 0
        %2175 = vmatprep.subr.bf16.mxu0 0
        %2176 = vmatpush2.bf16.msra.mxu0 0
        %2177 = vmatprep.subr.bf16.mxu0 0
        %2178 = vmatpush2.bf16.msra.mxu0 0
        %2179 = vmatprep.subr.bf16.mxu0 0
        %2180 = vmatpush2.bf16.msra.mxu0 0
        %2181 = vmatprep.subr.bf16.mxu0 0
        %2182 = vmatpush2.bf16.msra.mxu0 0
        %2183 = vmatprep.subr.bf16.mxu0 0
        %2184 = vmatpush2.bf16.msra.mxu0 0
        %2185 = vmatprep.subr.bf16.mxu0 0
        %2186 = vmatpush2.bf16.msra.mxu0 0
        %2187 = vmatprep.mubr.bf16.mxu0 0
        %2188 = vmatmul.mubr.bf16.gmra.mxu0 %v2154
        %v2189 = vpop.f32.mrf.mxu0
        %v2190 = vadd.f32 0.0, %v2189
        %v2191 = vpop.f32.mrf.mxu0
        %v2192 = vadd.f32 0.0, %v2191
        %v2193 = vpop.f32.mrf.mxu0
        %v2194 = vpop.f32.mrf.mxu0
        %2195 = vdwg.mxu0
        %2196 = vmatprep.subr.bf16.mxu0 %v1733
        %2197 = vmatpush1.bf16.msra.mxu0 %v1732
        %2198 = vmatprep.subr.bf16.mxu0 %v1729
        %2199 = vmatpush1.bf16.msra.mxu0 %v1728
        %2200 = vmatprep.subr.bf16.mxu0 %v1725
        %2201 = vmatpush1.bf16.msra.mxu0 %v1724
        %2202 = vmatprep.subr.bf16.mxu0 %v1721
        %2203 = vmatpush1.bf16.msra.mxu0 %v1720
        %2204 = vmatprep.subr.bf16.mxu0 %v1717
        %2205 = vmatpush1.bf16.msra.mxu0 %v1716
        %2206 = vmatprep.subr.bf16.mxu0 %v1713
        %2207 = vmatpush1.bf16.msra.mxu0 %v1712
        %2208 = vmatprep.subr.bf16.mxu0 %v1709
        %2209 = vmatpush1.bf16.msra.mxu0 %v1708
        %2210 = vmatprep.subr.bf16.mxu0 %v1705
        %2211 = vmatpush1.bf16.msra.mxu0 %v1704
        %2212 = vmatprep.subr.bf16.mxu0 0
        %2213 = vmatpush2.bf16.msra.mxu0 0
        %2214 = vmatprep.subr.bf16.mxu0 0
        %2215 = vmatpush2.bf16.msra.mxu0 0
        %2216 = vmatprep.subr.bf16.mxu0 0
        %2217 = vmatpush2.bf16.msra.mxu0 0
        %2218 = vmatprep.subr.bf16.mxu0 0
        %2219 = vmatpush2.bf16.msra.mxu0 0
        %2220 = vmatprep.subr.bf16.mxu0 0
        %2221 = vmatpush2.bf16.msra.mxu0 0
        %2222 = vmatprep.subr.bf16.mxu0 0
        %2223 = vmatpush2.bf16.msra.mxu0 0
        %2224 = vmatprep.subr.bf16.mxu0 0
        %2225 = vmatpush2.bf16.msra.mxu0 0
        %2226 = vmatprep.subr.bf16.mxu0 0
        %2227 = vmatpush2.bf16.msra.mxu0 0
        %2228 = vmatprep.mubr.bf16.mxu0 0
        %2229 = vmatmul.mubr.bf16.gmra.mxu0 %v2154
        %v2230 = vpop.f32.mrf.mxu0
        %v2231 = vadd.f32 0.0, %v2230
        %v2232 = vpop.f32.mrf.mxu0
        %v2233 = vadd.f32 0.0, %v2232
        %v2234 = vpop.f32.mrf.mxu0
        %v2235 = vpop.f32.mrf.mxu0
        %2236 = vdwg.mxu0
        %v2237 = vpack.c.bf16 %v2153, %v2153
        %2238 = vmatprep.subr.bf16.mxu0 %v1973
        %2239 = vmatpush1.bf16.msra.mxu0 %v1972
        %2240 = vmatprep.subr.bf16.mxu0 %v1969
        %2241 = vmatpush1.bf16.msra.mxu0 %v1968
        %2242 = vmatprep.subr.bf16.mxu0 %v1965
        %2243 = vmatpush1.bf16.msra.mxu0 %v1964
        %2244 = vmatprep.subr.bf16.mxu0 %v1961
        %2245 = vmatpush1.bf16.msra.mxu0 %v1960
        %2246 = vmatprep.subr.bf16.mxu0 %v1957
        %2247 = vmatpush1.bf16.msra.mxu0 %v1956
        %2248 = vmatprep.subr.bf16.mxu0 %v1953
        %2249 = vmatpush1.bf16.msra.mxu0 %v1952
        %2250 = vmatprep.subr.bf16.mxu0 %v1949
        %2251 = vmatpush1.bf16.msra.mxu0 %v1948
        %2252 = vmatprep.subr.bf16.mxu0 %v1945
        %2253 = vmatpush1.bf16.msra.mxu0 %v1944
        %2254 = vmatprep.subr.bf16.mxu0 0
        %2255 = vmatpush2.bf16.msra.mxu0 0
        %2256 = vmatprep.subr.bf16.mxu0 0
        %2257 = vmatpush2.bf16.msra.mxu0 0
        %2258 = vmatprep.subr.bf16.mxu0 0
        %2259 = vmatpush2.bf16.msra.mxu0 0
        %2260 = vmatprep.subr.bf16.mxu0 0
        %2261 = vmatpush2.bf16.msra.mxu0 0
        %2262 = vmatprep.subr.bf16.mxu0 0
        %2263 = vmatpush2.bf16.msra.mxu0 0
        %2264 = vmatprep.subr.bf16.mxu0 0
        %2265 = vmatpush2.bf16.msra.mxu0 0
        %2266 = vmatprep.subr.bf16.mxu0 0
        %2267 = vmatpush2.bf16.msra.mxu0 0
        %2268 = vmatprep.subr.bf16.mxu0 0
        %2269 = vmatpush2.bf16.msra.mxu0 0
        %2270 = vmatprep.mubr.bf16.mxu0 0
        %2271 = vmatmul.mubr.bf16.gmra.mxu0 %v2237
        %v2272 = vpop.f32.mrf.mxu0
        %v2273 = vadd.f32 0.0, %v2272
        %v2274 = vpop.f32.mrf.mxu0
        %v2275 = vadd.f32 0.0, %v2274
        %v2276 = vpop.f32.mrf.mxu0
        %v2277 = vpop.f32.mrf.mxu0
        %2278 = vdwg.mxu0
        %2279 = vmatprep.subr.bf16.mxu0 %v1975
        %2280 = vmatpush1.bf16.msra.mxu0 %v1974
        %2281 = vmatprep.subr.bf16.mxu0 %v1971
        %2282 = vmatpush1.bf16.msra.mxu0 %v1970
        %2283 = vmatprep.subr.bf16.mxu0 %v1967
        %2284 = vmatpush1.bf16.msra.mxu0 %v1966
        %2285 = vmatprep.subr.bf16.mxu0 %v1963
        %2286 = vmatpush1.bf16.msra.mxu0 %v1962
        %2287 = vmatprep.subr.bf16.mxu0 %v1959
        %2288 = vmatpush1.bf16.msra.mxu0 %v1958
        %2289 = vmatprep.subr.bf16.mxu0 %v1955
        %2290 = vmatpush1.bf16.msra.mxu0 %v1954
        %2291 = vmatprep.subr.bf16.mxu0 %v1951
        %2292 = vmatpush1.bf16.msra.mxu0 %v1950
        %2293 = vmatprep.subr.bf16.mxu0 %v1947
        %2294 = vmatpush1.bf16.msra.mxu0 %v1946
        %2295 = vmatprep.subr.bf16.mxu0 0
        %2296 = vmatpush2.bf16.msra.mxu0 0
        %2297 = vmatprep.subr.bf16.mxu0 0
        %2298 = vmatpush2.bf16.msra.mxu0 0
        %2299 = vmatprep.subr.bf16.mxu0 0
        %2300 = vmatpush2.bf16.msra.mxu0 0
        %2301 = vmatprep.subr.bf16.mxu0 0
        %2302 = vmatpush2.bf16.msra.mxu0 0
        %2303 = vmatprep.subr.bf16.mxu0 0
        %2304 = vmatpush2.bf16.msra.mxu0 0
        %2305 = vmatprep.subr.bf16.mxu0 0
        %2306 = vmatpush2.bf16.msra.mxu0 0
        %2307 = vmatprep.subr.bf16.mxu0 0
        %2308 = vmatpush2.bf16.msra.mxu0 0
        %2309 = vmatprep.subr.bf16.mxu0 0
        %2310 = vmatpush2.bf16.msra.mxu0 0
        %2311 = vmatprep.mubr.bf16.mxu0 0
        %2312 = vmatmul.mubr.bf16.gmra.mxu0 %v2237
        %v2313 = vpop.f32.mrf.mxu0
        %v2314 = vadd.f32 0.0, %v2313
        %v2315 = vpop.f32.mrf.mxu0
        %v2316 = vadd.f32 0.0, %v2315
        %v2317 = vpop.f32.mrf.mxu0
        %v2318 = vpop.f32.mrf.mxu0
        %2319 = vdwg.mxu0
        %v2320 = vld [vmem:[#allocation3 + $0x40] sm:$0xff]
        %v2321 = vld [vmem:[#allocation3 + $0x48] sm:$0xff]
        %v2322 = vld [vmem:[#allocation3 + $0x50] sm:$0xff]
        %v2323 = vld [vmem:[#allocation3 + $0x58] sm:$0xff]
        %v2324 = vadd.f32 %v2320, %v2190
        %v2325 = vadd.f32 %v2321, %v2192
        %v2326 = vadd.f32 %v2322, %v2231
        %v2327 = vadd.f32 %v2323, %v2233
        %v2328 = vld [vmem:[#allocation3 + $0x1a0] sm:$0xff]
        %v2329 = vld [vmem:[#allocation3 + $0x1a8] sm:$0xff]
        %v2330 = vld [vmem:[#allocation3 + $0x1b0] sm:$0xff]
        %v2331 = vld [vmem:[#allocation3 + $0x1b8] sm:$0xff]
        %v2332 = vadd.f32 %v2328, %v2273
        %v2333 = vadd.f32 %v2329, %v2275
        %v2334 = vadd.f32 %v2330, %v2314
        %v2335 = vadd.f32 %v2331, %v2316
        %v2336 = vxor.u32 %v2324, 2147483648
        %v2337 = vmul.f32 %v2336, 1.442695
        %v2338 = vpow.pop %v2337
        %v2339 = vadd.f32 %v2338, 1.0
        %v2340 = vrcp.pop %v2339
        %v2341 = vmul.f32 1.0, %v2340
        %v2342 = vxor.u32 %v2325, 2147483648
        %v2343 = vmul.f32 %v2342, 1.442695
        %v2344 = vpow.pop %v2343
        %v2345 = vadd.f32 %v2344, 1.0
        %v2346 = vrcp.pop %v2345
        %v2347 = vmul.f32 1.0, %v2346
        %v2348 = vtanh.pop %v2326
        %v2349 = vxor.u32 %v2327, 2147483648
        %v2350 = vmul.f32 %v2349, 1.442695
        %v2351 = vpow.pop %v2350
        %v2352 = vadd.f32 %v2351, 1.0
        %v2353 = vrcp.pop %v2352
        %v2354 = vmul.f32 1.0, %v2353
        %v2355 = vmul.f32 %v2347, %v2127
        %v2356 = vmul.f32 %v2341, %v2348
        %v2357 = vadd.f32 %v2355, %v2356
        %v2358 = vtanh.pop %v2357
        %v2359 = vmul.f32 %v2354, %v2358
        %v2360 = vxor.u32 %v2332, 2147483648
        %v2361 = vmul.f32 %v2360, 1.442695
        %v2362 = vpow.pop %v2361
        %v2363 = vadd.f32 %v2362, 1.0
        %v2364 = vrcp.pop %v2363
        %v2365 = vmul.f32 1.0, %v2364
        %v2366 = vxor.u32 %v2333, 2147483648
        %v2367 = vmul.f32 %v2366, 1.442695
        %v2368 = vpow.pop %v2367
        %v2369 = vadd.f32 %v2368, 1.0
        %v2370 = vrcp.pop %v2369
        %v2371 = vmul.f32 1.0, %v2370
        %v2372 = vtanh.pop %v2334
        %v2373 = vxor.u32 %v2335, 2147483648
        %v2374 = vmul.f32 %v2373, 1.442695
        %v2375 = vpow.pop %v2374
        %v2376 = vadd.f32 %v2375, 1.0
        %v2377 = vrcp.pop %v2376
        %v2378 = vmul.f32 1.0, %v2377
        %v2379 = vmul.f32 %v2371, %v2151
        %v2380 = vmul.f32 %v2365, %v2372
        %v2381 = vadd.f32 %v2379, %v2380
        %v2382 = vtanh.pop %v2381
        %v2383 = vmul.f32 %v2378, %v2382
        %v2384 = vpack.c.bf16 %v2359, %v2359
        %2385 = vmatprep.subr.bf16.mxu0 %v1731
        %2386 = vmatpush1.bf16.msra.mxu0 %v1730
        %2387 = vmatprep.subr.bf16.mxu0 %v1727
        %2388 = vmatpush1.bf16.msra.mxu0 %v1726
        %2389 = vmatprep.subr.bf16.mxu0 %v1723
        %2390 = vmatpush1.bf16.msra.mxu0 %v1722
        %2391 = vmatprep.subr.bf16.mxu0 %v1719
        %2392 = vmatpush1.bf16.msra.mxu0 %v1718
        %2393 = vmatprep.subr.bf16.mxu0 %v1715
        %2394 = vmatpush1.bf16.msra.mxu0 %v1714
        %2395 = vmatprep.subr.bf16.mxu0 %v1711
        %2396 = vmatpush1.bf16.msra.mxu0 %v1710
        %2397 = vmatprep.subr.bf16.mxu0 %v1707
        %2398 = vmatpush1.bf16.msra.mxu0 %v1706
        %2399 = vmatprep.subr.bf16.mxu0 %v1703
        %2400 = vmatpush1.bf16.msra.mxu0 %v1702
        %2401 = vmatprep.subr.bf16.mxu0 0
        %2402 = vmatpush2.bf16.msra.mxu0 0
        %2403 = vmatprep.subr.bf16.mxu0 0
        %2404 = vmatpush2.bf16.msra.mxu0 0
        %2405 = vmatprep.subr.bf16.mxu0 0
        %2406 = vmatpush2.bf16.msra.mxu0 0
        %2407 = vmatprep.subr.bf16.mxu0 0
        %2408 = vmatpush2.bf16.msra.mxu0 0
        %2409 = vmatprep.subr.bf16.mxu0 0
        %2410 = vmatpush2.bf16.msra.mxu0 0
        %2411 = vmatprep.subr.bf16.mxu0 0
        %2412 = vmatpush2.bf16.msra.mxu0 0
        %2413 = vmatprep.subr.bf16.mxu0 0
        %2414 = vmatpush2.bf16.msra.mxu0 0
        %2415 = vmatprep.subr.bf16.mxu0 0
        %2416 = vmatpush2.bf16.msra.mxu0 0
        %2417 = vmatprep.mubr.bf16.mxu0 0
        %2418 = vmatmul.mubr.bf16.gmra.mxu0 %v2384
        %v2419 = vpop.f32.mrf.mxu0
        %v2420 = vadd.f32 0.0, %v2419
        %v2421 = vpop.f32.mrf.mxu0
        %v2422 = vadd.f32 0.0, %v2421
        %v2423 = vpop.f32.mrf.mxu0
        %v2424 = vpop.f32.mrf.mxu0
        %2425 = vdwg.mxu0
        %2426 = vmatprep.subr.bf16.mxu0 %v1733
        %2427 = vmatpush1.bf16.msra.mxu0 %v1732
        %2428 = vmatprep.subr.bf16.mxu0 %v1729
        %2429 = vmatpush1.bf16.msra.mxu0 %v1728
        %2430 = vmatprep.subr.bf16.mxu0 %v1725
        %2431 = vmatpush1.bf16.msra.mxu0 %v1724
        %2432 = vmatprep.subr.bf16.mxu0 %v1721
        %2433 = vmatpush1.bf16.msra.mxu0 %v1720
        %2434 = vmatprep.subr.bf16.mxu0 %v1717
        %2435 = vmatpush1.bf16.msra.mxu0 %v1716
        %2436 = vmatprep.subr.bf16.mxu0 %v1713
        %2437 = vmatpush1.bf16.msra.mxu0 %v1712
        %2438 = vmatprep.subr.bf16.mxu0 %v1709
        %2439 = vmatpush1.bf16.msra.mxu0 %v1708
        %2440 = vmatprep.subr.bf16.mxu0 %v1705
        %2441 = vmatpush1.bf16.msra.mxu0 %v1704
        %2442 = vmatprep.subr.bf16.mxu0 0
        %2443 = vmatpush2.bf16.msra.mxu0 0
        %2444 = vmatprep.subr.bf16.mxu0 0
        %2445 = vmatpush2.bf16.msra.mxu0 0
        %2446 = vmatprep.subr.bf16.mxu0 0
        %2447 = vmatpush2.bf16.msra.mxu0 0
        %2448 = vmatprep.subr.bf16.mxu0 0
        %2449 = vmatpush2.bf16.msra.mxu0 0
        %2450 = vmatprep.subr.bf16.mxu0 0
        %2451 = vmatpush2.bf16.msra.mxu0 0
        %2452 = vmatprep.subr.bf16.mxu0 0
        %2453 = vmatpush2.bf16.msra.mxu0 0
        %2454 = vmatprep.subr.bf16.mxu0 0
        %2455 = vmatpush2.bf16.msra.mxu0 0
        %2456 = vmatprep.subr.bf16.mxu0 0
        %2457 = vmatpush2.bf16.msra.mxu0 0
        %2458 = vmatprep.mubr.bf16.mxu0 0
        %2459 = vmatmul.mubr.bf16.gmra.mxu0 %v2384
        %v2460 = vpop.f32.mrf.mxu0
        %v2461 = vadd.f32 0.0, %v2460
        %v2462 = vpop.f32.mrf.mxu0
        %v2463 = vadd.f32 0.0, %v2462
        %v2464 = vpop.f32.mrf.mxu0
        %v2465 = vpop.f32.mrf.mxu0
        %2466 = vdwg.mxu0
        %v2467 = vpack.c.bf16 %v2383, %v2383
        %2468 = vmatprep.subr.bf16.mxu0 %v1973
        %2469 = vmatpush1.bf16.msra.mxu0 %v1972
        %2470 = vmatprep.subr.bf16.mxu0 %v1969
        %2471 = vmatpush1.bf16.msra.mxu0 %v1968
        %2472 = vmatprep.subr.bf16.mxu0 %v1965
        %2473 = vmatpush1.bf16.msra.mxu0 %v1964
        %2474 = vmatprep.subr.bf16.mxu0 %v1961
        %2475 = vmatpush1.bf16.msra.mxu0 %v1960
        %2476 = vmatprep.subr.bf16.mxu0 %v1957
        %2477 = vmatpush1.bf16.msra.mxu0 %v1956
        %2478 = vmatprep.subr.bf16.mxu0 %v1953
        %2479 = vmatpush1.bf16.msra.mxu0 %v1952
        %2480 = vmatprep.subr.bf16.mxu0 %v1949
        %2481 = vmatpush1.bf16.msra.mxu0 %v1948
        %2482 = vmatprep.subr.bf16.mxu0 %v1945
        %2483 = vmatpush1.bf16.msra.mxu0 %v1944
        %2484 = vmatprep.subr.bf16.mxu0 0
        %2485 = vmatpush2.bf16.msra.mxu0 0
        %2486 = vmatprep.subr.bf16.mxu0 0
        %2487 = vmatpush2.bf16.msra.mxu0 0
        %2488 = vmatprep.subr.bf16.mxu0 0
        %2489 = vmatpush2.bf16.msra.mxu0 0
        %2490 = vmatprep.subr.bf16.mxu0 0
        %2491 = vmatpush2.bf16.msra.mxu0 0
        %2492 = vmatprep.subr.bf16.mxu0 0
        %2493 = vmatpush2.bf16.msra.mxu0 0
        %2494 = vmatprep.subr.bf16.mxu0 0
        %2495 = vmatpush2.bf16.msra.mxu0 0
        %2496 = vmatprep.subr.bf16.mxu0 0
        %2497 = vmatpush2.bf16.msra.mxu0 0
        %2498 = vmatprep.subr.bf16.mxu0 0
        %2499 = vmatpush2.bf16.msra.mxu0 0
        %2500 = vmatprep.mubr.bf16.mxu0 0
        %2501 = vmatmul.mubr.bf16.gmra.mxu0 %v2467
        %v2502 = vpop.f32.mrf.mxu0
        %v2503 = vadd.f32 0.0, %v2502
        %v2504 = vpop.f32.mrf.mxu0
        %v2505 = vadd.f32 0.0, %v2504
        %v2506 = vpop.f32.mrf.mxu0
        %v2507 = vpop.f32.mrf.mxu0
        %2508 = vdwg.mxu0
        %2509 = vmatprep.subr.bf16.mxu0 %v1975
        %2510 = vmatpush1.bf16.msra.mxu0 %v1974
        %2511 = vmatprep.subr.bf16.mxu0 %v1971
        %2512 = vmatpush1.bf16.msra.mxu0 %v1970
        %2513 = vmatprep.subr.bf16.mxu0 %v1967
        %2514 = vmatpush1.bf16.msra.mxu0 %v1966
        %2515 = vmatprep.subr.bf16.mxu0 %v1963
        %2516 = vmatpush1.bf16.msra.mxu0 %v1962
        %2517 = vmatprep.subr.bf16.mxu0 %v1959
        %2518 = vmatpush1.bf16.msra.mxu0 %v1958
        %2519 = vmatprep.subr.bf16.mxu0 %v1955
        %2520 = vmatpush1.bf16.msra.mxu0 %v1954
        %2521 = vmatprep.subr.bf16.mxu0 %v1951
        %2522 = vmatpush1.bf16.msra.mxu0 %v1950
        %2523 = vmatprep.subr.bf16.mxu0 %v1947
        %2524 = vmatpush1.bf16.msra.mxu0 %v1946
        %2525 = vmatprep.subr.bf16.mxu0 0
        %2526 = vmatpush2.bf16.msra.mxu0 0
        %2527 = vmatprep.subr.bf16.mxu0 0
        %2528 = vmatpush2.bf16.msra.mxu0 0
        %2529 = vmatprep.subr.bf16.mxu0 0
        %2530 = vmatpush2.bf16.msra.mxu0 0
        %2531 = vmatprep.subr.bf16.mxu0 0
        %2532 = vmatpush2.bf16.msra.mxu0 0
        %2533 = vmatprep.subr.bf16.mxu0 0
        %2534 = vmatpush2.bf16.msra.mxu0 0
        %2535 = vmatprep.subr.bf16.mxu0 0
        %2536 = vmatpush2.bf16.msra.mxu0 0
        %2537 = vmatprep.subr.bf16.mxu0 0
        %2538 = vmatpush2.bf16.msra.mxu0 0
        %2539 = vmatprep.subr.bf16.mxu0 0
        %2540 = vmatpush2.bf16.msra.mxu0 0
        %2541 = vmatprep.mubr.bf16.mxu0 0
        %2542 = vmatmul.mubr.bf16.gmra.mxu0 %v2467
        %v2543 = vpop.f32.mrf.mxu0
        %v2544 = vadd.f32 0.0, %v2543
        %v2545 = vpop.f32.mrf.mxu0
        %v2546 = vadd.f32 0.0, %v2545
        %v2547 = vpop.f32.mrf.mxu0
        %v2548 = vpop.f32.mrf.mxu0
        %2549 = vdwg.mxu0
        %v2550 = vld [vmem:[#allocation3 + $0x80] sm:$0xff]
        %v2551 = vld [vmem:[#allocation3 + $0x88] sm:$0xff]
        %v2552 = vld [vmem:[#allocation3 + $0x90] sm:$0xff]
        %v2553 = vld [vmem:[#allocation3 + $0x98] sm:$0xff]
        %v2554 = vadd.f32 %v2550, %v2420
        %v2555 = vadd.f32 %v2551, %v2422
        %v2556 = vadd.f32 %v2552, %v2461
        %v2557 = vadd.f32 %v2553, %v2463
        %v2558 = vld [vmem:[#allocation3 + $0x160] sm:$0xff]
        %v2559 = vld [vmem:[#allocation3 + $0x168] sm:$0xff]
        %v2560 = vld [vmem:[#allocation3 + $0x170] sm:$0xff]
        %v2561 = vld [vmem:[#allocation3 + $0x178] sm:$0xff]
        %v2562 = vadd.f32 %v2558, %v2503
        %v2563 = vadd.f32 %v2559, %v2505
        %v2564 = vadd.f32 %v2560, %v2544
        %v2565 = vadd.f32 %v2561, %v2546
        %v2566 = vxor.u32 %v2554, 2147483648
        %v2567 = vmul.f32 %v2566, 1.442695
        %v2568 = vpow.pop %v2567
        %v2569 = vadd.f32 %v2568, 1.0
        %v2570 = vrcp.pop %v2569
        %v2571 = vmul.f32 1.0, %v2570
        %v2572 = vxor.u32 %v2555, 2147483648
        %v2573 = vmul.f32 %v2572, 1.442695
        %v2574 = vpow.pop %v2573
        %v2575 = vadd.f32 %v2574, 1.0
        %v2576 = vrcp.pop %v2575
        %v2577 = vmul.f32 1.0, %v2576
        %v2578 = vtanh.pop %v2556
        %v2579 = vxor.u32 %v2557, 2147483648
        %v2580 = vmul.f32 %v2579, 1.442695
        %v2581 = vpow.pop %v2580
        %v2582 = vadd.f32 %v2581, 1.0
        %v2583 = vrcp.pop %v2582
        %v2584 = vmul.f32 1.0, %v2583
        %v2585 = vmul.f32 %v2577, %v2357
        %v2586 = vmul.f32 %v2571, %v2578
        %v2587 = vadd.f32 %v2585, %v2586
        %v2588 = vtanh.pop %v2587
        %v2589 = vmul.f32 %v2584, %v2588
        %v2590 = vxor.u32 %v2562, 2147483648
        %v2591 = vmul.f32 %v2590, 1.442695
        %v2592 = vpow.pop %v2591
        %v2593 = vadd.f32 %v2592, 1.0
        %v2594 = vrcp.pop %v2593
        %v2595 = vmul.f32 1.0, %v2594
        %v2596 = vxor.u32 %v2563, 2147483648
        %v2597 = vmul.f32 %v2596, 1.442695
        %v2598 = vpow.pop %v2597
        %v2599 = vadd.f32 %v2598, 1.0
        %v2600 = vrcp.pop %v2599
        %v2601 = vmul.f32 1.0, %v2600
        %v2602 = vtanh.pop %v2564
        %v2603 = vxor.u32 %v2565, 2147483648
        %v2604 = vmul.f32 %v2603, 1.442695
        %v2605 = vpow.pop %v2604
        %v2606 = vadd.f32 %v2605, 1.0
        %v2607 = vrcp.pop %v2606
        %v2608 = vmul.f32 1.0, %v2607
        %v2609 = vmul.f32 %v2601, %v2381
        %v2610 = vmul.f32 %v2595, %v2602
        %v2611 = vadd.f32 %v2609, %v2610
        %v2612 = vtanh.pop %v2611
        %v2613 = vmul.f32 %v2608, %v2612
        %v2614 = vpack.c.bf16 %v2589, %v2589
        %2615 = vmatprep.subr.bf16.mxu0 %v1731
        %2616 = vmatpush1.bf16.msra.mxu0 %v1730
        %2617 = vmatprep.subr.bf16.mxu0 %v1727
        %2618 = vmatpush1.bf16.msra.mxu0 %v1726
        %2619 = vmatprep.subr.bf16.mxu0 %v1723
        %2620 = vmatpush1.bf16.msra.mxu0 %v1722
        %2621 = vmatprep.subr.bf16.mxu0 %v1719
        %2622 = vmatpush1.bf16.msra.mxu0 %v1718
        %2623 = vmatprep.subr.bf16.mxu0 %v1715
        %2624 = vmatpush1.bf16.msra.mxu0 %v1714
        %2625 = vmatprep.subr.bf16.mxu0 %v1711
        %2626 = vmatpush1.bf16.msra.mxu0 %v1710
        %2627 = vmatprep.subr.bf16.mxu0 %v1707
        %2628 = vmatpush1.bf16.msra.mxu0 %v1706
        %2629 = vmatprep.subr.bf16.mxu0 %v1703
        %2630 = vmatpush1.bf16.msra.mxu0 %v1702
        %2631 = vmatprep.subr.bf16.mxu0 0
        %2632 = vmatpush2.bf16.msra.mxu0 0
        %2633 = vmatprep.subr.bf16.mxu0 0
        %2634 = vmatpush2.bf16.msra.mxu0 0
        %2635 = vmatprep.subr.bf16.mxu0 0
        %2636 = vmatpush2.bf16.msra.mxu0 0
        %2637 = vmatprep.subr.bf16.mxu0 0
        %2638 = vmatpush2.bf16.msra.mxu0 0
        %2639 = vmatprep.subr.bf16.mxu0 0
        %2640 = vmatpush2.bf16.msra.mxu0 0
        %2641 = vmatprep.subr.bf16.mxu0 0
        %2642 = vmatpush2.bf16.msra.mxu0 0
        %2643 = vmatprep.subr.bf16.mxu0 0
        %2644 = vmatpush2.bf16.msra.mxu0 0
        %2645 = vmatprep.subr.bf16.mxu0 0
        %2646 = vmatpush2.bf16.msra.mxu0 0
        %2647 = vmatprep.mubr.bf16.mxu0 0
        %2648 = vmatmul.mubr.bf16.gmra.mxu0 %v2614
        %v2649 = vpop.f32.mrf.mxu0
        %v2650 = vadd.f32 0.0, %v2649
        %v2651 = vpop.f32.mrf.mxu0
        %v2652 = vadd.f32 0.0, %v2651
        %v2653 = vpop.f32.mrf.mxu0
        %v2654 = vpop.f32.mrf.mxu0
        %2655 = vdwg.mxu0
        %2656 = vmatprep.subr.bf16.mxu0 %v1733
        %2657 = vmatpush1.bf16.msra.mxu0 %v1732
        %2658 = vmatprep.subr.bf16.mxu0 %v1729
        %2659 = vmatpush1.bf16.msra.mxu0 %v1728
        %2660 = vmatprep.subr.bf16.mxu0 %v1725
        %2661 = vmatpush1.bf16.msra.mxu0 %v1724
        %2662 = vmatprep.subr.bf16.mxu0 %v1721
        %2663 = vmatpush1.bf16.msra.mxu0 %v1720
        %2664 = vmatprep.subr.bf16.mxu0 %v1717
        %2665 = vmatpush1.bf16.msra.mxu0 %v1716
        %2666 = vmatprep.subr.bf16.mxu0 %v1713
        %2667 = vmatpush1.bf16.msra.mxu0 %v1712
        %2668 = vmatprep.subr.bf16.mxu0 %v1709
        %2669 = vmatpush1.bf16.msra.mxu0 %v1708
        %2670 = vmatprep.subr.bf16.mxu0 %v1705
        %2671 = vmatpush1.bf16.msra.mxu0 %v1704
        %2672 = vmatprep.subr.bf16.mxu0 0
        %2673 = vmatpush2.bf16.msra.mxu0 0
        %2674 = vmatprep.subr.bf16.mxu0 0
        %2675 = vmatpush2.bf16.msra.mxu0 0
        %2676 = vmatprep.subr.bf16.mxu0 0
        %2677 = vmatpush2.bf16.msra.mxu0 0
        %2678 = vmatprep.subr.bf16.mxu0 0
        %2679 = vmatpush2.bf16.msra.mxu0 0
        %2680 = vmatprep.subr.bf16.mxu0 0
        %2681 = vmatpush2.bf16.msra.mxu0 0
        %2682 = vmatprep.subr.bf16.mxu0 0
        %2683 = vmatpush2.bf16.msra.mxu0 0
        %2684 = vmatprep.subr.bf16.mxu0 0
        %2685 = vmatpush2.bf16.msra.mxu0 0
        %2686 = vmatprep.subr.bf16.mxu0 0
        %2687 = vmatpush2.bf16.msra.mxu0 0
        %2688 = vmatprep.mubr.bf16.mxu0 0
        %2689 = vmatmul.mubr.bf16.gmra.mxu0 %v2614
        %v2690 = vpop.f32.mrf.mxu0
        %v2691 = vadd.f32 0.0, %v2690
        %v2692 = vpop.f32.mrf.mxu0
        %v2693 = vadd.f32 0.0, %v2692
        %v2694 = vpop.f32.mrf.mxu0
        %v2695 = vpop.f32.mrf.mxu0
        %2696 = vdwg.mxu0
        %v2697 = vpack.c.bf16 %v2613, %v2613
        %2698 = vmatprep.subr.bf16.mxu0 %v1973
        %2699 = vmatpush1.bf16.msra.mxu0 %v1972
        %2700 = vmatprep.subr.bf16.mxu0 %v1969
        %2701 = vmatpush1.bf16.msra.mxu0 %v1968
        %2702 = vmatprep.subr.bf16.mxu0 %v1965
        %2703 = vmatpush1.bf16.msra.mxu0 %v1964
        %2704 = vmatprep.subr.bf16.mxu0 %v1961
        %2705 = vmatpush1.bf16.msra.mxu0 %v1960
        %2706 = vmatprep.subr.bf16.mxu0 %v1957
        %2707 = vmatpush1.bf16.msra.mxu0 %v1956
        %2708 = vmatprep.subr.bf16.mxu0 %v1953
        %2709 = vmatpush1.bf16.msra.mxu0 %v1952
        %2710 = vmatprep.subr.bf16.mxu0 %v1949
        %2711 = vmatpush1.bf16.msra.mxu0 %v1948
        %2712 = vmatprep.subr.bf16.mxu0 %v1945
        %2713 = vmatpush1.bf16.msra.mxu0 %v1944
        %2714 = vmatprep.subr.bf16.mxu0 0
        %2715 = vmatpush2.bf16.msra.mxu0 0
        %2716 = vmatprep.subr.bf16.mxu0 0
        %2717 = vmatpush2.bf16.msra.mxu0 0
        %2718 = vmatprep.subr.bf16.mxu0 0
        %2719 = vmatpush2.bf16.msra.mxu0 0
        %2720 = vmatprep.subr.bf16.mxu0 0
        %2721 = vmatpush2.bf16.msra.mxu0 0
        %2722 = vmatprep.subr.bf16.mxu0 0
        %2723 = vmatpush2.bf16.msra.mxu0 0
        %2724 = vmatprep.subr.bf16.mxu0 0
        %2725 = vmatpush2.bf16.msra.mxu0 0
        %2726 = vmatprep.subr.bf16.mxu0 0
        %2727 = vmatpush2.bf16.msra.mxu0 0
        %2728 = vmatprep.subr.bf16.mxu0 0
        %2729 = vmatpush2.bf16.msra.mxu0 0
        %2730 = vmatprep.mubr.bf16.mxu0 0
        %2731 = vmatmul.mubr.bf16.gmra.mxu0 %v2697
        %v2732 = vpop.f32.mrf.mxu0
        %v2733 = vadd.f32 0.0, %v2732
        %v2734 = vpop.f32.mrf.mxu0
        %v2735 = vadd.f32 0.0, %v2734
        %v2736 = vpop.f32.mrf.mxu0
        %v2737 = vpop.f32.mrf.mxu0
        %2738 = vdwg.mxu0
        %2739 = vmatprep.subr.bf16.mxu0 %v1975
        %2740 = vmatpush1.bf16.msra.mxu0 %v1974
        %2741 = vmatprep.subr.bf16.mxu0 %v1971
        %2742 = vmatpush1.bf16.msra.mxu0 %v1970
        %2743 = vmatprep.subr.bf16.mxu0 %v1967
        %2744 = vmatpush1.bf16.msra.mxu0 %v1966
        %2745 = vmatprep.subr.bf16.mxu0 %v1963
        %2746 = vmatpush1.bf16.msra.mxu0 %v1962
        %2747 = vmatprep.subr.bf16.mxu0 %v1959
        %2748 = vmatpush1.bf16.msra.mxu0 %v1958
        %2749 = vmatprep.subr.bf16.mxu0 %v1955
        %2750 = vmatpush1.bf16.msra.mxu0 %v1954
        %2751 = vmatprep.subr.bf16.mxu0 %v1951
        %2752 = vmatpush1.bf16.msra.mxu0 %v1950
        %2753 = vmatprep.subr.bf16.mxu0 %v1947
        %2754 = vmatpush1.bf16.msra.mxu0 %v1946
        %2755 = vmatprep.subr.bf16.mxu0 0
        %2756 = vmatpush2.bf16.msra.mxu0 0
        %2757 = vmatprep.subr.bf16.mxu0 0
        %2758 = vmatpush2.bf16.msra.mxu0 0
        %2759 = vmatprep.subr.bf16.mxu0 0
        %2760 = vmatpush2.bf16.msra.mxu0 0
        %2761 = vmatprep.subr.bf16.mxu0 0
        %2762 = vmatpush2.bf16.msra.mxu0 0
        %2763 = vmatprep.subr.bf16.mxu0 0
        %2764 = vmatpush2.bf16.msra.mxu0 0
        %2765 = vmatprep.subr.bf16.mxu0 0
        %2766 = vmatpush2.bf16.msra.mxu0 0
        %2767 = vmatprep.subr.bf16.mxu0 0
        %2768 = vmatpush2.bf16.msra.mxu0 0
        %2769 = vmatprep.subr.bf16.mxu0 0
        %2770 = vmatpush2.bf16.msra.mxu0 0
        %2771 = vmatprep.mubr.bf16.mxu0 0
        %2772 = vmatmul.mubr.bf16.gmra.mxu0 %v2697
        %v2773 = vpop.f32.mrf.mxu0
        %v2774 = vadd.f32 0.0, %v2773
        %v2775 = vpop.f32.mrf.mxu0
        %v2776 = vadd.f32 0.0, %v2775
        %v2777 = vpop.f32.mrf.mxu0
        %v2778 = vpop.f32.mrf.mxu0
        %2779 = vdwg.mxu0
        %v2780 = vld [vmem:[#allocation3 + $0xc0] sm:$0xff]
        %v2781 = vld [vmem:[#allocation3 + $0xc8] sm:$0xff]
        %v2782 = vld [vmem:[#allocation3 + $0xd0] sm:$0xff]
        %v2783 = vld [vmem:[#allocation3 + $0xd8] sm:$0xff]
        %v2784 = vadd.f32 %v2780, %v2650
        %v2785 = vadd.f32 %v2781, %v2652
        %v2786 = vadd.f32 %v2782, %v2691
        %v2787 = vadd.f32 %v2783, %v2693
        %v2788 = vld [vmem:[#allocation3 + $0x120] sm:$0xff]
        %v2789 = vld [vmem:[#allocation3 + $0x128] sm:$0xff]
        %v2790 = vld [vmem:[#allocation3 + $0x130] sm:$0xff]
        %v2791 = vld [vmem:[#allocation3 + $0x138] sm:$0xff]
        %v2792 = vadd.f32 %v2788, %v2733
        %v2793 = vadd.f32 %v2789, %v2735
        %v2794 = vadd.f32 %v2790, %v2774
        %v2795 = vadd.f32 %v2791, %v2776
        %v2796 = vxor.u32 %v2784, 2147483648
        %v2797 = vmul.f32 %v2796, 1.442695
        %v2798 = vpow.pop %v2797
        %v2799 = vadd.f32 %v2798, 1.0
        %v2800 = vrcp.pop %v2799
        %v2801 = vmul.f32 1.0, %v2800
        %v2802 = vxor.u32 %v2785, 2147483648
        %v2803 = vmul.f32 %v2802, 1.442695
        %v2804 = vpow.pop %v2803
        %v2805 = vadd.f32 %v2804, 1.0
        %v2806 = vrcp.pop %v2805
        %v2807 = vmul.f32 1.0, %v2806
        %v2808 = vtanh.pop %v2786
        %v2809 = vxor.u32 %v2787, 2147483648
        %v2810 = vmul.f32 %v2809, 1.442695
        %v2811 = vpow.pop %v2810
        %v2812 = vadd.f32 %v2811, 1.0
        %v2813 = vrcp.pop %v2812
        %v2814 = vmul.f32 1.0, %v2813
        %v2815 = vmul.f32 %v2807, %v2587
        %v2816 = vmul.f32 %v2801, %v2808
        %v2817 = vadd.f32 %v2815, %v2816
        %v2818 = vtanh.pop %v2817
        %v2819 = vmul.f32 %v2814, %v2818
        %v2820 = vxor.u32 %v2792, 2147483648
        %v2821 = vmul.f32 %v2820, 1.442695
        %v2822 = vpow.pop %v2821
        %v2823 = vadd.f32 %v2822, 1.0
        %v2824 = vrcp.pop %v2823
        %v2825 = vmul.f32 1.0, %v2824
        %v2826 = vxor.u32 %v2793, 2147483648
        %v2827 = vmul.f32 %v2826, 1.442695
        %v2828 = vpow.pop %v2827
        %v2829 = vadd.f32 %v2828, 1.0
        %v2830 = vrcp.pop %v2829
        %v2831 = vmul.f32 1.0, %v2830
        %v2832 = vtanh.pop %v2794
        %v2833 = vxor.u32 %v2795, 2147483648
        %v2834 = vmul.f32 %v2833, 1.442695
        %v2835 = vpow.pop %v2834
        %v2836 = vadd.f32 %v2835, 1.0
        %v2837 = vrcp.pop %v2836
        %v2838 = vmul.f32 1.0, %v2837
        %v2839 = vmul.f32 %v2831, %v2611
        %v2840 = vmul.f32 %v2825, %v2832
        %v2841 = vadd.f32 %v2839, %v2840
        %v2842 = vtanh.pop %v2841
        %v2843 = vmul.f32 %v2838, %v2842
        %v2844 = vpack.c.bf16 %v2819, %v2819
        %2845 = vmatprep.subr.bf16.mxu0 %v1731
        %2846 = vmatpush1.bf16.msra.mxu0 %v1730
        %2847 = vmatprep.subr.bf16.mxu0 %v1727
        %2848 = vmatpush1.bf16.msra.mxu0 %v1726
        %2849 = vmatprep.subr.bf16.mxu0 %v1723
        %2850 = vmatpush1.bf16.msra.mxu0 %v1722
        %2851 = vmatprep.subr.bf16.mxu0 %v1719
        %2852 = vmatpush1.bf16.msra.mxu0 %v1718
        %2853 = vmatprep.subr.bf16.mxu0 %v1715
        %2854 = vmatpush1.bf16.msra.mxu0 %v1714
        %2855 = vmatprep.subr.bf16.mxu0 %v1711
        %2856 = vmatpush1.bf16.msra.mxu0 %v1710
        %2857 = vmatprep.subr.bf16.mxu0 %v1707
        %2858 = vmatpush1.bf16.msra.mxu0 %v1706
        %2859 = vmatprep.subr.bf16.mxu0 %v1703
        %2860 = vmatpush1.bf16.msra.mxu0 %v1702
        %2861 = vmatprep.subr.bf16.mxu0 0
        %2862 = vmatpush2.bf16.msra.mxu0 0
        %2863 = vmatprep.subr.bf16.mxu0 0
        %2864 = vmatpush2.bf16.msra.mxu0 0
        %2865 = vmatprep.subr.bf16.mxu0 0
        %2866 = vmatpush2.bf16.msra.mxu0 0
        %2867 = vmatprep.subr.bf16.mxu0 0
        %2868 = vmatpush2.bf16.msra.mxu0 0
        %2869 = vmatprep.subr.bf16.mxu0 0
        %2870 = vmatpush2.bf16.msra.mxu0 0
        %2871 = vmatprep.subr.bf16.mxu0 0
        %2872 = vmatpush2.bf16.msra.mxu0 0
        %2873 = vmatprep.subr.bf16.mxu0 0
        %2874 = vmatpush2.bf16.msra.mxu0 0
        %2875 = vmatprep.subr.bf16.mxu0 0
        %2876 = vmatpush2.bf16.msra.mxu0 0
        %2877 = vmatprep.mubr.bf16.mxu0 0
        %2878 = vmatmul.mubr.bf16.gmra.mxu0 %v2844
        %v2879 = vpop.f32.mrf.mxu0
        %v2880 = vadd.f32 0.0, %v2879
        %v2881 = vpop.f32.mrf.mxu0
        %v2882 = vadd.f32 0.0, %v2881
        %v2883 = vpop.f32.mrf.mxu0
        %v2884 = vpop.f32.mrf.mxu0
        %2885 = vdwg.mxu0
        %2886 = vmatprep.subr.bf16.mxu0 %v1733
        %2887 = vmatpush1.bf16.msra.mxu0 %v1732
        %2888 = vmatprep.subr.bf16.mxu0 %v1729
        %2889 = vmatpush1.bf16.msra.mxu0 %v1728
        %2890 = vmatprep.subr.bf16.mxu0 %v1725
        %2891 = vmatpush1.bf16.msra.mxu0 %v1724
        %2892 = vmatprep.subr.bf16.mxu0 %v1721
        %2893 = vmatpush1.bf16.msra.mxu0 %v1720
        %2894 = vmatprep.subr.bf16.mxu0 %v1717
        %2895 = vmatpush1.bf16.msra.mxu0 %v1716
        %2896 = vmatprep.subr.bf16.mxu0 %v1713
        %2897 = vmatpush1.bf16.msra.mxu0 %v1712
        %2898 = vmatprep.subr.bf16.mxu0 %v1709
        %2899 = vmatpush1.bf16.msra.mxu0 %v1708
        %2900 = vmatprep.subr.bf16.mxu0 %v1705
        %2901 = vmatpush1.bf16.msra.mxu0 %v1704
        %2902 = vmatprep.subr.bf16.mxu0 0
        %2903 = vmatpush2.bf16.msra.mxu0 0
        %2904 = vmatprep.subr.bf16.mxu0 0
        %2905 = vmatpush2.bf16.msra.mxu0 0
        %2906 = vmatprep.subr.bf16.mxu0 0
        %2907 = vmatpush2.bf16.msra.mxu0 0
        %2908 = vmatprep.subr.bf16.mxu0 0
        %2909 = vmatpush2.bf16.msra.mxu0 0
        %2910 = vmatprep.subr.bf16.mxu0 0
        %2911 = vmatpush2.bf16.msra.mxu0 0
        %2912 = vmatprep.subr.bf16.mxu0 0
        %2913 = vmatpush2.bf16.msra.mxu0 0
        %2914 = vmatprep.subr.bf16.mxu0 0
        %2915 = vmatpush2.bf16.msra.mxu0 0
        %2916 = vmatprep.subr.bf16.mxu0 0
        %2917 = vmatpush2.bf16.msra.mxu0 0
        %2918 = vmatprep.mubr.bf16.mxu0 0
        %2919 = vmatmul.mubr.bf16.gmra.mxu0 %v2844
        %v2920 = vpop.f32.mrf.mxu0
        %v2921 = vadd.f32 0.0, %v2920
        %v2922 = vpop.f32.mrf.mxu0
        %v2923 = vadd.f32 0.0, %v2922
        %v2924 = vpop.f32.mrf.mxu0
        %v2925 = vpop.f32.mrf.mxu0
        %2926 = vdwg.mxu0
        %v2927 = vpack.c.bf16 %v2843, %v2843
        %2928 = vmatprep.subr.bf16.mxu0 %v1973
        %2929 = vmatpush1.bf16.msra.mxu0 %v1972
        %2930 = vmatprep.subr.bf16.mxu0 %v1969
        %2931 = vmatpush1.bf16.msra.mxu0 %v1968
        %2932 = vmatprep.subr.bf16.mxu0 %v1965
        %2933 = vmatpush1.bf16.msra.mxu0 %v1964
        %2934 = vmatprep.subr.bf16.mxu0 %v1961
        %2935 = vmatpush1.bf16.msra.mxu0 %v1960
        %2936 = vmatprep.subr.bf16.mxu0 %v1957
        %2937 = vmatpush1.bf16.msra.mxu0 %v1956
        %2938 = vmatprep.subr.bf16.mxu0 %v1953
        %2939 = vmatpush1.bf16.msra.mxu0 %v1952
        %2940 = vmatprep.subr.bf16.mxu0 %v1949
        %2941 = vmatpush1.bf16.msra.mxu0 %v1948
        %2942 = vmatprep.subr.bf16.mxu0 %v1945
        %2943 = vmatpush1.bf16.msra.mxu0 %v1944
        %2944 = vmatprep.subr.bf16.mxu0 0
        %2945 = vmatpush2.bf16.msra.mxu0 0
        %2946 = vmatprep.subr.bf16.mxu0 0
        %2947 = vmatpush2.bf16.msra.mxu0 0
        %2948 = vmatprep.subr.bf16.mxu0 0
        %2949 = vmatpush2.bf16.msra.mxu0 0
        %2950 = vmatprep.subr.bf16.mxu0 0
        %2951 = vmatpush2.bf16.msra.mxu0 0
        %2952 = vmatprep.subr.bf16.mxu0 0
        %2953 = vmatpush2.bf16.msra.mxu0 0
        %2954 = vmatprep.subr.bf16.mxu0 0
        %2955 = vmatpush2.bf16.msra.mxu0 0
        %2956 = vmatprep.subr.bf16.mxu0 0
        %2957 = vmatpush2.bf16.msra.mxu0 0
        %2958 = vmatprep.subr.bf16.mxu0 0
        %2959 = vmatpush2.bf16.msra.mxu0 0
        %2960 = vmatprep.mubr.bf16.mxu0 0
        %2961 = vmatmul.mubr.bf16.gmra.mxu0 %v2927
        %v2962 = vpop.f32.mrf.mxu0
        %v2963 = vadd.f32 0.0, %v2962
        %v2964 = vpop.f32.mrf.mxu0
        %v2965 = vadd.f32 0.0, %v2964
        %v2966 = vpop.f32.mrf.mxu0
        %v2967 = vpop.f32.mrf.mxu0
        %2968 = vdwg.mxu0
        %2969 = vmatprep.subr.bf16.mxu0 %v1975
        %2970 = vmatpush1.bf16.msra.mxu0 %v1974
        %2971 = vmatprep.subr.bf16.mxu0 %v1971
        %2972 = vmatpush1.bf16.msra.mxu0 %v1970
        %2973 = vmatprep.subr.bf16.mxu0 %v1967
        %2974 = vmatpush1.bf16.msra.mxu0 %v1966
        %2975 = vmatprep.subr.bf16.mxu0 %v1963
        %2976 = vmatpush1.bf16.msra.mxu0 %v1962
        %2977 = vmatprep.subr.bf16.mxu0 %v1959
        %2978 = vmatpush1.bf16.msra.mxu0 %v1958
        %2979 = vmatprep.subr.bf16.mxu0 %v1955
        %2980 = vmatpush1.bf16.msra.mxu0 %v1954
        %2981 = vmatprep.subr.bf16.mxu0 %v1951
        %2982 = vmatpush1.bf16.msra.mxu0 %v1950
        %2983 = vmatprep.subr.bf16.mxu0 %v1947
        %2984 = vmatpush1.bf16.msra.mxu0 %v1946
        %2985 = vmatprep.subr.bf16.mxu0 0
        %2986 = vmatpush2.bf16.msra.mxu0 0
        %2987 = vmatprep.subr.bf16.mxu0 0
        %2988 = vmatpush2.bf16.msra.mxu0 0
        %2989 = vmatprep.subr.bf16.mxu0 0
        %2990 = vmatpush2.bf16.msra.mxu0 0
        %2991 = vmatprep.subr.bf16.mxu0 0
        %2992 = vmatpush2.bf16.msra.mxu0 0
        %2993 = vmatprep.subr.bf16.mxu0 0
        %2994 = vmatpush2.bf16.msra.mxu0 0
        %2995 = vmatprep.subr.bf16.mxu0 0
        %2996 = vmatpush2.bf16.msra.mxu0 0
        %2997 = vmatprep.subr.bf16.mxu0 0
        %2998 = vmatpush2.bf16.msra.mxu0 0
        %2999 = vmatprep.subr.bf16.mxu0 0
        %3000 = vmatpush2.bf16.msra.mxu0 0
        %3001 = vmatprep.mubr.bf16.mxu0 0
        %3002 = vmatmul.mubr.bf16.gmra.mxu0 %v2927
        %v3003 = vpop.f32.mrf.mxu0
        %v3004 = vadd.f32 0.0, %v3003
        %v3005 = vpop.f32.mrf.mxu0
        %v3006 = vadd.f32 0.0, %v3005
        %v3007 = vpop.f32.mrf.mxu0
        %v3008 = vpop.f32.mrf.mxu0
        %3009 = vdwg.mxu0
        %v3010 = vld [vmem:[#allocation3 + $0x100] sm:$0xff]
        %v3011 = vld [vmem:[#allocation3 + $0x108] sm:$0xff]
        %v3012 = vld [vmem:[#allocation3 + $0x110] sm:$0xff]
        %v3013 = vld [vmem:[#allocation3 + $0x118] sm:$0xff]
        %v3014 = vadd.f32 %v3010, %v2880
        %v3015 = vadd.f32 %v3011, %v2882
        %v3016 = vadd.f32 %v3012, %v2921
        %v3017 = vadd.f32 %v3013, %v2923
        %v3018 = vld [vmem:[#allocation3 + $0xe0] sm:$0xff]
        %v3019 = vld [vmem:[#allocation3 + $0xe8] sm:$0xff]
        %v3020 = vld [vmem:[#allocation3 + $0xf0] sm:$0xff]
        %v3021 = vld [vmem:[#allocation3 + $0xf8] sm:$0xff]
        %v3022 = vadd.f32 %v3018, %v2963
        %v3023 = vadd.f32 %v3019, %v2965
        %v3024 = vadd.f32 %v3020, %v3004
        %v3025 = vadd.f32 %v3021, %v3006
        %v3026 = vxor.u32 %v3014, 2147483648
        %v3027 = vmul.f32 %v3026, 1.442695
        %v3028 = vpow.pop %v3027
        %v3029 = vadd.f32 %v3028, 1.0
        %v3030 = vrcp.pop %v3029
        %v3031 = vmul.f32 1.0, %v3030
        %v3032 = vxor.u32 %v3015, 2147483648
        %v3033 = vmul.f32 %v3032, 1.442695
        %v3034 = vpow.pop %v3033
        %v3035 = vadd.f32 %v3034, 1.0
        %v3036 = vrcp.pop %v3035
        %v3037 = vmul.f32 1.0, %v3036
        %v3038 = vtanh.pop %v3016
        %v3039 = vxor.u32 %v3017, 2147483648
        %v3040 = vmul.f32 %v3039, 1.442695
        %v3041 = vpow.pop %v3040
        %v3042 = vadd.f32 %v3041, 1.0
        %v3043 = vrcp.pop %v3042
        %v3044 = vmul.f32 1.0, %v3043
        %v3045 = vmul.f32 %v3037, %v2817
        %v3046 = vmul.f32 %v3031, %v3038
        %v3047 = vadd.f32 %v3045, %v3046
        %v3048 = vtanh.pop %v3047
        %v3049 = vmul.f32 %v3044, %v3048
        %v3050 = vxor.u32 %v3022, 2147483648
        %v3051 = vmul.f32 %v3050, 1.442695
        %v3052 = vpow.pop %v3051
        %v3053 = vadd.f32 %v3052, 1.0
        %v3054 = vrcp.pop %v3053
        %v3055 = vmul.f32 1.0, %v3054
        %v3056 = vxor.u32 %v3023, 2147483648
        %v3057 = vmul.f32 %v3056, 1.442695
        %v3058 = vpow.pop %v3057
        %v3059 = vadd.f32 %v3058, 1.0
        %v3060 = vrcp.pop %v3059
        %v3061 = vmul.f32 1.0, %v3060
        %v3062 = vtanh.pop %v3024
        %v3063 = vxor.u32 %v3025, 2147483648
        %v3064 = vmul.f32 %v3063, 1.442695
        %v3065 = vpow.pop %v3064
        %v3066 = vadd.f32 %v3065, 1.0
        %v3067 = vrcp.pop %v3066
        %v3068 = vmul.f32 1.0, %v3067
        %v3069 = vmul.f32 %v3061, %v2841
        %v3070 = vmul.f32 %v3055, %v3062
        %v3071 = vadd.f32 %v3069, %v3070
        %v3072 = vtanh.pop %v3071
        %v3073 = vmul.f32 %v3068, %v3072
        %v3074 = vpack.c.bf16 %v3049, %v3049
        %3075 = vmatprep.subr.bf16.mxu0 %v1731
        %3076 = vmatpush1.bf16.msra.mxu0 %v1730
        %3077 = vmatprep.subr.bf16.mxu0 %v1727
        %3078 = vmatpush1.bf16.msra.mxu0 %v1726
        %3079 = vmatprep.subr.bf16.mxu0 %v1723
        %3080 = vmatpush1.bf16.msra.mxu0 %v1722
        %3081 = vmatprep.subr.bf16.mxu0 %v1719
        %3082 = vmatpush1.bf16.msra.mxu0 %v1718
        %3083 = vmatprep.subr.bf16.mxu0 %v1715
        %3084 = vmatpush1.bf16.msra.mxu0 %v1714
        %3085 = vmatprep.subr.bf16.mxu0 %v1711
        %3086 = vmatpush1.bf16.msra.mxu0 %v1710
        %3087 = vmatprep.subr.bf16.mxu0 %v1707
        %3088 = vmatpush1.bf16.msra.mxu0 %v1706
        %3089 = vmatprep.subr.bf16.mxu0 %v1703
        %3090 = vmatpush1.bf16.msra.mxu0 %v1702
        %3091 = vmatprep.subr.bf16.mxu0 0
        %3092 = vmatpush2.bf16.msra.mxu0 0
        %3093 = vmatprep.subr.bf16.mxu0 0
        %3094 = vmatpush2.bf16.msra.mxu0 0
        %3095 = vmatprep.subr.bf16.mxu0 0
        %3096 = vmatpush2.bf16.msra.mxu0 0
        %3097 = vmatprep.subr.bf16.mxu0 0
        %3098 = vmatpush2.bf16.msra.mxu0 0
        %3099 = vmatprep.subr.bf16.mxu0 0
        %3100 = vmatpush2.bf16.msra.mxu0 0
        %3101 = vmatprep.subr.bf16.mxu0 0
        %3102 = vmatpush2.bf16.msra.mxu0 0
        %3103 = vmatprep.subr.bf16.mxu0 0
        %3104 = vmatpush2.bf16.msra.mxu0 0
        %3105 = vmatprep.subr.bf16.mxu0 0
        %3106 = vmatpush2.bf16.msra.mxu0 0
        %3107 = vmatprep.mubr.bf16.mxu0 0
        %3108 = vmatmul.mubr.bf16.gmra.mxu0 %v3074
        %v3109 = vpop.f32.mrf.mxu0
        %v3110 = vadd.f32 0.0, %v3109
        %v3111 = vpop.f32.mrf.mxu0
        %v3112 = vadd.f32 0.0, %v3111
        %v3113 = vpop.f32.mrf.mxu0
        %v3114 = vpop.f32.mrf.mxu0
        %3115 = vdwg.mxu0
        %3116 = vmatprep.subr.bf16.mxu0 %v1733
        %3117 = vmatpush1.bf16.msra.mxu0 %v1732
        %3118 = vmatprep.subr.bf16.mxu0 %v1729
        %3119 = vmatpush1.bf16.msra.mxu0 %v1728
        %3120 = vmatprep.subr.bf16.mxu0 %v1725
        %3121 = vmatpush1.bf16.msra.mxu0 %v1724
        %3122 = vmatprep.subr.bf16.mxu0 %v1721
        %3123 = vmatpush1.bf16.msra.mxu0 %v1720
        %3124 = vmatprep.subr.bf16.mxu0 %v1717
        %3125 = vmatpush1.bf16.msra.mxu0 %v1716
        %3126 = vmatprep.subr.bf16.mxu0 %v1713
        %3127 = vmatpush1.bf16.msra.mxu0 %v1712
        %3128 = vmatprep.subr.bf16.mxu0 %v1709
        %3129 = vmatpush1.bf16.msra.mxu0 %v1708
        %3130 = vmatprep.subr.bf16.mxu0 %v1705
        %3131 = vmatpush1.bf16.msra.mxu0 %v1704
        %3132 = vmatprep.subr.bf16.mxu0 0
        %3133 = vmatpush2.bf16.msra.mxu0 0
        %3134 = vmatprep.subr.bf16.mxu0 0
        %3135 = vmatpush2.bf16.msra.mxu0 0
        %3136 = vmatprep.subr.bf16.mxu0 0
        %3137 = vmatpush2.bf16.msra.mxu0 0
        %3138 = vmatprep.subr.bf16.mxu0 0
        %3139 = vmatpush2.bf16.msra.mxu0 0
        %3140 = vmatprep.subr.bf16.mxu0 0
        %3141 = vmatpush2.bf16.msra.mxu0 0
        %3142 = vmatprep.subr.bf16.mxu0 0
        %3143 = vmatpush2.bf16.msra.mxu0 0
        %3144 = vmatprep.subr.bf16.mxu0 0
        %3145 = vmatpush2.bf16.msra.mxu0 0
        %3146 = vmatprep.subr.bf16.mxu0 0
        %3147 = vmatpush2.bf16.msra.mxu0 0
        %3148 = vmatprep.mubr.bf16.mxu0 0
        %3149 = vmatmul.mubr.bf16.gmra.mxu0 %v3074
        %v3150 = vpop.f32.mrf.mxu0
        %v3151 = vadd.f32 0.0, %v3150
        %v3152 = vpop.f32.mrf.mxu0
        %v3153 = vadd.f32 0.0, %v3152
        %v3154 = vpop.f32.mrf.mxu0
        %v3155 = vpop.f32.mrf.mxu0
        %3156 = vdwg.mxu0
        %v3157 = vpack.c.bf16 %v3073, %v3073
        %3158 = vmatprep.subr.bf16.mxu0 %v1973
        %3159 = vmatpush1.bf16.msra.mxu0 %v1972
        %3160 = vmatprep.subr.bf16.mxu0 %v1969
        %3161 = vmatpush1.bf16.msra.mxu0 %v1968
        %3162 = vmatprep.subr.bf16.mxu0 %v1965
        %3163 = vmatpush1.bf16.msra.mxu0 %v1964
        %3164 = vmatprep.subr.bf16.mxu0 %v1961
        %3165 = vmatpush1.bf16.msra.mxu0 %v1960
        %3166 = vmatprep.subr.bf16.mxu0 %v1957
        %3167 = vmatpush1.bf16.msra.mxu0 %v1956
        %3168 = vmatprep.subr.bf16.mxu0 %v1953
        %3169 = vmatpush1.bf16.msra.mxu0 %v1952
        %3170 = vmatprep.subr.bf16.mxu0 %v1949
        %3171 = vmatpush1.bf16.msra.mxu0 %v1948
        %3172 = vmatprep.subr.bf16.mxu0 %v1945
        %3173 = vmatpush1.bf16.msra.mxu0 %v1944
        %3174 = vmatprep.subr.bf16.mxu0 0
        %3175 = vmatpush2.bf16.msra.mxu0 0
        %3176 = vmatprep.subr.bf16.mxu0 0
        %3177 = vmatpush2.bf16.msra.mxu0 0
        %3178 = vmatprep.subr.bf16.mxu0 0
        %3179 = vmatpush2.bf16.msra.mxu0 0
        %3180 = vmatprep.subr.bf16.mxu0 0
        %3181 = vmatpush2.bf16.msra.mxu0 0
        %3182 = vmatprep.subr.bf16.mxu0 0
        %3183 = vmatpush2.bf16.msra.mxu0 0
        %3184 = vmatprep.subr.bf16.mxu0 0
        %3185 = vmatpush2.bf16.msra.mxu0 0
        %3186 = vmatprep.subr.bf16.mxu0 0
        %3187 = vmatpush2.bf16.msra.mxu0 0
        %3188 = vmatprep.subr.bf16.mxu0 0
        %3189 = vmatpush2.bf16.msra.mxu0 0
        %3190 = vmatprep.mubr.bf16.mxu0 0
        %3191 = vmatmul.mubr.bf16.gmra.mxu0 %v3157
        %v3192 = vpop.f32.mrf.mxu0
        %v3193 = vadd.f32 0.0, %v3192
        %v3194 = vpop.f32.mrf.mxu0
        %v3195 = vadd.f32 0.0, %v3194
        %v3196 = vpop.f32.mrf.mxu0
        %v3197 = vpop.f32.mrf.mxu0
        %3198 = vdwg.mxu0
        %3199 = vmatprep.subr.bf16.mxu0 %v1975
        %3200 = vmatpush1.bf16.msra.mxu0 %v1974
        %3201 = vmatprep.subr.bf16.mxu0 %v1971
        %3202 = vmatpush1.bf16.msra.mxu0 %v1970
        %3203 = vmatprep.subr.bf16.mxu0 %v1967
        %3204 = vmatpush1.bf16.msra.mxu0 %v1966
        %3205 = vmatprep.subr.bf16.mxu0 %v1963
        %3206 = vmatpush1.bf16.msra.mxu0 %v1962
        %3207 = vmatprep.subr.bf16.mxu0 %v1959
        %3208 = vmatpush1.bf16.msra.mxu0 %v1958
        %3209 = vmatprep.subr.bf16.mxu0 %v1955
        %3210 = vmatpush1.bf16.msra.mxu0 %v1954
        %3211 = vmatprep.subr.bf16.mxu0 %v1951
        %3212 = vmatpush1.bf16.msra.mxu0 %v1950
        %3213 = vmatprep.subr.bf16.mxu0 %v1947
        %3214 = vmatpush1.bf16.msra.mxu0 %v1946
        %3215 = vmatprep.subr.bf16.mxu0 0
        %3216 = vmatpush2.bf16.msra.mxu0 0
        %3217 = vmatprep.subr.bf16.mxu0 0
        %3218 = vmatpush2.bf16.msra.mxu0 0
        %3219 = vmatprep.subr.bf16.mxu0 0
        %3220 = vmatpush2.bf16.msra.mxu0 0
        %3221 = vmatprep.subr.bf16.mxu0 0
        %3222 = vmatpush2.bf16.msra.mxu0 0
        %3223 = vmatprep.subr.bf16.mxu0 0
        %3224 = vmatpush2.bf16.msra.mxu0 0
        %3225 = vmatprep.subr.bf16.mxu0 0
        %3226 = vmatpush2.bf16.msra.mxu0 0
        %3227 = vmatprep.subr.bf16.mxu0 0
        %3228 = vmatpush2.bf16.msra.mxu0 0
        %3229 = vmatprep.subr.bf16.mxu0 0
        %3230 = vmatpush2.bf16.msra.mxu0 0
        %3231 = vmatprep.mubr.bf16.mxu0 0
        %3232 = vmatmul.mubr.bf16.gmra.mxu0 %v3157
        %v3233 = vpop.f32.mrf.mxu0
        %v3234 = vadd.f32 0.0, %v3233
        %v3235 = vpop.f32.mrf.mxu0
        %v3236 = vadd.f32 0.0, %v3235
        %v3237 = vpop.f32.mrf.mxu0
        %v3238 = vpop.f32.mrf.mxu0
        %3239 = vdwg.mxu0
        %v3240 = vld [vmem:[#allocation3 + $0x140] sm:$0xff]
        %v3241 = vld [vmem:[#allocation3 + $0x148] sm:$0xff]
        %v3242 = vld [vmem:[#allocation3 + $0x150] sm:$0xff]
        %v3243 = vld [vmem:[#allocation3 + $0x158] sm:$0xff]
        %v3244 = vadd.f32 %v3240, %v3110
        %v3245 = vadd.f32 %v3241, %v3112
        %v3246 = vadd.f32 %v3242, %v3151
        %v3247 = vadd.f32 %v3243, %v3153
        %v3248 = vld [vmem:[#allocation3 + $0xa0] sm:$0xff]
        %v3249 = vld [vmem:[#allocation3 + $0xa8] sm:$0xff]
        %v3250 = vld [vmem:[#allocation3 + $0xb0] sm:$0xff]
        %v3251 = vld [vmem:[#allocation3 + $0xb8] sm:$0xff]
        %v3252 = vadd.f32 %v3248, %v3193
        %v3253 = vadd.f32 %v3249, %v3195
        %v3254 = vadd.f32 %v3250, %v3234
        %v3255 = vadd.f32 %v3251, %v3236
        %v3256 = vxor.u32 %v3244, 2147483648
        %v3257 = vmul.f32 %v3256, 1.442695
        %v3258 = vpow.pop %v3257
        %v3259 = vadd.f32 %v3258, 1.0
        %v3260 = vrcp.pop %v3259
        %v3261 = vmul.f32 1.0, %v3260
        %v3262 = vxor.u32 %v3245, 2147483648
        %v3263 = vmul.f32 %v3262, 1.442695
        %v3264 = vpow.pop %v3263
        %v3265 = vadd.f32 %v3264, 1.0
        %v3266 = vrcp.pop %v3265
        %v3267 = vmul.f32 1.0, %v3266
        %v3268 = vtanh.pop %v3246
        %v3269 = vxor.u32 %v3247, 2147483648
        %v3270 = vmul.f32 %v3269, 1.442695
        %v3271 = vpow.pop %v3270
        %v3272 = vadd.f32 %v3271, 1.0
        %v3273 = vrcp.pop %v3272
        %v3274 = vmul.f32 1.0, %v3273
        %v3275 = vmul.f32 %v3267, %v3047
        %v3276 = vmul.f32 %v3261, %v3268
        %v3277 = vadd.f32 %v3275, %v3276
        %v3278 = vtanh.pop %v3277
        %v3279 = vmul.f32 %v3274, %v3278
        %v3280 = vxor.u32 %v3252, 2147483648
        %v3281 = vmul.f32 %v3280, 1.442695
        %v3282 = vpow.pop %v3281
        %v3283 = vadd.f32 %v3282, 1.0
        %v3284 = vrcp.pop %v3283
        %v3285 = vmul.f32 1.0, %v3284
        %v3286 = vxor.u32 %v3253, 2147483648
        %v3287 = vmul.f32 %v3286, 1.442695
        %v3288 = vpow.pop %v3287
        %v3289 = vadd.f32 %v3288, 1.0
        %v3290 = vrcp.pop %v3289
        %v3291 = vmul.f32 1.0, %v3290
        %v3292 = vtanh.pop %v3254
        %v3293 = vxor.u32 %v3255, 2147483648
        %v3294 = vmul.f32 %v3293, 1.442695
        %v3295 = vpow.pop %v3294
        %v3296 = vadd.f32 %v3295, 1.0
        %v3297 = vrcp.pop %v3296
        %v3298 = vmul.f32 1.0, %v3297
        %v3299 = vmul.f32 %v3291, %v3071
        %v3300 = vmul.f32 %v3285, %v3292
        %v3301 = vadd.f32 %v3299, %v3300
        %v3302 = vtanh.pop %v3301
        %v3303 = vmul.f32 %v3298, %v3302
        %v3304 = vpack.c.bf16 %v3279, %v3279
        %3305 = vmatprep.subr.bf16.mxu0 %v1731
        %3306 = vmatpush1.bf16.msra.mxu0 %v1730
        %3307 = vmatprep.subr.bf16.mxu0 %v1727
        %3308 = vmatpush1.bf16.msra.mxu0 %v1726
        %3309 = vmatprep.subr.bf16.mxu0 %v1723
        %3310 = vmatpush1.bf16.msra.mxu0 %v1722
        %3311 = vmatprep.subr.bf16.mxu0 %v1719
        %3312 = vmatpush1.bf16.msra.mxu0 %v1718
        %3313 = vmatprep.subr.bf16.mxu0 %v1715
        %3314 = vmatpush1.bf16.msra.mxu0 %v1714
        %3315 = vmatprep.subr.bf16.mxu0 %v1711
        %3316 = vmatpush1.bf16.msra.mxu0 %v1710
        %3317 = vmatprep.subr.bf16.mxu0 %v1707
        %3318 = vmatpush1.bf16.msra.mxu0 %v1706
        %3319 = vmatprep.subr.bf16.mxu0 %v1703
        %3320 = vmatpush1.bf16.msra.mxu0 %v1702
        %3321 = vmatprep.subr.bf16.mxu0 0
        %3322 = vmatpush2.bf16.msra.mxu0 0
        %3323 = vmatprep.subr.bf16.mxu0 0
        %3324 = vmatpush2.bf16.msra.mxu0 0
        %3325 = vmatprep.subr.bf16.mxu0 0
        %3326 = vmatpush2.bf16.msra.mxu0 0
        %3327 = vmatprep.subr.bf16.mxu0 0
        %3328 = vmatpush2.bf16.msra.mxu0 0
        %3329 = vmatprep.subr.bf16.mxu0 0
        %3330 = vmatpush2.bf16.msra.mxu0 0
        %3331 = vmatprep.subr.bf16.mxu0 0
        %3332 = vmatpush2.bf16.msra.mxu0 0
        %3333 = vmatprep.subr.bf16.mxu0 0
        %3334 = vmatpush2.bf16.msra.mxu0 0
        %3335 = vmatprep.subr.bf16.mxu0 0
        %3336 = vmatpush2.bf16.msra.mxu0 0
        %3337 = vmatprep.mubr.bf16.mxu0 0
        %3338 = vmatmul.mubr.bf16.gmra.mxu0 %v3304
        %v3339 = vpop.f32.mrf.mxu0
        %v3340 = vadd.f32 0.0, %v3339
        %v3341 = vpop.f32.mrf.mxu0
        %v3342 = vadd.f32 0.0, %v3341
        %v3343 = vpop.f32.mrf.mxu0
        %v3344 = vpop.f32.mrf.mxu0
        %3345 = vdwg.mxu0
        %3346 = vmatprep.subr.bf16.mxu0 %v1733
        %3347 = vmatpush1.bf16.msra.mxu0 %v1732
        %3348 = vmatprep.subr.bf16.mxu0 %v1729
        %3349 = vmatpush1.bf16.msra.mxu0 %v1728
        %3350 = vmatprep.subr.bf16.mxu0 %v1725
        %3351 = vmatpush1.bf16.msra.mxu0 %v1724
        %3352 = vmatprep.subr.bf16.mxu0 %v1721
        %3353 = vmatpush1.bf16.msra.mxu0 %v1720
        %3354 = vmatprep.subr.bf16.mxu0 %v1717
        %3355 = vmatpush1.bf16.msra.mxu0 %v1716
        %3356 = vmatprep.subr.bf16.mxu0 %v1713
        %3357 = vmatpush1.bf16.msra.mxu0 %v1712
        %3358 = vmatprep.subr.bf16.mxu0 %v1709
        %3359 = vmatpush1.bf16.msra.mxu0 %v1708
        %3360 = vmatprep.subr.bf16.mxu0 %v1705
        %3361 = vmatpush1.bf16.msra.mxu0 %v1704
        %3362 = vmatprep.subr.bf16.mxu0 0
        %3363 = vmatpush2.bf16.msra.mxu0 0
        %3364 = vmatprep.subr.bf16.mxu0 0
        %3365 = vmatpush2.bf16.msra.mxu0 0
        %3366 = vmatprep.subr.bf16.mxu0 0
        %3367 = vmatpush2.bf16.msra.mxu0 0
        %3368 = vmatprep.subr.bf16.mxu0 0
        %3369 = vmatpush2.bf16.msra.mxu0 0
        %3370 = vmatprep.subr.bf16.mxu0 0
        %3371 = vmatpush2.bf16.msra.mxu0 0
        %3372 = vmatprep.subr.bf16.mxu0 0
        %3373 = vmatpush2.bf16.msra.mxu0 0
        %3374 = vmatprep.subr.bf16.mxu0 0
        %3375 = vmatpush2.bf16.msra.mxu0 0
        %3376 = vmatprep.subr.bf16.mxu0 0
        %3377 = vmatpush2.bf16.msra.mxu0 0
        %3378 = vmatprep.mubr.bf16.mxu0 0
        %3379 = vmatmul.mubr.bf16.gmra.mxu0 %v3304
        %v3380 = vpop.f32.mrf.mxu0
        %v3381 = vadd.f32 0.0, %v3380
        %v3382 = vpop.f32.mrf.mxu0
        %v3383 = vadd.f32 0.0, %v3382
        %v3384 = vpop.f32.mrf.mxu0
        %v3385 = vpop.f32.mrf.mxu0
        %3386 = vdwg.mxu0
        %v3387 = vpack.c.bf16 %v3303, %v3303
        %3388 = vmatprep.subr.bf16.mxu0 %v1973
        %3389 = vmatpush1.bf16.msra.mxu0 %v1972
        %3390 = vmatprep.subr.bf16.mxu0 %v1969
        %3391 = vmatpush1.bf16.msra.mxu0 %v1968
        %3392 = vmatprep.subr.bf16.mxu0 %v1965
        %3393 = vmatpush1.bf16.msra.mxu0 %v1964
        %3394 = vmatprep.subr.bf16.mxu0 %v1961
        %3395 = vmatpush1.bf16.msra.mxu0 %v1960
        %3396 = vmatprep.subr.bf16.mxu0 %v1957
        %3397 = vmatpush1.bf16.msra.mxu0 %v1956
        %3398 = vmatprep.subr.bf16.mxu0 %v1953
        %3399 = vmatpush1.bf16.msra.mxu0 %v1952
        %3400 = vmatprep.subr.bf16.mxu0 %v1949
        %3401 = vmatpush1.bf16.msra.mxu0 %v1948
        %3402 = vmatprep.subr.bf16.mxu0 %v1945
        %3403 = vmatpush1.bf16.msra.mxu0 %v1944
        %3404 = vmatprep.subr.bf16.mxu0 0
        %3405 = vmatpush2.bf16.msra.mxu0 0
        %3406 = vmatprep.subr.bf16.mxu0 0
        %3407 = vmatpush2.bf16.msra.mxu0 0
        %3408 = vmatprep.subr.bf16.mxu0 0
        %3409 = vmatpush2.bf16.msra.mxu0 0
        %3410 = vmatprep.subr.bf16.mxu0 0
        %3411 = vmatpush2.bf16.msra.mxu0 0
        %3412 = vmatprep.subr.bf16.mxu0 0
        %3413 = vmatpush2.bf16.msra.mxu0 0
        %3414 = vmatprep.subr.bf16.mxu0 0
        %3415 = vmatpush2.bf16.msra.mxu0 0
        %3416 = vmatprep.subr.bf16.mxu0 0
        %3417 = vmatpush2.bf16.msra.mxu0 0
        %3418 = vmatprep.subr.bf16.mxu0 0
        %3419 = vmatpush2.bf16.msra.mxu0 0
        %3420 = vmatprep.mubr.bf16.mxu0 0
        %3421 = vmatmul.mubr.bf16.gmra.mxu0 %v3387
        %v3422 = vpop.f32.mrf.mxu0
        %v3423 = vadd.f32 0.0, %v3422
        %v3424 = vpop.f32.mrf.mxu0
        %v3425 = vadd.f32 0.0, %v3424
        %v3426 = vpop.f32.mrf.mxu0
        %v3427 = vpop.f32.mrf.mxu0
        %3428 = vdwg.mxu0
        %3429 = vmatprep.subr.bf16.mxu0 %v1975
        %3430 = vmatpush1.bf16.msra.mxu0 %v1974
        %3431 = vmatprep.subr.bf16.mxu0 %v1971
        %3432 = vmatpush1.bf16.msra.mxu0 %v1970
        %3433 = vmatprep.subr.bf16.mxu0 %v1967
        %3434 = vmatpush1.bf16.msra.mxu0 %v1966
        %3435 = vmatprep.subr.bf16.mxu0 %v1963
        %3436 = vmatpush1.bf16.msra.mxu0 %v1962
        %3437 = vmatprep.subr.bf16.mxu0 %v1959
        %3438 = vmatpush1.bf16.msra.mxu0 %v1958
        %3439 = vmatprep.subr.bf16.mxu0 %v1955
        %3440 = vmatpush1.bf16.msra.mxu0 %v1954
        %3441 = vmatprep.subr.bf16.mxu0 %v1951
        %3442 = vmatpush1.bf16.msra.mxu0 %v1950
        %3443 = vmatprep.subr.bf16.mxu0 %v1947
        %3444 = vmatpush1.bf16.msra.mxu0 %v1946
        %3445 = vmatprep.subr.bf16.mxu0 0
        %3446 = vmatpush2.bf16.msra.mxu0 0
        %3447 = vmatprep.subr.bf16.mxu0 0
        %3448 = vmatpush2.bf16.msra.mxu0 0
        %3449 = vmatprep.subr.bf16.mxu0 0
        %3450 = vmatpush2.bf16.msra.mxu0 0
        %3451 = vmatprep.subr.bf16.mxu0 0
        %3452 = vmatpush2.bf16.msra.mxu0 0
        %3453 = vmatprep.subr.bf16.mxu0 0
        %3454 = vmatpush2.bf16.msra.mxu0 0
        %3455 = vmatprep.subr.bf16.mxu0 0
        %3456 = vmatpush2.bf16.msra.mxu0 0
        %3457 = vmatprep.subr.bf16.mxu0 0
        %3458 = vmatpush2.bf16.msra.mxu0 0
        %3459 = vmatprep.subr.bf16.mxu0 0
        %3460 = vmatpush2.bf16.msra.mxu0 0
        %3461 = vmatprep.mubr.bf16.mxu0 0
        %3462 = vmatmul.mubr.bf16.gmra.mxu0 %v3387
        %v3463 = vpop.f32.mrf.mxu0
        %v3464 = vadd.f32 0.0, %v3463
        %v3465 = vpop.f32.mrf.mxu0
        %v3466 = vadd.f32 0.0, %v3465
        %v3467 = vpop.f32.mrf.mxu0
        %v3468 = vpop.f32.mrf.mxu0
        %3469 = vdwg.mxu0
        %v3470 = vld [vmem:[#allocation3 + $0x180] sm:$0xff]
        %v3471 = vld [vmem:[#allocation3 + $0x188] sm:$0xff]
        %v3472 = vld [vmem:[#allocation3 + $0x190] sm:$0xff]
        %v3473 = vld [vmem:[#allocation3 + $0x198] sm:$0xff]
        %v3474 = vadd.f32 %v3470, %v3340
        %v3475 = vadd.f32 %v3471, %v3342
        %v3476 = vadd.f32 %v3472, %v3381
        %v3477 = vadd.f32 %v3473, %v3383
        %v3478 = vld [vmem:[#allocation3 + $0x60] sm:$0xff]
        %v3479 = vld [vmem:[#allocation3 + $0x68] sm:$0xff]
        %v3480 = vld [vmem:[#allocation3 + $0x70] sm:$0xff]
        %v3481 = vld [vmem:[#allocation3 + $0x78] sm:$0xff]
        %v3482 = vadd.f32 %v3478, %v3423
        %v3483 = vadd.f32 %v3479, %v3425
        %v3484 = vadd.f32 %v3480, %v3464
        %v3485 = vadd.f32 %v3481, %v3466
        %v3486 = vxor.u32 %v3474, 2147483648
        %v3487 = vmul.f32 %v3486, 1.442695
        %v3488 = vpow.pop %v3487
        %v3489 = vadd.f32 %v3488, 1.0
        %v3490 = vrcp.pop %v3489
        %v3491 = vmul.f32 1.0, %v3490
        %v3492 = vxor.u32 %v3475, 2147483648
        %v3493 = vmul.f32 %v3492, 1.442695
        %v3494 = vpow.pop %v3493
        %v3495 = vadd.f32 %v3494, 1.0
        %v3496 = vrcp.pop %v3495
        %v3497 = vmul.f32 1.0, %v3496
        %v3498 = vtanh.pop %v3476
        %v3499 = vxor.u32 %v3477, 2147483648
        %v3500 = vmul.f32 %v3499, 1.442695
        %v3501 = vpow.pop %v3500
        %v3502 = vadd.f32 %v3501, 1.0
        %v3503 = vrcp.pop %v3502
        %v3504 = vmul.f32 1.0, %v3503
        %v3505 = vmul.f32 %v3497, %v3277
        %v3506 = vmul.f32 %v3491, %v3498
        %v3507 = vadd.f32 %v3505, %v3506
        %v3508 = vtanh.pop %v3507
        %v3509 = vmul.f32 %v3504, %v3508
        %v3510 = vxor.u32 %v3482, 2147483648
        %v3511 = vmul.f32 %v3510, 1.442695
        %v3512 = vpow.pop %v3511
        %v3513 = vadd.f32 %v3512, 1.0
        %v3514 = vrcp.pop %v3513
        %v3515 = vmul.f32 1.0, %v3514
        %v3516 = vxor.u32 %v3483, 2147483648
        %v3517 = vmul.f32 %v3516, 1.442695
        %v3518 = vpow.pop %v3517
        %v3519 = vadd.f32 %v3518, 1.0
        %v3520 = vrcp.pop %v3519
        %v3521 = vmul.f32 1.0, %v3520
        %v3522 = vtanh.pop %v3484
        %v3523 = vxor.u32 %v3485, 2147483648
        %v3524 = vmul.f32 %v3523, 1.442695
        %v3525 = vpow.pop %v3524
        %v3526 = vadd.f32 %v3525, 1.0
        %v3527 = vrcp.pop %v3526
        %v3528 = vmul.f32 1.0, %v3527
        %v3529 = vmul.f32 %v3521, %v3301
        %v3530 = vmul.f32 %v3515, %v3522
        %v3531 = vadd.f32 %v3529, %v3530
        %v3532 = vtanh.pop %v3531
        %v3533 = vmul.f32 %v3528, %v3532
        %v3534 = vpack.c.bf16 %v3509, %v3509
        %3535 = vmatprep.subr.bf16.mxu0 %v1731
        %3536 = vmatpush1.bf16.msra.mxu0 %v1730
        %3537 = vmatprep.subr.bf16.mxu0 %v1727
        %3538 = vmatpush1.bf16.msra.mxu0 %v1726
        %3539 = vmatprep.subr.bf16.mxu0 %v1723
        %3540 = vmatpush1.bf16.msra.mxu0 %v1722
        %3541 = vmatprep.subr.bf16.mxu0 %v1719
        %3542 = vmatpush1.bf16.msra.mxu0 %v1718
        %3543 = vmatprep.subr.bf16.mxu0 %v1715
        %3544 = vmatpush1.bf16.msra.mxu0 %v1714
        %3545 = vmatprep.subr.bf16.mxu0 %v1711
        %3546 = vmatpush1.bf16.msra.mxu0 %v1710
        %3547 = vmatprep.subr.bf16.mxu0 %v1707
        %3548 = vmatpush1.bf16.msra.mxu0 %v1706
        %3549 = vmatprep.subr.bf16.mxu0 %v1703
        %3550 = vmatpush1.bf16.msra.mxu0 %v1702
        %3551 = vmatprep.subr.bf16.mxu0 0
        %3552 = vmatpush2.bf16.msra.mxu0 0
        %3553 = vmatprep.subr.bf16.mxu0 0
        %3554 = vmatpush2.bf16.msra.mxu0 0
        %3555 = vmatprep.subr.bf16.mxu0 0
        %3556 = vmatpush2.bf16.msra.mxu0 0
        %3557 = vmatprep.subr.bf16.mxu0 0
        %3558 = vmatpush2.bf16.msra.mxu0 0
        %3559 = vmatprep.subr.bf16.mxu0 0
        %3560 = vmatpush2.bf16.msra.mxu0 0
        %3561 = vmatprep.subr.bf16.mxu0 0
        %3562 = vmatpush2.bf16.msra.mxu0 0
        %3563 = vmatprep.subr.bf16.mxu0 0
        %3564 = vmatpush2.bf16.msra.mxu0 0
        %3565 = vmatprep.subr.bf16.mxu0 0
        %3566 = vmatpush2.bf16.msra.mxu0 0
        %3567 = vmatprep.mubr.bf16.mxu0 0
        %3568 = vmatmul.mubr.bf16.gmra.mxu0 %v3534
        %v3569 = vpop.f32.mrf.mxu0
        %v3570 = vadd.f32 0.0, %v3569
        %v3571 = vpop.f32.mrf.mxu0
        %v3572 = vadd.f32 0.0, %v3571
        %v3573 = vpop.f32.mrf.mxu0
        %v3574 = vpop.f32.mrf.mxu0
        %3575 = vdwg.mxu0
        %3576 = vmatprep.subr.bf16.mxu0 %v1733
        %3577 = vmatpush1.bf16.msra.mxu0 %v1732
        %3578 = vmatprep.subr.bf16.mxu0 %v1729
        %3579 = vmatpush1.bf16.msra.mxu0 %v1728
        %3580 = vmatprep.subr.bf16.mxu0 %v1725
        %3581 = vmatpush1.bf16.msra.mxu0 %v1724
        %3582 = vmatprep.subr.bf16.mxu0 %v1721
        %3583 = vmatpush1.bf16.msra.mxu0 %v1720
        %3584 = vmatprep.subr.bf16.mxu0 %v1717
        %3585 = vmatpush1.bf16.msra.mxu0 %v1716
        %3586 = vmatprep.subr.bf16.mxu0 %v1713
        %3587 = vmatpush1.bf16.msra.mxu0 %v1712
        %3588 = vmatprep.subr.bf16.mxu0 %v1709
        %3589 = vmatpush1.bf16.msra.mxu0 %v1708
        %3590 = vmatprep.subr.bf16.mxu0 %v1705
        %3591 = vmatpush1.bf16.msra.mxu0 %v1704
        %3592 = vmatprep.subr.bf16.mxu0 0
        %3593 = vmatpush2.bf16.msra.mxu0 0
        %3594 = vmatprep.subr.bf16.mxu0 0
        %3595 = vmatpush2.bf16.msra.mxu0 0
        %3596 = vmatprep.subr.bf16.mxu0 0
        %3597 = vmatpush2.bf16.msra.mxu0 0
        %3598 = vmatprep.subr.bf16.mxu0 0
        %3599 = vmatpush2.bf16.msra.mxu0 0
        %3600 = vmatprep.subr.bf16.mxu0 0
        %3601 = vmatpush2.bf16.msra.mxu0 0
        %3602 = vmatprep.subr.bf16.mxu0 0
        %3603 = vmatpush2.bf16.msra.mxu0 0
        %3604 = vmatprep.subr.bf16.mxu0 0
        %3605 = vmatpush2.bf16.msra.mxu0 0
        %3606 = vmatprep.subr.bf16.mxu0 0
        %3607 = vmatpush2.bf16.msra.mxu0 0
        %3608 = vmatprep.mubr.bf16.mxu0 0
        %3609 = vmatmul.mubr.bf16.gmra.mxu0 %v3534
        %v3610 = vpop.f32.mrf.mxu0
        %v3611 = vadd.f32 0.0, %v3610
        %v3612 = vpop.f32.mrf.mxu0
        %v3613 = vadd.f32 0.0, %v3612
        %v3614 = vpop.f32.mrf.mxu0
        %v3615 = vpop.f32.mrf.mxu0
        %3616 = vdwg.mxu0
        %v3617 = vpack.c.bf16 %v3533, %v3533
        %3618 = vmatprep.subr.bf16.mxu0 %v1973
        %3619 = vmatpush1.bf16.msra.mxu0 %v1972
        %3620 = vmatprep.subr.bf16.mxu0 %v1969
        %3621 = vmatpush1.bf16.msra.mxu0 %v1968
        %3622 = vmatprep.subr.bf16.mxu0 %v1965
        %3623 = vmatpush1.bf16.msra.mxu0 %v1964
        %3624 = vmatprep.subr.bf16.mxu0 %v1961
        %3625 = vmatpush1.bf16.msra.mxu0 %v1960
        %3626 = vmatprep.subr.bf16.mxu0 %v1957
        %3627 = vmatpush1.bf16.msra.mxu0 %v1956
        %3628 = vmatprep.subr.bf16.mxu0 %v1953
        %3629 = vmatpush1.bf16.msra.mxu0 %v1952
        %3630 = vmatprep.subr.bf16.mxu0 %v1949
        %3631 = vmatpush1.bf16.msra.mxu0 %v1948
        %3632 = vmatprep.subr.bf16.mxu0 %v1945
        %3633 = vmatpush1.bf16.msra.mxu0 %v1944
        %3634 = vmatprep.subr.bf16.mxu0 0
        %3635 = vmatpush2.bf16.msra.mxu0 0
        %3636 = vmatprep.subr.bf16.mxu0 0
        %3637 = vmatpush2.bf16.msra.mxu0 0
        %3638 = vmatprep.subr.bf16.mxu0 0
        %3639 = vmatpush2.bf16.msra.mxu0 0
        %3640 = vmatprep.subr.bf16.mxu0 0
        %3641 = vmatpush2.bf16.msra.mxu0 0
        %3642 = vmatprep.subr.bf16.mxu0 0
        %3643 = vmatpush2.bf16.msra.mxu0 0
        %3644 = vmatprep.subr.bf16.mxu0 0
        %3645 = vmatpush2.bf16.msra.mxu0 0
        %3646 = vmatprep.subr.bf16.mxu0 0
        %3647 = vmatpush2.bf16.msra.mxu0 0
        %3648 = vmatprep.subr.bf16.mxu0 0
        %3649 = vmatpush2.bf16.msra.mxu0 0
        %3650 = vmatprep.mubr.bf16.mxu0 0
        %3651 = vmatmul.mubr.bf16.gmra.mxu0 %v3617
        %v3652 = vpop.f32.mrf.mxu0
        %v3653 = vadd.f32 0.0, %v3652
        %v3654 = vpop.f32.mrf.mxu0
        %v3655 = vadd.f32 0.0, %v3654
        %v3656 = vpop.f32.mrf.mxu0
        %v3657 = vpop.f32.mrf.mxu0
        %3658 = vdwg.mxu0
        %3659 = vmatprep.subr.bf16.mxu0 %v1975
        %3660 = vmatpush1.bf16.msra.mxu0 %v1974
        %3661 = vmatprep.subr.bf16.mxu0 %v1971
        %3662 = vmatpush1.bf16.msra.mxu0 %v1970
        %3663 = vmatprep.subr.bf16.mxu0 %v1967
        %3664 = vmatpush1.bf16.msra.mxu0 %v1966
        %3665 = vmatprep.subr.bf16.mxu0 %v1963
        %3666 = vmatpush1.bf16.msra.mxu0 %v1962
        %3667 = vmatprep.subr.bf16.mxu0 %v1959
        %3668 = vmatpush1.bf16.msra.mxu0 %v1958
        %3669 = vmatprep.subr.bf16.mxu0 %v1955
        %3670 = vmatpush1.bf16.msra.mxu0 %v1954
        %3671 = vmatprep.subr.bf16.mxu0 %v1951
        %3672 = vmatpush1.bf16.msra.mxu0 %v1950
        %3673 = vmatprep.subr.bf16.mxu0 %v1947
        %3674 = vmatpush1.bf16.msra.mxu0 %v1946
        %3675 = vmatprep.subr.bf16.mxu0 0
        %3676 = vmatpush2.bf16.msra.mxu0 0
        %3677 = vmatprep.subr.bf16.mxu0 0
        %3678 = vmatpush2.bf16.msra.mxu0 0
        %3679 = vmatprep.subr.bf16.mxu0 0
        %3680 = vmatpush2.bf16.msra.mxu0 0
        %3681 = vmatprep.subr.bf16.mxu0 0
        %3682 = vmatpush2.bf16.msra.mxu0 0
        %3683 = vmatprep.subr.bf16.mxu0 0
        %3684 = vmatpush2.bf16.msra.mxu0 0
        %3685 = vmatprep.subr.bf16.mxu0 0
        %3686 = vmatpush2.bf16.msra.mxu0 0
        %3687 = vmatprep.subr.bf16.mxu0 0
        %3688 = vmatpush2.bf16.msra.mxu0 0
        %3689 = vmatprep.subr.bf16.mxu0 0
        %3690 = vmatpush2.bf16.msra.mxu0 0
        %3691 = vmatprep.mubr.bf16.mxu0 0
        %3692 = vmatmul.mubr.bf16.gmra.mxu0 %v3617
        %v3693 = vpop.f32.mrf.mxu0
        %v3694 = vadd.f32 0.0, %v3693
        %v3695 = vpop.f32.mrf.mxu0
        %v3696 = vadd.f32 0.0, %v3695
        %v3697 = vpop.f32.mrf.mxu0
        %v3698 = vpop.f32.mrf.mxu0
        %3699 = vdwg.mxu0
        %v3700 = vld [vmem:[#allocation3 + $0x1c0] sm:$0xff]
        %v3701 = vld [vmem:[#allocation3 + $0x1c8] sm:$0xff]
        %v3702 = vld [vmem:[#allocation3 + $0x1d0] sm:$0xff]
        %v3703 = vld [vmem:[#allocation3 + $0x1d8] sm:$0xff]
        %v3704 = vadd.f32 %v3700, %v3570
        %v3705 = vadd.f32 %v3701, %v3572
        %v3706 = vadd.f32 %v3702, %v3611
        %v3707 = vadd.f32 %v3703, %v3613
        %v3708 = vld [vmem:[#allocation3 + $0x20] sm:$0xff]
        %v3709 = vld [vmem:[#allocation3 + $0x28] sm:$0xff]
        %v3710 = vld [vmem:[#allocation3 + $0x30] sm:$0xff]
        %v3711 = vld [vmem:[#allocation3 + $0x38] sm:$0xff]
        %v3712 = vadd.f32 %v3708, %v3653
        %v3713 = vadd.f32 %v3709, %v3655
        %v3714 = vadd.f32 %v3710, %v3694
        %v3715 = vadd.f32 %v3711, %v3696
        %v3716 = vxor.u32 %v3704, 2147483648
        %v3717 = vmul.f32 %v3716, 1.442695
        %v3718 = vpow.pop %v3717
        %v3719 = vadd.f32 %v3718, 1.0
        %v3720 = vrcp.pop %v3719
        %v3721 = vmul.f32 1.0, %v3720
        %v3722 = vxor.u32 %v3705, 2147483648
        %v3723 = vmul.f32 %v3722, 1.442695
        %v3724 = vpow.pop %v3723
        %v3725 = vadd.f32 %v3724, 1.0
        %v3726 = vrcp.pop %v3725
        %v3727 = vmul.f32 1.0, %v3726
        %v3728 = vtanh.pop %v3706
        %v3729 = vxor.u32 %v3707, 2147483648
        %v3730 = vmul.f32 %v3729, 1.442695
        %v3731 = vpow.pop %v3730
        %v3732 = vadd.f32 %v3731, 1.0
        %v3733 = vrcp.pop %v3732
        %v3734 = vmul.f32 1.0, %v3733
        %v3735 = vmul.f32 %v3727, %v3507
        %v3736 = vmul.f32 %v3721, %v3728
        %v3737 = vadd.f32 %v3735, %v3736
        %v3738 = vtanh.pop %v3737
        %v3739 = vmul.f32 %v3734, %v3738
        %v3740 = vxor.u32 %v3712, 2147483648
        %v3741 = vmul.f32 %v3740, 1.442695
        %v3742 = vpow.pop %v3741
        %v3743 = vadd.f32 %v3742, 1.0
        %v3744 = vrcp.pop %v3743
        %v3745 = vmul.f32 1.0, %v3744
        %v3746 = vxor.u32 %v3713, 2147483648
        %v3747 = vmul.f32 %v3746, 1.442695
        %v3748 = vpow.pop %v3747
        %v3749 = vadd.f32 %v3748, 1.0
        %v3750 = vrcp.pop %v3749
        %v3751 = vmul.f32 1.0, %v3750
        %v3752 = vtanh.pop %v3714
        %v3753 = vxor.u32 %v3715, 2147483648
        %v3754 = vmul.f32 %v3753, 1.442695
        %v3755 = vpow.pop %v3754
        %v3756 = vadd.f32 %v3755, 1.0
        %v3757 = vrcp.pop %v3756
        %v3758 = vmul.f32 1.0, %v3757
        %v3759 = vmul.f32 %v3751, %v3531
        %v3760 = vmul.f32 %v3745, %v3752
        %v3761 = vadd.f32 %v3759, %v3760
        %v3762 = vtanh.pop %v3761
        %v3763 = vmul.f32 %v3758, %v3762
        %p3764 = scmp.lt.s32.totalorder %s23, 1
        // Predicated region
        $region57: #{birnn_forward.1} parent=43 // pred_check
          %p3765 = pneg %p3764
        $region58: #{birnn_forward.1} parent=43 // pred_check_branch
          %3767 = sbr.rel (%p3765) target = $region60
        $region59: #{birnn_forward.1} parent=43 // pred_region
          %3768 = vst [vmem:[#allocation2] sm:$0xff] %v2129
          %s3769 = scalar_lea.vmem [#allocation2], 112
          %3770 = vst [vmem:[%s3769 + $0x8] sm:$0xff] %v2153
          %s3771 = scalar_lea.vmem [#allocation2], 16
          %3772 = vst [vmem:[%s3771] sm:$0xff] %v2359
          %s3773 = scalar_lea.vmem [#allocation2], 96
          %3774 = vst [vmem:[%s3773 + $0x8] sm:$0xff] %v2383
          %s3775 = scalar_lea.vmem [#allocation2], 32
          %3776 = vst [vmem:[%s3775] sm:$0xff] %v2589
          %s3777 = scalar_lea.vmem [#allocation2], 80
          %3778 = vst [vmem:[%s3777 + $0x8] sm:$0xff] %v2613
          %s3779 = scalar_lea.vmem [#allocation2], 48
          %3780 = vst [vmem:[%s3779] sm:$0xff] %v2819
          %s3781 = scalar_lea.vmem [#allocation2], 64
          %3782 = vst [vmem:[%s3781 + $0x8] sm:$0xff] %v2843
          %3783 = vst [vmem:[%s3781] sm:$0xff] %v3049
          %3784 = vst [vmem:[%s3779 + $0x8] sm:$0xff] %v3073
          %3785 = vst [vmem:[%s3777] sm:$0xff] %v3279
          %3786 = vst [vmem:[%s3775 + $0x8] sm:$0xff] %v3303
          %3787 = vst [vmem:[%s3773] sm:$0xff] %v3509
          %3788 = vst [vmem:[%s3771 + $0x8] sm:$0xff] %v3533
          %3789 = vst [vmem:[%s3769] sm:$0xff] %v3739
          %3790 = vst [vmem:[#allocation2 + $0x8] sm:$0xff] %v3763
        $region60: #{birnn_forward.1} parent=43 // pred_fallthru
          _
        %p3791 = scmp.eq.s32.totalorder %s23, 1
        // Predicated region
        $region61: #{birnn_forward.1} parent=43 // pred_check
          %p3792 = pneg %p3791
        $region62: #{birnn_forward.1} parent=43 // pred_check_branch
          %3794 = sbr.rel (%p3792) target = $region64
        $region63: #{birnn_forward.1} parent=43 // pred_region
          %v3795 = vld [vmem:[%s4] sm:$0xf]
          %v3796 = vld [vmem:[%s4 + $0x4] sm:$0xf]
          %v3797 = vld [vmem:[%s4 + $0x8] sm:$0xf]
          %v3798 = vld [vmem:[%s4 + $0xc] sm:$0xf]
          %v3799 = vld [vmem:[%s4 + $0x10] sm:$0xf]
          %v3800 = vld [vmem:[%s4 + $0x14] sm:$0xf]
          %v3801 = vld [vmem:[%s4 + $0x18] sm:$0xf]
          %v3802 = vld [vmem:[%s4 + $0x1c] sm:$0xf]
          %v3803 = vld [vmem:[%s4 + $0x20] sm:$0xf]
          %v3804 = vld [vmem:[%s4 + $0x24] sm:$0xf]
          %v3805 = vld [vmem:[%s4 + $0x28] sm:$0xf]
          %v3806 = vld [vmem:[%s4 + $0x2c] sm:$0xf]
          %v3807 = vld [vmem:[%s4 + $0x30] sm:$0xf]
          %v3808 = vld [vmem:[%s4 + $0x34] sm:$0xf]
          %v3809 = vld [vmem:[%s4 + $0x38] sm:$0xf]
          %v3810 = vld [vmem:[%s4 + $0x3c] sm:$0xf]
          %v3811 = vpack.c.bf16 %v3763, %v3763
          %s3812 = scalar_lea.vmem %s4, 64
          %v3813 = vld [vmem:[%s3812] sm:$0xf]
          %v3814 = vld [vmem:[%s3812 + $0x4] sm:$0xf]
          %v3815 = vld [vmem:[%s3812 + $0x8] sm:$0xf]
          %v3816 = vld [vmem:[%s3812 + $0xc] sm:$0xf]
          %v3817 = vld [vmem:[%s3812 + $0x10] sm:$0xf]
          %v3818 = vld [vmem:[%s3812 + $0x14] sm:$0xf]
          %v3819 = vld [vmem:[%s3812 + $0x18] sm:$0xf]
          %v3820 = vld [vmem:[%s3812 + $0x1c] sm:$0xf]
          %v3821 = vld [vmem:[%s3812 + $0x20] sm:$0xf]
          %v3822 = vld [vmem:[%s3812 + $0x24] sm:$0xf]
          %v3823 = vld [vmem:[%s3812 + $0x28] sm:$0xf]
          %v3824 = vld [vmem:[%s3812 + $0x2c] sm:$0xf]
          %v3825 = vld [vmem:[%s3812 + $0x30] sm:$0xf]
          %v3826 = vld [vmem:[%s3812 + $0x34] sm:$0xf]
          %v3827 = vld [vmem:[%s3812 + $0x38] sm:$0xf]
          %v3828 = vld [vmem:[%s3812 + $0x3c] sm:$0xf]
          %v3845 = vunpack.c.l.b16 %v3813
          %v3846 = vunpack.c.l.b16 %v3814
          %v3847 = vunpack.c.l.b16 %v3815
          %v3848 = vunpack.c.l.b16 %v3816
          %v3849 = vunpack.c.l.b16 %v3817
          %v3850 = vunpack.c.l.b16 %v3818
          %v3851 = vunpack.c.l.b16 %v3819
          %v3852 = vunpack.c.l.b16 %v3820
          %v3853 = vunpack.c.l.b16 %v3821
          %v3854 = vunpack.c.l.b16 %v3822
          %v3855 = vunpack.c.l.b16 %v3823
          %v3856 = vunpack.c.l.b16 %v3824
          %v3857 = vunpack.c.l.b16 %v3825
          %v3858 = vunpack.c.l.b16 %v3826
          %v3859 = vunpack.c.l.b16 %v3827
          %v3860 = vunpack.c.l.b16 %v3828
          %v3861 = vpack.c.b16 %v3846, %v3845
          %v3862 = vpack.c.b16 %v3848, %v3847
          %v3863 = vpack.c.b16 %v3850, %v3849
          %v3864 = vpack.c.b16 %v3852, %v3851
          %v3865 = vpack.c.b16 %v3854, %v3853
          %v3866 = vpack.c.b16 %v3856, %v3855
          %v3867 = vpack.c.b16 %v3858, %v3857
          %v3868 = vpack.c.b16 %v3860, %v3859
          %3877 = vmatprep.subr.bf16.mxu0 0
          %3878 = vmatpush1.bf16.msra.mxu0 %v3868
          %3879 = vmatprep.subr.bf16.mxu0 0
          %3880 = vmatpush1.bf16.msra.mxu0 %v3867
          %3881 = vmatprep.subr.bf16.mxu0 0
          %3882 = vmatpush1.bf16.msra.mxu0 %v3866
          %3883 = vmatprep.subr.bf16.mxu0 0
          %3884 = vmatpush1.bf16.msra.mxu0 %v3865
          %3885 = vmatprep.subr.bf16.mxu0 0
          %3886 = vmatpush1.bf16.msra.mxu0 %v3864
          %3887 = vmatprep.subr.bf16.mxu0 0
          %3888 = vmatpush1.bf16.msra.mxu0 %v3863
          %3889 = vmatprep.subr.bf16.mxu0 0
          %3890 = vmatpush1.bf16.msra.mxu0 %v3862
          %3891 = vmatprep.subr.bf16.mxu0 0
          %3892 = vmatpush1.bf16.msra.mxu0 %v3861
          %3893 = vmatprep.subr.bf16.mxu0 0
          %3894 = vmatpush2.bf16.msra.mxu0 0
          %3895 = vmatprep.subr.bf16.mxu0 0
          %3896 = vmatpush2.bf16.msra.mxu0 0
          %3897 = vmatprep.subr.bf16.mxu0 0
          %3898 = vmatpush2.bf16.msra.mxu0 0
          %3899 = vmatprep.subr.bf16.mxu0 0
          %3900 = vmatpush2.bf16.msra.mxu0 0
          %3901 = vmatprep.subr.bf16.mxu0 0
          %3902 = vmatpush2.bf16.msra.mxu0 0
          %3903 = vmatprep.subr.bf16.mxu0 0
          %3904 = vmatpush2.bf16.msra.mxu0 0
          %3905 = vmatprep.subr.bf16.mxu0 0
          %3906 = vmatpush2.bf16.msra.mxu0 0
          %3907 = vmatprep.subr.bf16.mxu0 0
          %3908 = vmatpush2.bf16.msra.mxu0 0
          %3909 = vmatprep.mubr.bf16.mxu0 0
          %3910 = vmatmul.mubr.bf16.gmra.mxu0 %v3811
          %v3911 = vpop.f32.mrf.mxu0
          %v3912 = vadd.f32 0.0, %v3911
          %v3913 = vpop.f32.mrf.mxu0
          %v3914 = vpop.f32.mrf.mxu0
          %v3915 = vpop.f32.mrf.mxu0
          %3916 = vdwg.mxu0
          %v3933 = vunpack.c.l.b16 %v3795
          %v3934 = vunpack.c.l.b16 %v3796
          %v3935 = vunpack.c.l.b16 %v3797
          %v3936 = vunpack.c.l.b16 %v3798
          %v3937 = vunpack.c.l.b16 %v3799
          %v3938 = vunpack.c.l.b16 %v3800
          %v3939 = vunpack.c.l.b16 %v3801
          %v3940 = vunpack.c.l.b16 %v3802
          %v3941 = vunpack.c.l.b16 %v3803
          %v3942 = vunpack.c.l.b16 %v3804
          %v3943 = vunpack.c.l.b16 %v3805
          %v3944 = vunpack.c.l.b16 %v3806
          %v3945 = vunpack.c.l.b16 %v3807
          %v3946 = vunpack.c.l.b16 %v3808
          %v3947 = vunpack.c.l.b16 %v3809
          %v3948 = vunpack.c.l.b16 %v3810
          %v3949 = vpack.c.b16 %v3934, %v3933
          %v3950 = vpack.c.b16 %v3936, %v3935
          %v3951 = vpack.c.b16 %v3938, %v3937
          %v3952 = vpack.c.b16 %v3940, %v3939
          %v3953 = vpack.c.b16 %v3942, %v3941
          %v3954 = vpack.c.b16 %v3944, %v3943
          %v3955 = vpack.c.b16 %v3946, %v3945
          %v3956 = vpack.c.b16 %v3948, %v3947
          %3965 = vmatprep.subr.bf16.mxu0 0
          %3966 = vmatpush1.bf16.msra.mxu0 %v3956
          %3967 = vmatprep.subr.bf16.mxu0 0
          %3968 = vmatpush1.bf16.msra.mxu0 %v3955
          %3969 = vmatprep.subr.bf16.mxu0 0
          %3970 = vmatpush1.bf16.msra.mxu0 %v3954
          %3971 = vmatprep.subr.bf16.mxu0 0
          %3972 = vmatpush1.bf16.msra.mxu0 %v3953
          %3973 = vmatprep.subr.bf16.mxu0 0
          %3974 = vmatpush1.bf16.msra.mxu0 %v3952
          %3975 = vmatprep.subr.bf16.mxu0 0
          %3976 = vmatpush1.bf16.msra.mxu0 %v3951
          %3977 = vmatprep.subr.bf16.mxu0 0
          %3978 = vmatpush1.bf16.msra.mxu0 %v3950
          %3979 = vmatprep.subr.bf16.mxu0 0
          %3980 = vmatpush1.bf16.msra.mxu0 %v3949
          %3981 = vmatprep.subr.bf16.mxu0 0
          %3982 = vmatpush2.bf16.msra.mxu0 0
          %3983 = vmatprep.subr.bf16.mxu0 0
          %3984 = vmatpush2.bf16.msra.mxu0 0
          %3985 = vmatprep.subr.bf16.mxu0 0
          %3986 = vmatpush2.bf16.msra.mxu0 0
          %3987 = vmatprep.subr.bf16.mxu0 0
          %3988 = vmatpush2.bf16.msra.mxu0 0
          %3989 = vmatprep.subr.bf16.mxu0 0
          %3990 = vmatpush2.bf16.msra.mxu0 0
          %3991 = vmatprep.subr.bf16.mxu0 0
          %3992 = vmatpush2.bf16.msra.mxu0 0
          %3993 = vmatprep.subr.bf16.mxu0 0
          %3994 = vmatpush2.bf16.msra.mxu0 0
          %3995 = vmatprep.subr.bf16.mxu0 0
          %3996 = vmatpush2.bf16.msra.mxu0 0
          %3997 = vmatprep.mubr.bf16.mxu0 0
          %3998 = vmatmul.mubr.bf16.gmra.mxu0 %v2154
          %v3999 = vpop.f32.mrf.mxu0
          %v4000 = vadd.f32 %v3912, %v3999
          %v4001 = vpop.f32.mrf.mxu0
          %v4002 = vpop.f32.mrf.mxu0
          %v4003 = vpop.f32.mrf.mxu0
          %4004 = vdwg.mxu0
          %v4005 = vpack.c.bf16 %v3739, %v3739
          %s4006 = scalar_lea.vmem %s4, 128
          %v4007 = vld [vmem:[%s4006] sm:$0xf]
          %v4008 = vld [vmem:[%s4006 + $0x4] sm:$0xf]
          %v4009 = vld [vmem:[%s4006 + $0x8] sm:$0xf]
          %v4010 = vld [vmem:[%s4006 + $0xc] sm:$0xf]
          %v4011 = vld [vmem:[%s4006 + $0x10] sm:$0xf]
          %v4012 = vld [vmem:[%s4006 + $0x14] sm:$0xf]
          %v4013 = vld [vmem:[%s4006 + $0x18] sm:$0xf]
          %v4014 = vld [vmem:[%s4006 + $0x1c] sm:$0xf]
          %v4015 = vld [vmem:[%s4006 + $0x20] sm:$0xf]
          %v4016 = vld [vmem:[%s4006 + $0x24] sm:$0xf]
          %v4017 = vld [vmem:[%s4006 + $0x28] sm:$0xf]
          %v4018 = vld [vmem:[%s4006 + $0x2c] sm:$0xf]
          %v4019 = vld [vmem:[%s4006 + $0x30] sm:$0xf]
          %v4020 = vld [vmem:[%s4006 + $0x34] sm:$0xf]
          %v4021 = vld [vmem:[%s4006 + $0x38] sm:$0xf]
          %v4022 = vld [vmem:[%s4006 + $0x3c] sm:$0xf]
          %v4039 = vunpack.c.l.b16 %v4007
          %v4040 = vunpack.c.l.b16 %v4008
          %v4041 = vunpack.c.l.b16 %v4009
          %v4042 = vunpack.c.l.b16 %v4010
          %v4043 = vunpack.c.l.b16 %v4011
          %v4044 = vunpack.c.l.b16 %v4012
          %v4045 = vunpack.c.l.b16 %v4013
          %v4046 = vunpack.c.l.b16 %v4014
          %v4047 = vunpack.c.l.b16 %v4015
          %v4048 = vunpack.c.l.b16 %v4016
          %v4049 = vunpack.c.l.b16 %v4017
          %v4050 = vunpack.c.l.b16 %v4018
          %v4051 = vunpack.c.l.b16 %v4019
          %v4052 = vunpack.c.l.b16 %v4020
          %v4053 = vunpack.c.l.b16 %v4021
          %v4054 = vunpack.c.l.b16 %v4022
          %v4055 = vpack.c.b16 %v4040, %v4039
          %v4056 = vpack.c.b16 %v4042, %v4041
          %v4057 = vpack.c.b16 %v4044, %v4043
          %v4058 = vpack.c.b16 %v4046, %v4045
          %v4059 = vpack.c.b16 %v4048, %v4047
          %v4060 = vpack.c.b16 %v4050, %v4049
          %v4061 = vpack.c.b16 %v4052, %v4051
          %v4062 = vpack.c.b16 %v4054, %v4053
          %4071 = vmatprep.subr.bf16.mxu0 0
          %4072 = vmatpush1.bf16.msra.mxu0 %v4062
          %4073 = vmatprep.subr.bf16.mxu0 0
          %4074 = vmatpush1.bf16.msra.mxu0 %v4061
          %4075 = vmatprep.subr.bf16.mxu0 0
          %4076 = vmatpush1.bf16.msra.mxu0 %v4060
          %4077 = vmatprep.subr.bf16.mxu0 0
          %4078 = vmatpush1.bf16.msra.mxu0 %v4059
          %4079 = vmatprep.subr.bf16.mxu0 0
          %4080 = vmatpush1.bf16.msra.mxu0 %v4058
          %4081 = vmatprep.subr.bf16.mxu0 0
          %4082 = vmatpush1.bf16.msra.mxu0 %v4057
          %4083 = vmatprep.subr.bf16.mxu0 0
          %4084 = vmatpush1.bf16.msra.mxu0 %v4056
          %4085 = vmatprep.subr.bf16.mxu0 0
          %4086 = vmatpush1.bf16.msra.mxu0 %v4055
          %4087 = vmatprep.subr.bf16.mxu0 0
          %4088 = vmatpush2.bf16.msra.mxu0 0
          %4089 = vmatprep.subr.bf16.mxu0 0
          %4090 = vmatpush2.bf16.msra.mxu0 0
          %4091 = vmatprep.subr.bf16.mxu0 0
          %4092 = vmatpush2.bf16.msra.mxu0 0
          %4093 = vmatprep.subr.bf16.mxu0 0
          %4094 = vmatpush2.bf16.msra.mxu0 0
          %4095 = vmatprep.subr.bf16.mxu0 0
          %4096 = vmatpush2.bf16.msra.mxu0 0
          %4097 = vmatprep.subr.bf16.mxu0 0
          %4098 = vmatpush2.bf16.msra.mxu0 0
          %4099 = vmatprep.subr.bf16.mxu0 0
          %4100 = vmatpush2.bf16.msra.mxu0 0
          %4101 = vmatprep.subr.bf16.mxu0 0
          %4102 = vmatpush2.bf16.msra.mxu0 0
          %4103 = vmatprep.mubr.bf16.mxu0 0
          %4104 = vmatmul.mubr.bf16.gmra.mxu0 %v4005
          %v4105 = vpop.f32.mrf.mxu0
          %v4106 = vadd.f32 0.0, %v4105
          %v4107 = vpop.f32.mrf.mxu0
          %v4108 = vpop.f32.mrf.mxu0
          %v4109 = vpop.f32.mrf.mxu0
          %4110 = vdwg.mxu0
          %v4111 = vadd.f32 %v4000, %v4106
          %s4112 = scalar_lea.vmem %s4, 192
          %v4113 = vld [vmem:[%s4112] sm:$0xf]
          %v4114 = vld [vmem:[%s4112 + $0x4] sm:$0xf]
          %v4115 = vld [vmem:[%s4112 + $0x8] sm:$0xf]
          %v4116 = vld [vmem:[%s4112 + $0xc] sm:$0xf]
          %v4117 = vld [vmem:[%s4112 + $0x10] sm:$0xf]
          %v4118 = vld [vmem:[%s4112 + $0x14] sm:$0xf]
          %v4119 = vld [vmem:[%s4112 + $0x18] sm:$0xf]
          %v4120 = vld [vmem:[%s4112 + $0x1c] sm:$0xf]
          %v4121 = vld [vmem:[%s4112 + $0x20] sm:$0xf]
          %v4122 = vld [vmem:[%s4112 + $0x24] sm:$0xf]
          %v4123 = vld [vmem:[%s4112 + $0x28] sm:$0xf]
          %v4124 = vld [vmem:[%s4112 + $0x2c] sm:$0xf]
          %v4125 = vld [vmem:[%s4112 + $0x30] sm:$0xf]
          %v4126 = vld [vmem:[%s4112 + $0x34] sm:$0xf]
          %v4127 = vld [vmem:[%s4112 + $0x38] sm:$0xf]
          %v4128 = vld [vmem:[%s4112 + $0x3c] sm:$0xf]
          %v4145 = vunpack.c.l.b16 %v4113
          %v4146 = vunpack.c.l.b16 %v4114
          %v4147 = vunpack.c.l.b16 %v4115
          %v4148 = vunpack.c.l.b16 %v4116
          %v4149 = vunpack.c.l.b16 %v4117
          %v4150 = vunpack.c.l.b16 %v4118
          %v4151 = vunpack.c.l.b16 %v4119
          %v4152 = vunpack.c.l.b16 %v4120
          %v4153 = vunpack.c.l.b16 %v4121
          %v4154 = vunpack.c.l.b16 %v4122
          %v4155 = vunpack.c.l.b16 %v4123
          %v4156 = vunpack.c.l.b16 %v4124
          %v4157 = vunpack.c.l.b16 %v4125
          %v4158 = vunpack.c.l.b16 %v4126
          %v4159 = vunpack.c.l.b16 %v4127
          %v4160 = vunpack.c.l.b16 %v4128
          %v4161 = vpack.c.b16 %v4146, %v4145
          %v4162 = vpack.c.b16 %v4148, %v4147
          %v4163 = vpack.c.b16 %v4150, %v4149
          %v4164 = vpack.c.b16 %v4152, %v4151
          %v4165 = vpack.c.b16 %v4154, %v4153
          %v4166 = vpack.c.b16 %v4156, %v4155
          %v4167 = vpack.c.b16 %v4158, %v4157
          %v4168 = vpack.c.b16 %v4160, %v4159
          %4177 = vmatprep.subr.bf16.mxu0 0
          %4178 = vmatpush1.bf16.msra.mxu0 %v4168
          %4179 = vmatprep.subr.bf16.mxu0 0
          %4180 = vmatpush1.bf16.msra.mxu0 %v4167
          %4181 = vmatprep.subr.bf16.mxu0 0
          %4182 = vmatpush1.bf16.msra.mxu0 %v4166
          %4183 = vmatprep.subr.bf16.mxu0 0
          %4184 = vmatpush1.bf16.msra.mxu0 %v4165
          %4185 = vmatprep.subr.bf16.mxu0 0
          %4186 = vmatpush1.bf16.msra.mxu0 %v4164
          %4187 = vmatprep.subr.bf16.mxu0 0
          %4188 = vmatpush1.bf16.msra.mxu0 %v4163
          %4189 = vmatprep.subr.bf16.mxu0 0
          %4190 = vmatpush1.bf16.msra.mxu0 %v4162
          %4191 = vmatprep.subr.bf16.mxu0 0
          %4192 = vmatpush1.bf16.msra.mxu0 %v4161
          %4193 = vmatprep.subr.bf16.mxu0 0
          %4194 = vmatpush2.bf16.msra.mxu0 0
          %4195 = vmatprep.subr.bf16.mxu0 0
          %4196 = vmatpush2.bf16.msra.mxu0 0
          %4197 = vmatprep.subr.bf16.mxu0 0
          %4198 = vmatpush2.bf16.msra.mxu0 0
          %4199 = vmatprep.subr.bf16.mxu0 0
          %4200 = vmatpush2.bf16.msra.mxu0 0
          %4201 = vmatprep.subr.bf16.mxu0 0
          %4202 = vmatpush2.bf16.msra.mxu0 0
          %4203 = vmatprep.subr.bf16.mxu0 0
          %4204 = vmatpush2.bf16.msra.mxu0 0
          %4205 = vmatprep.subr.bf16.mxu0 0
          %4206 = vmatpush2.bf16.msra.mxu0 0
          %4207 = vmatprep.subr.bf16.mxu0 0
          %4208 = vmatpush2.bf16.msra.mxu0 0
          %4209 = vmatprep.mubr.bf16.mxu0 0
          %4210 = vmatmul.mubr.bf16.gmra.mxu0 %v2237
          %v4211 = vpop.f32.mrf.mxu0
          %v4212 = vadd.f32 0.0, %v4211
          %v4213 = vpop.f32.mrf.mxu0
          %v4214 = vpop.f32.mrf.mxu0
          %v4215 = vpop.f32.mrf.mxu0
          %4216 = vdwg.mxu0
          %v4217 = vadd.f32 %v4111, %v4212
          %v4218 = vld [vmem:[%s5] sm:$0x1]
          %v4220 = vlaneseq
          %v4221 = vshrl.u32 %v4220, 7
          %v4222 = vsub.s32 0, %v4221
          %v4223 = vrot.slane %v4218, %v4222
          %v4225 = vadd.f32 %v4217, %v4223
          %4226 = vst [vmem:[%s6] sm:$0xff] %v4225
        $region64: #{birnn_forward.1} parent=43 // pred_fallthru
          _
        // Predicated region
        $region65: #{birnn_forward.1} parent=43 // pred_check
          %p4227 = pneg %p177
        $region66: #{birnn_forward.1} parent=43 // pred_check_branch
          %4229 = sbr.rel (%p4227) target = $region68
        $region67: #{birnn_forward.1} parent=43 // pred_region
          _
        $region68: #{birnn_forward.1} parent=43 // pred_fallthru
          _
        // Predicated region
        $region69: #{birnn_forward.1} parent=43 // pred_check
          %p4230 = pneg %p177
        $region70: #{birnn_forward.1} parent=43 // pred_check_branch
          %4232 = sbr.rel (%p4230) target = $region72
        $region71: #{birnn_forward.1} parent=43 // pred_region
          _
        $region72: #{birnn_forward.1} parent=43 // pred_fallthru
          _
      $region44: #{birnn_forward.1} parent=5 // pred_fallthru
        _
      %p4233 = scmp.le.s32.totalorder 2, %s18
      // Predicated region
      $region73: #{birnn_forward.1} parent=5 // pred_check
        %p4234 = pneg %p4233
      $region74: #{birnn_forward.1} parent=5 // pred_check_branch
        %4236 = sbr.rel (%p4234) target = $region76
      $region75: #{birnn_forward.1} parent=5 // pred_region
        %s4237 = ssub.s32 %s18, 2
      $region76: #{birnn_forward.1} parent=5 // pred_fallthru
        _
    $region6: #{birnn_forward.1} parent=1 // loop_footer
      %s22 = sadd.s32 1, %s18
    $region7: #{birnn_forward.1} parent=1 // loop_footer_branch
      %17 = sbr.rel target = $region3
    $region8: #{birnn_forward.1} parent=1 // loop_exit
      _
    %4238 = vsyncpa [#allocation5], 1
    %s4239 = scalar_lea.sflag [#allocation5], 1
    %4240 = vsyncpa %s4239, 1
    %4241 = vsyncpa [#allocation7], 1
    %s4242 = scalar_lea.sflag [#allocation7], 1
    %4243 = vsyncpa %s4242, 1

</llo_original>
